<compile_context>
chip_gen: v6e
topology: v6e:2x2x1
jax: 0.10.0
libtpu: 0.0.40
codegen_flags: <defaults>
</compile_context>

<pallas_src>
import jax
import jax.numpy as jnp
from jax.experimental import pallas as pl
from jax.experimental.pallas import tpu as pltpu

# ----------------------------- sizes ---------------------------------------
B = 2          # batch (micro-batching >=8 rows is a free throughput win; kernel is B-agnostic)
D_STYLE = 16   # x[0] feature dim
D_CHAR = 16    # x[1] feature dim
S = 8          # sequence length for toy BERT
H = 32         # toy BERT hidden size (module's FEAT_LEN=768 scaled down)
VOCAB = 64
C = 4          # classes for every classifier head
FEAT = S * H                                    # flattened BERT feature = 256
D_X = D_STYLE + D_CHAR                          # 32
ENSEMBLE = C + C + C + D_STYLE + D_CHAR + FEAT  # 300

_VMEM = pl.BlockSpec(memory_space=pltpu.MemorySpace.VMEM)


# ----------------------------- kernel ----------------------------------------
def fused_ensemble_kernel(
    ids_ref,    # (B, S)       int32  token ids (pre-clamped to [0, VOCAB))
    mask_ref,   # (B, S)       f32    attention mask
    x01_ref,    # (B, D_X+1)   f32    [x0 | x1 | 1]   (1-column carries the folded bias)
    ptab_ref,   # (VOCAB, H)   f32    emb_table @ w_enc  (dense, 8 KiB)
    benc_ref,   # (1, H)       f32    encoder bias
    wfeat_ref,  # (FEAT, C)    f32    w_bert @ wf_bert + wf_feat
    wx_ref,     # (D_X+1, C)   f32    [w_style@wf_s + wf_x0 ; w_char@wf_c + wf_x1 ; b_eff]
    out_ref,    # (B, C)
    feat_ref,   # (B, FEAT)    bertFeature (= last_hidden_state.flatten(1))
):
    f32 = jnp.float32
    ptab = ptab_ref[...]                                           # (VOCAB, H)
    benc = benc_ref[...]                                           # (1, H)
    col = jax.lax.broadcasted_iota(jnp.int32, (B, VOCAB), 1)       # hoisted, reused

    # 1) Embedding gather as per-position one-hot MXU dots, fused with the
    #    per-token encoder projection (table @ w_enc folded into ptab), plus
    #    bias and attention-mask zeroing.  Static column writes assemble the
    #    lane-dense flattened (B, S*H) bertFeature directly.
    for s in range(S):                                             # static unroll, S=8
        onehot = (col == ids_ref[:, s:s + 1]).astype(f32)          # (B, VOCAB)
        h = jnp.dot(onehot, ptab, preferred_element_type=f32)      # (B, H)
        feat_ref[:, s * H:(s + 1) * H] = (h + benc) * mask_ref[:, s:s + 1]

    feat = feat_ref[...]                                           # (B, FEAT)

    # 2) style/char/bert heads + final classifier, algebraically folded:
    #    out = feat @ Wfeat_eff + [x0|x1|1] @ Wx_eff    (bias lives in Wx_eff)
    out = jnp.dot(feat, wfeat_ref[...], preferred_element_type=f32)
    out_ref[...] = out + jnp.dot(x01_ref[...], wx_ref[...], preferred_element_type=f32)


# ----------------------------- parameter folding -----------------------------
def fold_params(params):
    """One-time algebraic folding of the module parameters (identical math).

    Call ONCE at parameter-load time and cache the result; do NOT call per
    forward.  Returns small dense arrays (largest is the 8 KiB proj table).
    """
    wf = params["w_final"]  # (ENSEMBLE, C), rows in torch.cat order
    o = 0
    wf_s = wf[o:o + C]; o += C
    wf_c = wf[o:o + C]; o += C
    wf_b = wf[o:o + C]; o += C
    wf_x0 = wf[o:o + D_STYLE]; o += D_STYLE
    wf_x1 = wf[o:o + D_CHAR]; o += D_CHAR
    wf_feat = wf[o:o + FEAT]; o += FEAT
    assert o == ENSEMBLE

    # Encoder projection folded into the embedding table (dense, no kron).
    ptab = params["emb_table"] @ params["w_enc"]                         # (VOCAB, H)
    benc = params["b_enc"]                                               # (1, H)

    # Heads folded into the final classifier; all biases folded into one row
    # that rides along the constant-1 column of [x0|x1|1].
    w_feat_eff = params["w_bert"] @ wf_b + wf_feat                       # (FEAT, C)
    b_eff = (params["b_style"] @ wf_s + params["b_char"] @ wf_c
             + params["b_bert"] @ wf_b + params["b_final"])              # (1, C)
    w_x_eff = jnp.concatenate(
        [params["w_style"] @ wf_s + wf_x0,
         params["w_char"] @ wf_c + wf_x1,
         b_eff], axis=0)                                                 # (D_X+1, C)

    return {"ptab": ptab, "benc": benc,
            "w_feat_eff": w_feat_eff, "w_x_eff": w_x_eff}


# ----------------------------- wrapper ---------------------------------------
@jax.jit
def _forward_jit(x0, x1, x2, x3, folded):
    # Glue (all fused into the compiled executable): clamp ids to match
    # jnp.take's clipping, cast mask, append the constant-1 bias column.
    ids = jnp.clip(x2.astype(jnp.int32), 0, VOCAB - 1)                   # (B, S)
    mask = x3.astype(jnp.float32)                                        # (B, S)
    ones = jnp.ones((x0.shape[0], 1), jnp.float32)
    x01 = jnp.concatenate([x0.astype(jnp.float32),
                           x1.astype(jnp.float32), ones], axis=1)        # (B, D_X+1)

    out, feat = pl.pallas_call(
        fused_ensemble_kernel,
        out_shape=(jax.ShapeDtypeStruct((B, C), jnp.float32),
                   jax.ShapeDtypeStruct((B, FEAT), jnp.float32)),
        in_specs=[_VMEM] * 7,
        out_specs=(_VMEM, _VMEM),
    )(ids, mask, x01, folded["ptab"], folded["benc"],
      folded["w_feat_eff"], folded["w_x_eff"])
    return out, feat


def ensemble_classifier_forward(x0, x1, x2, x3, folded, return_feat=False):
    """Mirrors EnsembleClassifier.forward(x) with x = (x0, x1, x2, x3).

    `folded` is the cached result of fold_params(params).
    """
    out, feat = _forward_jit(x0, x1, x2, x3, folded)
    if return_feat:
        return out, feat
    return out


# ----------------------------- reference (pure JAX) --------------------------
def ensemble_classifier_reference(x0, x1, x2, x3, params):
    emb = jnp.take(params["emb_table"], x2, axis=0)                   # (B, S, H)
    h = (emb.reshape(B * S, H) @ params["w_enc"] + params["b_enc"]) \
        * x3.astype(jnp.float32).reshape(B * S, 1)
    feat = h.reshape(B, FEAT)
    sp = x0 @ params["w_style"] + params["b_style"]
    cp = x1 @ params["w_char"] + params["b_char"]
    bp = feat @ params["w_bert"] + params["b_bert"]
    ens = jnp.concatenate([sp, cp, bp, x0, x1, feat], axis=1)
    return ens @ params["w_final"] + params["b_final"], feat


# ----------------------------- init ------------------------------------------
def init_params(key):
    ks = jax.random.split(key, 12)
    def w(k, shape, fan_in):
        return (jax.random.normal(k, shape, jnp.float32) / jnp.sqrt(fan_in)).astype(jnp.float32)
    return {
        "emb_table": w(ks[0], (VOCAB, H), H),
        "w_enc": w(ks[1], (H, H), H),
        "b_enc": w(ks[2], (1, H), H),
        "w_style": w(ks[3], (D_STYLE, C), D_STYLE),
        "b_style": w(ks[4], (1, C), D_STYLE),
        "w_char": w(ks[5], (D_CHAR, C), D_CHAR),
        "b_char": w(ks[6], (1, C), D_CHAR),
        "w_bert": w(ks[7], (FEAT, C), FEAT),
        "b_bert": w(ks[8], (1, C), FEAT),
        "w_final": w(ks[9], (ENSEMBLE, C), ENSEMBLE),
        "b_final": w(ks[10], (1, C), ENSEMBLE),
    }


if __name__ == "__main__":
    # Keep wrapper-side folding / reference matmuls at full f32 precision so
    # they match the in-kernel f32 MXU dots.
    jax.config.update("jax_default_matmul_precision", "highest")

    key = jax.random.PRNGKey(0)
    k0, k1, k2 = jax.random.split(key, 3)

    x0 = jax.random.normal(k0, (B, D_STYLE), jnp.float32)               # style features
    x1 = jax.random.normal(k1, (B, D_CHAR), jnp.float32)                # char features
    x2 = jax.random.randint(k2, (B, S), 0, VOCAB, jnp.int32)            # token ids
    x3 = (jnp.arange(S)[None, :] < jnp.array([[S], [S - 3]])).astype(jnp.int32)  # attn mask

    params = init_params(jax.random.PRNGKey(42))

    # One-time parameter folding, cached outside the per-call path.
    folded = jax.tree_util.tree_map(jax.block_until_ready, fold_params(params))

    out, feat = ensemble_classifier_forward(x0, x1, x2, x3, folded, return_feat=True)
    out = jax.block_until_ready(out)
    feat = jax.block_until_ready(feat)

    ref_out, ref_feat = ensemble_classifier_reference(x0, x1, x2, x3, params)
    assert out.shape == (B, C)
    assert feat.shape == (B, FEAT)
    assert jnp.allclose(feat, ref_feat, atol=1e-4, rtol=1e-4), "bertFeature mismatch vs reference"
    assert jnp.allclose(out, ref_out, atol=1e-4, rtol=1e-4), "output mismatch vs reference"

    print("KERNEL_OK")
</pallas_src>

<mosaic_0001>
module attributes {stable_mosaic.version = 11 : i64} {
  func.func @fused_ensemble_kernel(%arg0: memref<2x8xi32, #tpu.memory_space<vmem>>, %arg1: memref<2x8xf32, #tpu.memory_space<vmem>>, %arg2: memref<2x33xf32, #tpu.memory_space<vmem>>, %arg3: memref<64x32xf32, #tpu.memory_space<vmem>>, %arg4: memref<1x32xf32, #tpu.memory_space<vmem>>, %arg5: memref<256x4xf32, #tpu.memory_space<vmem>>, %arg6: memref<33x4xf32, #tpu.memory_space<vmem>>, %arg7: memref<2x4xf32, #tpu.memory_space<vmem>>, %arg8: memref<2x256xf32, #tpu.memory_space<vmem>>) attributes {dimension_semantics = [], scalar_prefetch = 0 : i64, scratch_operands = 0 : i64, tpu.core_type = #tpu.core_type<tc>} {
    %c0 = arith.constant 0 : index
    %c0_0 = arith.constant 0 : index
    %0 = vector.load %arg3[%c0, %c0_0] : memref<64x32xf32, #tpu.memory_space<vmem>>, vector<64x32xf32>
    %c0_1 = arith.constant 0 : index
    %c0_2 = arith.constant 0 : index
    %1 = vector.load %arg4[%c0_1, %c0_2] : memref<1x32xf32, #tpu.memory_space<vmem>>, vector<1x32xf32>
    %2 = tpu.iota {dimensions = array<i32: 1>} : vector<2x64xi32>
    %c0_3 = arith.constant 0 : index
    %c0_4 = arith.constant 0 : index
    %3 = vector.load %arg0[%c0_3, %c0_4] : memref<2x8xi32, #tpu.memory_space<vmem>>, vector<2x1xi32>
    %4 = vector.broadcast %3 : vector<2x1xi32> to vector<2x64xi32>
    %5 = arith.cmpi eq, %2, %4 : vector<2x64xi32>
    %6 = arith.extui %5 : vector<2x64xi1> to vector<2x64xi32>
    %7 = arith.sitofp %6 : vector<2x64xi32> to vector<2x64xf32>
    %cst = arith.constant dense<0.000000e+00> : vector<2x32xf32>
    %8 = tpu.matmul %7, %0, %cst {dimension_numbers = #tpu.dot_dimension_numbers<[1], [0], [0], [1], [0, 0, 1, 1], [], []>, precision = #tpu.contract_precision<fp32>} : vector<2x64xf32>, vector<64x32xf32>, vector<2x32xf32> -> vector<2x32xf32>
    %9 = vector.broadcast %1 : vector<1x32xf32> to vector<2x32xf32>
    %10 = arith.addf %8, %9 : vector<2x32xf32>
    %c0_5 = arith.constant 0 : index
    %c0_6 = arith.constant 0 : index
    %11 = vector.load %arg1[%c0_5, %c0_6] : memref<2x8xf32, #tpu.memory_space<vmem>>, vector<2x1xf32>
    %12 = vector.broadcast %11 : vector<2x1xf32> to vector<2x32xf32>
    %13 = arith.mulf %10, %12 : vector<2x32xf32>
    %c0_7 = arith.constant 0 : index
    %c0_8 = arith.constant 0 : index
    %14 = vector.load %arg8[%c0_7, %c0_8] : memref<2x256xf32, #tpu.memory_space<vmem>>, vector<2x32xf32>
    tpu.vector_store %arg8[%c0_7, %c0_8], %13 {strides = array<i32>} : memref<2x256xf32, #tpu.memory_space<vmem>>, vector<2x32xf32>,
    %c0_9 = arith.constant 0 : index
    %c1 = arith.constant 1 : index
    %15 = vector.load %arg0[%c0_9, %c1] : memref<2x8xi32, #tpu.memory_space<vmem>>, vector<2x1xi32>
    %16 = vector.broadcast %15 : vector<2x1xi32> to vector<2x64xi32>
    %17 = arith.cmpi eq, %2, %16 : vector<2x64xi32>
    %18 = arith.extui %17 : vector<2x64xi1> to vector<2x64xi32>
    %19 = arith.sitofp %18 : vector<2x64xi32> to vector<2x64xf32>
    %cst_10 = arith.constant dense<0.000000e+00> : vector<2x32xf32>
    %20 = tpu.matmul %19, %0, %cst_10 {dimension_numbers = #tpu.dot_dimension_numbers<[1], [0], [0], [1], [0, 0, 1, 1], [], []>, precision = #tpu.contract_precision<fp32>} : vector<2x64xf32>, vector<64x32xf32>, vector<2x32xf32> -> vector<2x32xf32>
    %21 = vector.broadcast %1 : vector<1x32xf32> to vector<2x32xf32>
    %22 = arith.addf %20, %21 : vector<2x32xf32>
    %c0_11 = arith.constant 0 : index
    %c1_12 = arith.constant 1 : index
    %23 = vector.load %arg1[%c0_11, %c1_12] : memref<2x8xf32, #tpu.memory_space<vmem>>, vector<2x1xf32>
    %24 = vector.broadcast %23 : vector<2x1xf32> to vector<2x32xf32>
    %25 = arith.mulf %22, %24 : vector<2x32xf32>
    %c0_13 = arith.constant 0 : index
    %c32 = arith.constant 32 : index
    %26 = vector.load %arg8[%c0_13, %c32] : memref<2x256xf32, #tpu.memory_space<vmem>>, vector<2x32xf32>
    tpu.vector_store %arg8[%c0_13, %c32], %25 {strides = array<i32>} : memref<2x256xf32, #tpu.memory_space<vmem>>, vector<2x32xf32>,
    %c0_14 = arith.constant 0 : index
    %c2 = arith.constant 2 : index
    %27 = vector.load %arg0[%c0_14, %c2] : memref<2x8xi32, #tpu.memory_space<vmem>>, vector<2x1xi32>
    %28 = vector.broadcast %27 : vector<2x1xi32> to vector<2x64xi32>
    %29 = arith.cmpi eq, %2, %28 : vector<2x64xi32>
    %30 = arith.extui %29 : vector<2x64xi1> to vector<2x64xi32>
    %31 = arith.sitofp %30 : vector<2x64xi32> to vector<2x64xf32>
    %cst_15 = arith.constant dense<0.000000e+00> : vector<2x32xf32>
    %32 = tpu.matmul %31, %0, %cst_15 {dimension_numbers = #tpu.dot_dimension_numbers<[1], [0], [0], [1], [0, 0, 1, 1], [], []>, precision = #tpu.contract_precision<fp32>} : vector<2x64xf32>, vector<64x32xf32>, vector<2x32xf32> -> vector<2x32xf32>
    %33 = vector.broadcast %1 : vector<1x32xf32> to vector<2x32xf32>
    %34 = arith.addf %32, %33 : vector<2x32xf32>
    %c0_16 = arith.constant 0 : index
    %c2_17 = arith.constant 2 : index
    %35 = vector.load %arg1[%c0_16, %c2_17] : memref<2x8xf32, #tpu.memory_space<vmem>>, vector<2x1xf32>
    %36 = vector.broadcast %35 : vector<2x1xf32> to vector<2x32xf32>
    %37 = arith.mulf %34, %36 : vector<2x32xf32>
    %c0_18 = arith.constant 0 : index
    %c64 = arith.constant 64 : index
    %38 = vector.load %arg8[%c0_18, %c64] : memref<2x256xf32, #tpu.memory_space<vmem>>, vector<2x32xf32>
    tpu.vector_store %arg8[%c0_18, %c64], %37 {strides = array<i32>} : memref<2x256xf32, #tpu.memory_space<vmem>>, vector<2x32xf32>,
    %c0_19 = arith.constant 0 : index
    %c3 = arith.constant 3 : index
    %39 = vector.load %arg0[%c0_19, %c3] : memref<2x8xi32, #tpu.memory_space<vmem>>, vector<2x1xi32>
    %40 = vector.broadcast %39 : vector<2x1xi32> to vector<2x64xi32>
    %41 = arith.cmpi eq, %2, %40 : vector<2x64xi32>
    %42 = arith.extui %41 : vector<2x64xi1> to vector<2x64xi32>
    %43 = arith.sitofp %42 : vector<2x64xi32> to vector<2x64xf32>
    %cst_20 = arith.constant dense<0.000000e+00> : vector<2x32xf32>
    %44 = tpu.matmul %43, %0, %cst_20 {dimension_numbers = #tpu.dot_dimension_numbers<[1], [0], [0], [1], [0, 0, 1, 1], [], []>, precision = #tpu.contract_precision<fp32>} : vector<2x64xf32>, vector<64x32xf32>, vector<2x32xf32> -> vector<2x32xf32>
    %45 = vector.broadcast %1 : vector<1x32xf32> to vector<2x32xf32>
    %46 = arith.addf %44, %45 : vector<2x32xf32>
    %c0_21 = arith.constant 0 : index
    %c3_22 = arith.constant 3 : index
    %47 = vector.load %arg1[%c0_21, %c3_22] : memref<2x8xf32, #tpu.memory_space<vmem>>, vector<2x1xf32>
    %48 = vector.broadcast %47 : vector<2x1xf32> to vector<2x32xf32>
    %49 = arith.mulf %46, %48 : vector<2x32xf32>
    %c0_23 = arith.constant 0 : index
    %c96 = arith.constant 96 : index
    %50 = vector.load %arg8[%c0_23, %c96] : memref<2x256xf32, #tpu.memory_space<vmem>>, vector<2x32xf32>
    tpu.vector_store %arg8[%c0_23, %c96], %49 {strides = array<i32>} : memref<2x256xf32, #tpu.memory_space<vmem>>, vector<2x32xf32>,
    %c0_24 = arith.constant 0 : index
    %c4 = arith.constant 4 : index
    %51 = vector.load %arg0[%c0_24, %c4] : memref<2x8xi32, #tpu.memory_space<vmem>>, vector<2x1xi32>
    %52 = vector.broadcast %51 : vector<2x1xi32> to vector<2x64xi32>
    %53 = arith.cmpi eq, %2, %52 : vector<2x64xi32>
    %54 = arith.extui %53 : vector<2x64xi1> to vector<2x64xi32>
    %55 = arith.sitofp %54 : vector<2x64xi32> to vector<2x64xf32>
    %cst_25 = arith.constant dense<0.000000e+00> : vector<2x32xf32>
    %56 = tpu.matmul %55, %0, %cst_25 {dimension_numbers = #tpu.dot_dimension_numbers<[1], [0], [0], [1], [0, 0, 1, 1], [], []>, precision = #tpu.contract_precision<fp32>} : vector<2x64xf32>, vector<64x32xf32>, vector<2x32xf32> -> vector<2x32xf32>
    %57 = vector.broadcast %1 : vector<1x32xf32> to vector<2x32xf32>
    %58 = arith.addf %56, %57 : vector<2x32xf32>
    %c0_26 = arith.constant 0 : index
    %c4_27 = arith.constant 4 : index
    %59 = vector.load %arg1[%c0_26, %c4_27] : memref<2x8xf32, #tpu.memory_space<vmem>>, vector<2x1xf32>
    %60 = vector.broadcast %59 : vector<2x1xf32> to vector<2x32xf32>
    %61 = arith.mulf %58, %60 : vector<2x32xf32>
    %c0_28 = arith.constant 0 : index
    %c128 = arith.constant 128 : index
    %62 = vector.load %arg8[%c0_28, %c128] : memref<2x256xf32, #tpu.memory_space<vmem>>, vector<2x32xf32>
    tpu.vector_store %arg8[%c0_28, %c128], %61 {strides = array<i32>} : memref<2x256xf32, #tpu.memory_space<vmem>>, vector<2x32xf32>,
    %c0_29 = arith.constant 0 : index
    %c5 = arith.constant 5 : index
    %63 = vector.load %arg0[%c0_29, %c5] : memref<2x8xi32, #tpu.memory_space<vmem>>, vector<2x1xi32>
    %64 = vector.broadcast %63 : vector<2x1xi32> to vector<2x64xi32>
    %65 = arith.cmpi eq, %2, %64 : vector<2x64xi32>
    %66 = arith.extui %65 : vector<2x64xi1> to vector<2x64xi32>
    %67 = arith.sitofp %66 : vector<2x64xi32> to vector<2x64xf32>
    %cst_30 = arith.constant dense<0.000000e+00> : vector<2x32xf32>
    %68 = tpu.matmul %67, %0, %cst_30 {dimension_numbers = #tpu.dot_dimension_numbers<[1], [0], [0], [1], [0, 0, 1, 1], [], []>, precision = #tpu.contract_precision<fp32>} : vector<2x64xf32>, vector<64x32xf32>, vector<2x32xf32> -> vector<2x32xf32>
    %69 = vector.broadcast %1 : vector<1x32xf32> to vector<2x32xf32>
    %70 = arith.addf %68, %69 : vector<2x32xf32>
    %c0_31 = arith.constant 0 : index
    %c5_32 = arith.constant 5 : index
    %71 = vector.load %arg1[%c0_31, %c5_32] : memref<2x8xf32, #tpu.memory_space<vmem>>, vector<2x1xf32>
    %72 = vector.broadcast %71 : vector<2x1xf32> to vector<2x32xf32>
    %73 = arith.mulf %70, %72 : vector<2x32xf32>
    %c0_33 = arith.constant 0 : index
    %c160 = arith.constant 160 : index
    %74 = vector.load %arg8[%c0_33, %c160] : memref<2x256xf32, #tpu.memory_space<vmem>>, vector<2x32xf32>
    tpu.vector_store %arg8[%c0_33, %c160], %73 {strides = array<i32>} : memref<2x256xf32, #tpu.memory_space<vmem>>, vector<2x32xf32>,
    %c0_34 = arith.constant 0 : index
    %c6 = arith.constant 6 : index
    %75 = vector.load %arg0[%c0_34, %c6] : memref<2x8xi32, #tpu.memory_space<vmem>>, vector<2x1xi32>
    %76 = vector.broadcast %75 : vector<2x1xi32> to vector<2x64xi32>
    %77 = arith.cmpi eq, %2, %76 : vector<2x64xi32>
    %78 = arith.extui %77 : vector<2x64xi1> to vector<2x64xi32>
    %79 = arith.sitofp %78 : vector<2x64xi32> to vector<2x64xf32>
    %cst_35 = arith.constant dense<0.000000e+00> : vector<2x32xf32>
    %80 = tpu.matmul %79, %0, %cst_35 {dimension_numbers = #tpu.dot_dimension_numbers<[1], [0], [0], [1], [0, 0, 1, 1], [], []>, precision = #tpu.contract_precision<fp32>} : vector<2x64xf32>, vector<64x32xf32>, vector<2x32xf32> -> vector<2x32xf32>
    %81 = vector.broadcast %1 : vector<1x32xf32> to vector<2x32xf32>
    %82 = arith.addf %80, %81 : vector<2x32xf32>
    %c0_36 = arith.constant 0 : index
    %c6_37 = arith.constant 6 : index
    %83 = vector.load %arg1[%c0_36, %c6_37] : memref<2x8xf32, #tpu.memory_space<vmem>>, vector<2x1xf32>
    %84 = vector.broadcast %83 : vector<2x1xf32> to vector<2x32xf32>
    %85 = arith.mulf %82, %84 : vector<2x32xf32>
    %c0_38 = arith.constant 0 : index
    %c192 = arith.constant 192 : index
    %86 = vector.load %arg8[%c0_38, %c192] : memref<2x256xf32, #tpu.memory_space<vmem>>, vector<2x32xf32>
    tpu.vector_store %arg8[%c0_38, %c192], %85 {strides = array<i32>} : memref<2x256xf32, #tpu.memory_space<vmem>>, vector<2x32xf32>,
    %c0_39 = arith.constant 0 : index
    %c7 = arith.constant 7 : index
    %87 = vector.load %arg0[%c0_39, %c7] : memref<2x8xi32, #tpu.memory_space<vmem>>, vector<2x1xi32>
    %88 = vector.broadcast %87 : vector<2x1xi32> to vector<2x64xi32>
    %89 = arith.cmpi eq, %2, %88 : vector<2x64xi32>
    %90 = arith.extui %89 : vector<2x64xi1> to vector<2x64xi32>
    %91 = arith.sitofp %90 : vector<2x64xi32> to vector<2x64xf32>
    %cst_40 = arith.constant dense<0.000000e+00> : vector<2x32xf32>
    %92 = tpu.matmul %91, %0, %cst_40 {dimension_numbers = #tpu.dot_dimension_numbers<[1], [0], [0], [1], [0, 0, 1, 1], [], []>, precision = #tpu.contract_precision<fp32>} : vector<2x64xf32>, vector<64x32xf32>, vector<2x32xf32> -> vector<2x32xf32>
    %93 = vector.broadcast %1 : vector<1x32xf32> to vector<2x32xf32>
    %94 = arith.addf %92, %93 : vector<2x32xf32>
    %c0_41 = arith.constant 0 : index
    %c7_42 = arith.constant 7 : index
    %95 = vector.load %arg1[%c0_41, %c7_42] : memref<2x8xf32, #tpu.memory_space<vmem>>, vector<2x1xf32>
    %96 = vector.broadcast %95 : vector<2x1xf32> to vector<2x32xf32>
    %97 = arith.mulf %94, %96 : vector<2x32xf32>
    %c0_43 = arith.constant 0 : index
    %c224 = arith.constant 224 : index
    %98 = vector.load %arg8[%c0_43, %c224] : memref<2x256xf32, #tpu.memory_space<vmem>>, vector<2x32xf32>
    tpu.vector_store %arg8[%c0_43, %c224], %97 {strides = array<i32>} : memref<2x256xf32, #tpu.memory_space<vmem>>, vector<2x32xf32>,
    %c0_44 = arith.constant 0 : index
    %c0_45 = arith.constant 0 : index
    %99 = vector.load %arg8[%c0_44, %c0_45] : memref<2x256xf32, #tpu.memory_space<vmem>>, vector<2x256xf32>
    %c0_46 = arith.constant 0 : index
    %c0_47 = arith.constant 0 : index
    %100 = vector.load %arg5[%c0_46, %c0_47] : memref<256x4xf32, #tpu.memory_space<vmem>>, vector<256x4xf32>
    %cst_48 = arith.constant dense<0.000000e+00> : vector<2x4xf32>
    %101 = tpu.matmul %99, %100, %cst_48 {dimension_numbers = #tpu.dot_dimension_numbers<[1], [0], [0], [1], [0, 0, 1, 1], [], []>, precision = #tpu.contract_precision<fp32>} : vector<2x256xf32>, vector<256x4xf32>, vector<2x4xf32> -> vector<2x4xf32>
    %c0_49 = arith.constant 0 : index
    %c0_50 = arith.constant 0 : index
    %102 = vector.load %arg2[%c0_49, %c0_50] : memref<2x33xf32, #tpu.memory_space<vmem>>, vector<2x33xf32>
    %c0_51 = arith.constant 0 : index
    %c0_52 = arith.constant 0 : index
    %103 = vector.load %arg6[%c0_51, %c0_52] : memref<33x4xf32, #tpu.memory_space<vmem>>, vector<33x4xf32>
    %cst_53 = arith.constant dense<0.000000e+00> : vector<2x4xf32>
    %104 = tpu.matmul %102, %103, %cst_53 {dimension_numbers = #tpu.dot_dimension_numbers<[1], [0], [0], [1], [0, 0, 1, 1], [], []>, precision = #tpu.contract_precision<fp32>} : vector<2x33xf32>, vector<33x4xf32>, vector<2x4xf32> -> vector<2x4xf32>
    %105 = arith.addf %101, %104 : vector<2x4xf32>
    %c0_54 = arith.constant 0 : index
    %c0_55 = arith.constant 0 : index
    %106 = vector.load %arg7[%c0_54, %c0_55] : memref<2x4xf32, #tpu.memory_space<vmem>>, vector<2x4xf32>
    tpu.vector_store %arg7[%c0_54, %c0_55], %105 {strides = array<i32>} : memref<2x4xf32, #tpu.memory_space<vmem>>, vector<2x4xf32>,
    return
  }
}

</mosaic_0001>

<llo_original>
// kernel: _forward_jit.1
$region0: #{_forward_jit.1}
  #allocation0 [shape = 'u32[]', space=smem, size = 0x4, offset = 0x4, fixed_abs, tag = 'smem constant byte address 0x4 - core index']
  #allocation1 [shape = 'u32[144,128]{1,0:T(1,128)}', space=vmem, size = 0x12000, scoped, tag = 'internal scratch']
  %s0 = inlined_call_operand.vmem [shape: s32[2,8], index: 0, kind: input, shape index: {}]
  %s1 = inlined_call_operand.vmem [shape: f32[2,8], index: 1, kind: input, shape index: {}]
  %s2 = inlined_call_operand.vmem [shape: f32[2,33], index: 2, kind: input, shape index: {}]
  %s3 = inlined_call_operand.vmem [shape: f32[64,32], index: 3, kind: input, shape index: {}]
  %s4 = inlined_call_operand.vmem [shape: f32[1,32], index: 4, kind: input, shape index: {}]
  %s5 = inlined_call_operand.vmem [shape: f32[256,4], index: 5, kind: input, shape index: {}]
  %s6 = inlined_call_operand.vmem [shape: f32[33,4], index: 6, kind: input, shape index: {}]
  %s7 = inlined_call_operand.hbm [shape: f32[2,4], index: 7, kind: output, shape index: {0}]
  %s8 = inlined_call_operand.hbm [shape: f32[2,256], index: 8, kind: output, shape index: {1}]
  %9 = xla_tuple %s7, %s8
  %s10 = sld [smem:[#allocation0]]
  $region46: #{_forward_jit.1} parent=0
    _
  %s12 = ssub.s32 1, %s10
  %s13 = scalar_select 0, %s12, %s10
  $region1: #{_forward_jit.1} parent=0
    #allocation2 [shape = 'u8[1024]{0}', space=vmem, size = 0x400, scoped, tag = 'output window, operand 0, single buffered']
    #allocation3 [shape = 's32[1]{0}', space=sflag, size = 0x4, scoped, tag = 'scoped memory for _forward_jit.1']
    #allocation4 [shape = 'u8[2048]{0}', space=vmem, size = 0x800, scoped, tag = 'output window, operand 1, single buffered']
    #allocation5 [shape = 's32[1]{0}', space=sflag, size = 0x4, scoped, tag = 'scoped memory for _forward_jit.1']
    %14 = vsyncpa [#allocation3], 0
    %15 = vsyncpa [#allocation5], 0
    // Predicated region
    $region2: #{_forward_jit.1} parent=1 // pred_check
      _
    $region3: #{_forward_jit.1} parent=1 // pred_check_branch
      %17 = sbr.rel (0) target = $region5
    $region4: #{_forward_jit.1} parent=1 // pred_region
      _
    $region5: #{_forward_jit.1} parent=1 // pred_fallthru
      _
    // Predicated region
    $region6: #{_forward_jit.1} parent=1 // pred_check
      _
    $region7: #{_forward_jit.1} parent=1 // pred_check_branch
      %19 = sbr.rel (0) target = $region9
    $region8: #{_forward_jit.1} parent=1 // pred_region
      _
    $region9: #{_forward_jit.1} parent=1 // pred_fallthru
      _
    // Predicated region
    $region10: #{_forward_jit.1} parent=1 // pred_check
      _
    $region11: #{_forward_jit.1} parent=1 // pred_check_branch
      %21 = sbr.rel (0) target = $region13
    $region12: #{_forward_jit.1} parent=1 // pred_region
      _
    $region13: #{_forward_jit.1} parent=1 // pred_fallthru
      _
    // Predicated region
    $region14: #{_forward_jit.1} parent=1 // pred_check
      _
    $region15: #{_forward_jit.1} parent=1 // pred_check_branch
      %23 = sbr.rel (0) target = $region17
    $region16: #{_forward_jit.1} parent=1 // pred_region
      _
    $region17: #{_forward_jit.1} parent=1 // pred_fallthru
      _
    // Predicated region
    $region18: #{_forward_jit.1} parent=1 // pred_check
      _
    $region19: #{_forward_jit.1} parent=1 // pred_check_branch
      %25 = sbr.rel (0) target = $region21
    $region20: #{_forward_jit.1} parent=1 // pred_region
      _
    $region21: #{_forward_jit.1} parent=1 // pred_fallthru
      _
    // Predicated region
    $region22: #{_forward_jit.1} parent=1 // pred_check
      _
    $region23: #{_forward_jit.1} parent=1 // pred_check_branch
      %27 = sbr.rel (0) target = $region25
    $region24: #{_forward_jit.1} parent=1 // pred_region
      _
    $region25: #{_forward_jit.1} parent=1 // pred_fallthru
      _
    // Predicated region
    $region26: #{_forward_jit.1} parent=1 // pred_check
      _
    $region27: #{_forward_jit.1} parent=1 // pred_check_branch
      %29 = sbr.rel (0) target = $region29
    $region28: #{_forward_jit.1} parent=1 // pred_region
      _
    $region29: #{_forward_jit.1} parent=1 // pred_fallthru
      _
    %v30 = vld [vmem:[%s3] sm:$0xff]
    %v31 = vld [vmem:[%s3 + $0x8] sm:$0xff]
    %v32 = vld [vmem:[%s3 + $0x10] sm:$0xff]
    %v33 = vld [vmem:[%s3 + $0x18] sm:$0xff]
    %v34 = vld [vmem:[%s3 + $0x20] sm:$0xff]
    %v35 = vld [vmem:[%s3 + $0x28] sm:$0xff]
    %v36 = vld [vmem:[%s3 + $0x30] sm:$0xff]
    %v37 = vld [vmem:[%s3 + $0x38] sm:$0xff]
    %v38 = vld [vmem:[%s4] sm:$0x1]
    %v39 = vlaneseq
    %v40 = vand.u32 %v39, 127
    %v41 = vld [vmem:[%s0] sm:$0x3]
    %42 = vset.pattern.permute.xlu0 0
    %43 = vperm.xlu0 %42, %v41
    %v44 = vpop.permute.xlu0 %43
    %vm45 = vcmp.eq.s32.totalorder %v40, %v44
    %v46 = vsel %vm45, 1, 0
    %v47 = vcvt.s32.f32 %v46
    %v49 = vlaneseq
    %v50 = vshrl.u32 %v49, 7
    %v51 = vsub.s32 0, %v50
    %v52 = vrot.slane %v38, %v51
    %vm54 = vcmask 523264
    %v56 = vsel %vm54, %v47, 0
    %58 = vmatprep.subr.mxu0 0.0
    %59 = vmatpush1.msra.mxu0 0.0
    %60 = vmatprep.subr.mxu0 0.0
    %61 = vmatpush1.msra.mxu0 0.0
    %62 = vmatprep.subr.mxu0 0.0
    %63 = vmatpush1.msra.mxu0 0.0
    %64 = vmatprep.subr.mxu0 0.0
    %65 = vmatpush1.msra.mxu0 0.0
    %66 = vmatprep.subr.mxu0 0.0
    %67 = vmatpush1.msra.mxu0 0.0
    %68 = vmatprep.subr.mxu0 0.0
    %69 = vmatpush1.msra.mxu0 0.0
    %70 = vmatprep.subr.mxu0 0.0
    %71 = vmatpush1.msra.mxu0 0.0
    %72 = vmatprep.subr.mxu0 0.0
    %73 = vmatpush1.msra.mxu0 0.0
    %74 = vmatprep.subr.mxu0 0.0
    %v75 = vand.u32 %v37, 4294901760
    %76 = vmatpush1.msra.mxu0 %v75
    %77 = vmatprep.subr.mxu0 0.0
    %v78 = vand.u32 %v36, 4294901760
    %79 = vmatpush1.msra.mxu0 %v78
    %80 = vmatprep.subr.mxu0 0.0
    %v81 = vand.u32 %v35, 4294901760
    %82 = vmatpush1.msra.mxu0 %v81
    %83 = vmatprep.subr.mxu0 0.0
    %v84 = vand.u32 %v34, 4294901760
    %85 = vmatpush1.msra.mxu0 %v84
    %86 = vmatprep.subr.mxu0 0.0
    %v87 = vand.u32 %v33, 4294901760
    %88 = vmatpush1.msra.mxu0 %v87
    %89 = vmatprep.subr.mxu0 0.0
    %v90 = vand.u32 %v32, 4294901760
    %91 = vmatpush1.msra.mxu0 %v90
    %92 = vmatprep.subr.mxu0 0.0
    %v93 = vand.u32 %v31, 4294901760
    %94 = vmatpush1.msra.mxu0 %v93
    %95 = vmatprep.subr.mxu0 0.0
    %v96 = vand.u32 %v30, 4294901760
    %97 = vmatpush1.msra.mxu0 %v96
    %98 = vmatprep.subr.mxu0 0.0
    %99 = vmatpush2.msra.mxu0 0.0
    %100 = vmatprep.subr.mxu0 0.0
    %101 = vmatpush2.msra.mxu0 0.0
    %102 = vmatprep.subr.mxu0 0.0
    %103 = vmatpush2.msra.mxu0 0.0
    %104 = vmatprep.subr.mxu0 0.0
    %105 = vmatpush2.msra.mxu0 0.0
    %106 = vmatprep.subr.mxu0 0.0
    %107 = vmatpush2.msra.mxu0 0.0
    %108 = vmatprep.subr.mxu0 0.0
    %109 = vmatpush2.msra.mxu0 0.0
    %110 = vmatprep.subr.mxu0 0.0
    %111 = vmatpush2.msra.mxu0 0.0
    %112 = vmatprep.subr.mxu0 0.0
    %113 = vmatpush2.msra.mxu0 0.0
    %114 = vmatprep.subr.mxu0 0.0
    %115 = vmatpush2.msra.mxu0 0.0
    %116 = vmatprep.subr.mxu0 0.0
    %117 = vmatpush2.msra.mxu0 0.0
    %118 = vmatprep.subr.mxu0 0.0
    %119 = vmatpush2.msra.mxu0 0.0
    %120 = vmatprep.subr.mxu0 0.0
    %121 = vmatpush2.msra.mxu0 0.0
    %122 = vmatprep.subr.mxu0 0.0
    %123 = vmatpush2.msra.mxu0 0.0
    %124 = vmatprep.subr.mxu0 0.0
    %125 = vmatpush2.msra.mxu0 0.0
    %126 = vmatprep.subr.mxu0 0.0
    %127 = vmatpush2.msra.mxu0 0.0
    %128 = vmatprep.subr.mxu0 0.0
    %129 = vmatpush2.msra.mxu0 0.0
    %130 = vmatprep.mubr.f32.mxu0 0.0
    %v131 = vand.u32 %v56, 4294901760
    %v132 = vsub.f32 %v56, %v131
    %v133 = vand.u32 %v132, 4294901760
    %v134 = vsub.f32 %v132, %v133
    %v135 = vand.u32 %v134, 4294901760
    %136 = vmatmul.mubr.f32.gmra.mxu0 %v135
    %v137 = vpop.f32.mrf.mxu0
    %v138 = vadd.f32 %v52, %v137
    %v139 = vpop.f32.mrf.mxu0
    %140 = vdwg.mxu0
    %141 = vmatprep.subr.mxu0 0.0
    %142 = vmatpush1.msra.mxu0 0.0
    %143 = vmatprep.subr.mxu0 0.0
    %144 = vmatpush1.msra.mxu0 0.0
    %145 = vmatprep.subr.mxu0 0.0
    %146 = vmatpush1.msra.mxu0 0.0
    %147 = vmatprep.subr.mxu0 0.0
    %148 = vmatpush1.msra.mxu0 0.0
    %149 = vmatprep.subr.mxu0 0.0
    %150 = vmatpush1.msra.mxu0 0.0
    %151 = vmatprep.subr.mxu0 0.0
    %152 = vmatpush1.msra.mxu0 0.0
    %153 = vmatprep.subr.mxu0 0.0
    %154 = vmatpush1.msra.mxu0 0.0
    %155 = vmatprep.subr.mxu0 0.0
    %156 = vmatpush1.msra.mxu0 0.0
    %157 = vmatprep.subr.mxu0 0.0
    %v158 = vand.u32 %v37, 4294901760
    %v159 = vsub.f32 %v37, %v158
    %v160 = vand.u32 %v159, 4294901760
    %v161 = vsub.f32 %v159, %v160
    %v162 = vand.u32 %v161, 4294901760
    %163 = vmatpush1.msra.mxu0 %v162
    %164 = vmatprep.subr.mxu0 0.0
    %v165 = vand.u32 %v36, 4294901760
    %v166 = vsub.f32 %v36, %v165
    %v167 = vand.u32 %v166, 4294901760
    %v168 = vsub.f32 %v166, %v167
    %v169 = vand.u32 %v168, 4294901760
    %170 = vmatpush1.msra.mxu0 %v169
    %171 = vmatprep.subr.mxu0 0.0
    %v172 = vand.u32 %v35, 4294901760
    %v173 = vsub.f32 %v35, %v172
    %v174 = vand.u32 %v173, 4294901760
    %v175 = vsub.f32 %v173, %v174
    %v176 = vand.u32 %v175, 4294901760
    %177 = vmatpush1.msra.mxu0 %v176
    %178 = vmatprep.subr.mxu0 0.0
    %v179 = vand.u32 %v34, 4294901760
    %v180 = vsub.f32 %v34, %v179
    %v181 = vand.u32 %v180, 4294901760
    %v182 = vsub.f32 %v180, %v181
    %v183 = vand.u32 %v182, 4294901760
    %184 = vmatpush1.msra.mxu0 %v183
    %185 = vmatprep.subr.mxu0 0.0
    %v186 = vand.u32 %v33, 4294901760
    %v187 = vsub.f32 %v33, %v186
    %v188 = vand.u32 %v187, 4294901760
    %v189 = vsub.f32 %v187, %v188
    %v190 = vand.u32 %v189, 4294901760
    %191 = vmatpush1.msra.mxu0 %v190
    %192 = vmatprep.subr.mxu0 0.0
    %v193 = vand.u32 %v32, 4294901760
    %v194 = vsub.f32 %v32, %v193
    %v195 = vand.u32 %v194, 4294901760
    %v196 = vsub.f32 %v194, %v195
    %v197 = vand.u32 %v196, 4294901760
    %198 = vmatpush1.msra.mxu0 %v197
    %199 = vmatprep.subr.mxu0 0.0
    %v200 = vand.u32 %v31, 4294901760
    %v201 = vsub.f32 %v31, %v200
    %v202 = vand.u32 %v201, 4294901760
    %v203 = vsub.f32 %v201, %v202
    %v204 = vand.u32 %v203, 4294901760
    %205 = vmatpush1.msra.mxu0 %v204
    %206 = vmatprep.subr.mxu0 0.0
    %v207 = vand.u32 %v30, 4294901760
    %v208 = vsub.f32 %v30, %v207
    %v209 = vand.u32 %v208, 4294901760
    %v210 = vsub.f32 %v208, %v209
    %v211 = vand.u32 %v210, 4294901760
    %212 = vmatpush1.msra.mxu0 %v211
    %213 = vmatprep.subr.mxu0 0.0
    %214 = vmatpush2.msra.mxu0 0.0
    %215 = vmatprep.subr.mxu0 0.0
    %216 = vmatpush2.msra.mxu0 0.0
    %217 = vmatprep.subr.mxu0 0.0
    %218 = vmatpush2.msra.mxu0 0.0
    %219 = vmatprep.subr.mxu0 0.0
    %220 = vmatpush2.msra.mxu0 0.0
    %221 = vmatprep.subr.mxu0 0.0
    %222 = vmatpush2.msra.mxu0 0.0
    %223 = vmatprep.subr.mxu0 0.0
    %224 = vmatpush2.msra.mxu0 0.0
    %225 = vmatprep.subr.mxu0 0.0
    %226 = vmatpush2.msra.mxu0 0.0
    %227 = vmatprep.subr.mxu0 0.0
    %228 = vmatpush2.msra.mxu0 0.0
    %229 = vmatprep.subr.mxu0 0.0
    %230 = vmatpush2.msra.mxu0 0.0
    %231 = vmatprep.subr.mxu0 0.0
    %232 = vmatpush2.msra.mxu0 0.0
    %233 = vmatprep.subr.mxu0 0.0
    %234 = vmatpush2.msra.mxu0 0.0
    %235 = vmatprep.subr.mxu0 0.0
    %236 = vmatpush2.msra.mxu0 0.0
    %237 = vmatprep.subr.mxu0 0.0
    %238 = vmatpush2.msra.mxu0 0.0
    %239 = vmatprep.subr.mxu0 0.0
    %240 = vmatpush2.msra.mxu0 0.0
    %241 = vmatprep.subr.mxu0 0.0
    %242 = vmatpush2.msra.mxu0 0.0
    %243 = vmatprep.subr.mxu0 0.0
    %244 = vmatpush2.msra.mxu0 0.0
    %245 = vmatprep.mubr.f32.mxu0 0.0
    %v246 = vand.u32 %v56, 4294901760
    %247 = vmatmul.mubr.f32.gmra.mxu0 %v246
    %v248 = vpop.f32.mrf.mxu0
    %v249 = vadd.f32 %v138, %v248
    %v250 = vpop.f32.mrf.mxu0
    %251 = vdwg.mxu0
    %252 = vmatprep.subr.mxu0 0.0
    %253 = vmatpush1.msra.mxu0 0.0
    %254 = vmatprep.subr.mxu0 0.0
    %255 = vmatpush1.msra.mxu0 0.0
    %256 = vmatprep.subr.mxu0 0.0
    %257 = vmatpush1.msra.mxu0 0.0
    %258 = vmatprep.subr.mxu0 0.0
    %259 = vmatpush1.msra.mxu0 0.0
    %260 = vmatprep.subr.mxu0 0.0
    %261 = vmatpush1.msra.mxu0 0.0
    %262 = vmatprep.subr.mxu0 0.0
    %263 = vmatpush1.msra.mxu0 0.0
    %264 = vmatprep.subr.mxu0 0.0
    %265 = vmatpush1.msra.mxu0 0.0
    %266 = vmatprep.subr.mxu0 0.0
    %267 = vmatpush1.msra.mxu0 0.0
    %268 = vmatprep.subr.mxu0 0.0
    %v269 = vand.u32 %v37, 4294901760
    %v270 = vsub.f32 %v37, %v269
    %271 = vmatpush1.msra.mxu0 %v270
    %272 = vmatprep.subr.mxu0 0.0
    %v273 = vand.u32 %v36, 4294901760
    %v274 = vsub.f32 %v36, %v273
    %275 = vmatpush1.msra.mxu0 %v274
    %276 = vmatprep.subr.mxu0 0.0
    %v277 = vand.u32 %v35, 4294901760
    %v278 = vsub.f32 %v35, %v277
    %279 = vmatpush1.msra.mxu0 %v278
    %280 = vmatprep.subr.mxu0 0.0
    %v281 = vand.u32 %v34, 4294901760
    %v282 = vsub.f32 %v34, %v281
    %283 = vmatpush1.msra.mxu0 %v282
    %284 = vmatprep.subr.mxu0 0.0
    %v285 = vand.u32 %v33, 4294901760
    %v286 = vsub.f32 %v33, %v285
    %287 = vmatpush1.msra.mxu0 %v286
    %288 = vmatprep.subr.mxu0 0.0
    %v289 = vand.u32 %v32, 4294901760
    %v290 = vsub.f32 %v32, %v289
    %291 = vmatpush1.msra.mxu0 %v290
    %292 = vmatprep.subr.mxu0 0.0
    %v293 = vand.u32 %v31, 4294901760
    %v294 = vsub.f32 %v31, %v293
    %295 = vmatpush1.msra.mxu0 %v294
    %296 = vmatprep.subr.mxu0 0.0
    %v297 = vand.u32 %v30, 4294901760
    %v298 = vsub.f32 %v30, %v297
    %299 = vmatpush1.msra.mxu0 %v298
    %300 = vmatprep.subr.mxu0 0.0
    %301 = vmatpush2.msra.mxu0 0.0
    %302 = vmatprep.subr.mxu0 0.0
    %303 = vmatpush2.msra.mxu0 0.0
    %304 = vmatprep.subr.mxu0 0.0
    %305 = vmatpush2.msra.mxu0 0.0
    %306 = vmatprep.subr.mxu0 0.0
    %307 = vmatpush2.msra.mxu0 0.0
    %308 = vmatprep.subr.mxu0 0.0
    %309 = vmatpush2.msra.mxu0 0.0
    %310 = vmatprep.subr.mxu0 0.0
    %311 = vmatpush2.msra.mxu0 0.0
    %312 = vmatprep.subr.mxu0 0.0
    %313 = vmatpush2.msra.mxu0 0.0
    %314 = vmatprep.subr.mxu0 0.0
    %315 = vmatpush2.msra.mxu0 0.0
    %316 = vmatprep.subr.mxu0 0.0
    %317 = vmatpush2.msra.mxu0 0.0
    %318 = vmatprep.subr.mxu0 0.0
    %319 = vmatpush2.msra.mxu0 0.0
    %320 = vmatprep.subr.mxu0 0.0
    %321 = vmatpush2.msra.mxu0 0.0
    %322 = vmatprep.subr.mxu0 0.0
    %323 = vmatpush2.msra.mxu0 0.0
    %324 = vmatprep.subr.mxu0 0.0
    %325 = vmatpush2.msra.mxu0 0.0
    %326 = vmatprep.subr.mxu0 0.0
    %327 = vmatpush2.msra.mxu0 0.0
    %328 = vmatprep.subr.mxu0 0.0
    %329 = vmatpush2.msra.mxu0 0.0
    %330 = vmatprep.subr.mxu0 0.0
    %331 = vmatpush2.msra.mxu0 0.0
    %332 = vmatprep.mubr.f32.mxu0 0.0
    %v333 = vand.u32 %v56, 4294901760
    %v334 = vsub.f32 %v56, %v333
    %335 = vmatmul.mubr.f32.gmra.mxu0 %v334
    %v336 = vpop.f32.mrf.mxu0
    %v337 = vadd.f32 %v249, %v336
    %v338 = vpop.f32.mrf.mxu0
    %339 = vdwg.mxu0
    %340 = vmatprep.subr.mxu0 0.0
    %341 = vmatpush1.msra.mxu0 0.0
    %342 = vmatprep.subr.mxu0 0.0
    %343 = vmatpush1.msra.mxu0 0.0
    %344 = vmatprep.subr.mxu0 0.0
    %345 = vmatpush1.msra.mxu0 0.0
    %346 = vmatprep.subr.mxu0 0.0
    %347 = vmatpush1.msra.mxu0 0.0
    %348 = vmatprep.subr.mxu0 0.0
    %349 = vmatpush1.msra.mxu0 0.0
    %350 = vmatprep.subr.mxu0 0.0
    %351 = vmatpush1.msra.mxu0 0.0
    %352 = vmatprep.subr.mxu0 0.0
    %353 = vmatpush1.msra.mxu0 0.0
    %354 = vmatprep.subr.mxu0 0.0
    %355 = vmatpush1.msra.mxu0 0.0
    %356 = vmatprep.subr.mxu0 0.0
    %v357 = vand.u32 %v37, 4294901760
    %358 = vmatpush1.msra.mxu0 %v357
    %359 = vmatprep.subr.mxu0 0.0
    %v360 = vand.u32 %v36, 4294901760
    %361 = vmatpush1.msra.mxu0 %v360
    %362 = vmatprep.subr.mxu0 0.0
    %v363 = vand.u32 %v35, 4294901760
    %364 = vmatpush1.msra.mxu0 %v363
    %365 = vmatprep.subr.mxu0 0.0
    %v366 = vand.u32 %v34, 4294901760
    %367 = vmatpush1.msra.mxu0 %v366
    %368 = vmatprep.subr.mxu0 0.0
    %v369 = vand.u32 %v33, 4294901760
    %370 = vmatpush1.msra.mxu0 %v369
    %371 = vmatprep.subr.mxu0 0.0
    %v372 = vand.u32 %v32, 4294901760
    %373 = vmatpush1.msra.mxu0 %v372
    %374 = vmatprep.subr.mxu0 0.0
    %v375 = vand.u32 %v31, 4294901760
    %376 = vmatpush1.msra.mxu0 %v375
    %377 = vmatprep.subr.mxu0 0.0
    %v378 = vand.u32 %v30, 4294901760
    %379 = vmatpush1.msra.mxu0 %v378
    %380 = vmatprep.subr.mxu0 0.0
    %381 = vmatpush2.msra.mxu0 0.0
    %382 = vmatprep.subr.mxu0 0.0
    %383 = vmatpush2.msra.mxu0 0.0
    %384 = vmatprep.subr.mxu0 0.0
    %385 = vmatpush2.msra.mxu0 0.0
    %386 = vmatprep.subr.mxu0 0.0
    %387 = vmatpush2.msra.mxu0 0.0
    %388 = vmatprep.subr.mxu0 0.0
    %389 = vmatpush2.msra.mxu0 0.0
    %390 = vmatprep.subr.mxu0 0.0
    %391 = vmatpush2.msra.mxu0 0.0
    %392 = vmatprep.subr.mxu0 0.0
    %393 = vmatpush2.msra.mxu0 0.0
    %394 = vmatprep.subr.mxu0 0.0
    %395 = vmatpush2.msra.mxu0 0.0
    %396 = vmatprep.subr.mxu0 0.0
    %397 = vmatpush2.msra.mxu0 0.0
    %398 = vmatprep.subr.mxu0 0.0
    %399 = vmatpush2.msra.mxu0 0.0
    %400 = vmatprep.subr.mxu0 0.0
    %401 = vmatpush2.msra.mxu0 0.0
    %402 = vmatprep.subr.mxu0 0.0
    %403 = vmatpush2.msra.mxu0 0.0
    %404 = vmatprep.subr.mxu0 0.0
    %405 = vmatpush2.msra.mxu0 0.0
    %406 = vmatprep.subr.mxu0 0.0
    %407 = vmatpush2.msra.mxu0 0.0
    %408 = vmatprep.subr.mxu0 0.0
    %409 = vmatpush2.msra.mxu0 0.0
    %410 = vmatprep.subr.mxu0 0.0
    %411 = vmatpush2.msra.mxu0 0.0
    %412 = vmatprep.mubr.f32.mxu0 0.0
    %v413 = vand.u32 %v56, 4294901760
    %v414 = vsub.f32 %v56, %v413
    %v415 = vand.u32 %v414, 4294901760
    %416 = vmatmul.mubr.f32.gmra.mxu0 %v415
    %v417 = vpop.f32.mrf.mxu0
    %v418 = vadd.f32 %v337, %v417
    %v419 = vpop.f32.mrf.mxu0
    %420 = vdwg.mxu0
    %421 = vmatprep.subr.mxu0 0.0
    %422 = vmatpush1.msra.mxu0 0.0
    %423 = vmatprep.subr.mxu0 0.0
    %424 = vmatpush1.msra.mxu0 0.0
    %425 = vmatprep.subr.mxu0 0.0
    %426 = vmatpush1.msra.mxu0 0.0
    %427 = vmatprep.subr.mxu0 0.0
    %428 = vmatpush1.msra.mxu0 0.0
    %429 = vmatprep.subr.mxu0 0.0
    %430 = vmatpush1.msra.mxu0 0.0
    %431 = vmatprep.subr.mxu0 0.0
    %432 = vmatpush1.msra.mxu0 0.0
    %433 = vmatprep.subr.mxu0 0.0
    %434 = vmatpush1.msra.mxu0 0.0
    %435 = vmatprep.subr.mxu0 0.0
    %436 = vmatpush1.msra.mxu0 0.0
    %437 = vmatprep.subr.mxu0 0.0
    %v438 = vand.u32 %v37, 4294901760
    %v439 = vsub.f32 %v37, %v438
    %v440 = vand.u32 %v439, 4294901760
    %441 = vmatpush1.msra.mxu0 %v440
    %442 = vmatprep.subr.mxu0 0.0
    %v443 = vand.u32 %v36, 4294901760
    %v444 = vsub.f32 %v36, %v443
    %v445 = vand.u32 %v444, 4294901760
    %446 = vmatpush1.msra.mxu0 %v445
    %447 = vmatprep.subr.mxu0 0.0
    %v448 = vand.u32 %v35, 4294901760
    %v449 = vsub.f32 %v35, %v448
    %v450 = vand.u32 %v449, 4294901760
    %451 = vmatpush1.msra.mxu0 %v450
    %452 = vmatprep.subr.mxu0 0.0
    %v453 = vand.u32 %v34, 4294901760
    %v454 = vsub.f32 %v34, %v453
    %v455 = vand.u32 %v454, 4294901760
    %456 = vmatpush1.msra.mxu0 %v455
    %457 = vmatprep.subr.mxu0 0.0
    %v458 = vand.u32 %v33, 4294901760
    %v459 = vsub.f32 %v33, %v458
    %v460 = vand.u32 %v459, 4294901760
    %461 = vmatpush1.msra.mxu0 %v460
    %462 = vmatprep.subr.mxu0 0.0
    %v463 = vand.u32 %v32, 4294901760
    %v464 = vsub.f32 %v32, %v463
    %v465 = vand.u32 %v464, 4294901760
    %466 = vmatpush1.msra.mxu0 %v465
    %467 = vmatprep.subr.mxu0 0.0
    %v468 = vand.u32 %v31, 4294901760
    %v469 = vsub.f32 %v31, %v468
    %v470 = vand.u32 %v469, 4294901760
    %471 = vmatpush1.msra.mxu0 %v470
    %472 = vmatprep.subr.mxu0 0.0
    %v473 = vand.u32 %v30, 4294901760
    %v474 = vsub.f32 %v30, %v473
    %v475 = vand.u32 %v474, 4294901760
    %476 = vmatpush1.msra.mxu0 %v475
    %477 = vmatprep.subr.mxu0 0.0
    %478 = vmatpush2.msra.mxu0 0.0
    %479 = vmatprep.subr.mxu0 0.0
    %480 = vmatpush2.msra.mxu0 0.0
    %481 = vmatprep.subr.mxu0 0.0
    %482 = vmatpush2.msra.mxu0 0.0
    %483 = vmatprep.subr.mxu0 0.0
    %484 = vmatpush2.msra.mxu0 0.0
    %485 = vmatprep.subr.mxu0 0.0
    %486 = vmatpush2.msra.mxu0 0.0
    %487 = vmatprep.subr.mxu0 0.0
    %488 = vmatpush2.msra.mxu0 0.0
    %489 = vmatprep.subr.mxu0 0.0
    %490 = vmatpush2.msra.mxu0 0.0
    %491 = vmatprep.subr.mxu0 0.0
    %492 = vmatpush2.msra.mxu0 0.0
    %493 = vmatprep.subr.mxu0 0.0
    %494 = vmatpush2.msra.mxu0 0.0
    %495 = vmatprep.subr.mxu0 0.0
    %496 = vmatpush2.msra.mxu0 0.0
    %497 = vmatprep.subr.mxu0 0.0
    %498 = vmatpush2.msra.mxu0 0.0
    %499 = vmatprep.subr.mxu0 0.0
    %500 = vmatpush2.msra.mxu0 0.0
    %501 = vmatprep.subr.mxu0 0.0
    %502 = vmatpush2.msra.mxu0 0.0
    %503 = vmatprep.subr.mxu0 0.0
    %504 = vmatpush2.msra.mxu0 0.0
    %505 = vmatprep.subr.mxu0 0.0
    %506 = vmatpush2.msra.mxu0 0.0
    %507 = vmatprep.subr.mxu0 0.0
    %508 = vmatpush2.msra.mxu0 0.0
    %509 = vmatprep.mubr.f32.mxu0 0.0
    %v510 = vand.u32 %v56, 4294901760
    %511 = vmatmul.mubr.f32.gmra.mxu0 %v510
    %v512 = vpop.f32.mrf.mxu0
    %v513 = vadd.f32 %v418, %v512
    %v514 = vpop.f32.mrf.mxu0
    %515 = vdwg.mxu0
    %516 = vmatprep.subr.mxu0 0.0
    %517 = vmatpush1.msra.mxu0 0.0
    %518 = vmatprep.subr.mxu0 0.0
    %519 = vmatpush1.msra.mxu0 0.0
    %520 = vmatprep.subr.mxu0 0.0
    %521 = vmatpush1.msra.mxu0 0.0
    %522 = vmatprep.subr.mxu0 0.0
    %523 = vmatpush1.msra.mxu0 0.0
    %524 = vmatprep.subr.mxu0 0.0
    %525 = vmatpush1.msra.mxu0 0.0
    %526 = vmatprep.subr.mxu0 0.0
    %527 = vmatpush1.msra.mxu0 0.0
    %528 = vmatprep.subr.mxu0 0.0
    %529 = vmatpush1.msra.mxu0 0.0
    %530 = vmatprep.subr.mxu0 0.0
    %531 = vmatpush1.msra.mxu0 0.0
    %532 = vmatprep.subr.mxu0 0.0
    %v533 = vand.u32 %v37, 4294901760
    %534 = vmatpush1.msra.mxu0 %v533
    %535 = vmatprep.subr.mxu0 0.0
    %v536 = vand.u32 %v36, 4294901760
    %537 = vmatpush1.msra.mxu0 %v536
    %538 = vmatprep.subr.mxu0 0.0
    %v539 = vand.u32 %v35, 4294901760
    %540 = vmatpush1.msra.mxu0 %v539
    %541 = vmatprep.subr.mxu0 0.0
    %v542 = vand.u32 %v34, 4294901760
    %543 = vmatpush1.msra.mxu0 %v542
    %544 = vmatprep.subr.mxu0 0.0
    %v545 = vand.u32 %v33, 4294901760
    %546 = vmatpush1.msra.mxu0 %v545
    %547 = vmatprep.subr.mxu0 0.0
    %v548 = vand.u32 %v32, 4294901760
    %549 = vmatpush1.msra.mxu0 %v548
    %550 = vmatprep.subr.mxu0 0.0
    %v551 = vand.u32 %v31, 4294901760
    %552 = vmatpush1.msra.mxu0 %v551
    %553 = vmatprep.subr.mxu0 0.0
    %v554 = vand.u32 %v30, 4294901760
    %555 = vmatpush1.msra.mxu0 %v554
    %556 = vmatprep.subr.mxu0 0.0
    %557 = vmatpush2.msra.mxu0 0.0
    %558 = vmatprep.subr.mxu0 0.0
    %559 = vmatpush2.msra.mxu0 0.0
    %560 = vmatprep.subr.mxu0 0.0
    %561 = vmatpush2.msra.mxu0 0.0
    %562 = vmatprep.subr.mxu0 0.0
    %563 = vmatpush2.msra.mxu0 0.0
    %564 = vmatprep.subr.mxu0 0.0
    %565 = vmatpush2.msra.mxu0 0.0
    %566 = vmatprep.subr.mxu0 0.0
    %567 = vmatpush2.msra.mxu0 0.0
    %568 = vmatprep.subr.mxu0 0.0
    %569 = vmatpush2.msra.mxu0 0.0
    %570 = vmatprep.subr.mxu0 0.0
    %571 = vmatpush2.msra.mxu0 0.0
    %572 = vmatprep.subr.mxu0 0.0
    %573 = vmatpush2.msra.mxu0 0.0
    %574 = vmatprep.subr.mxu0 0.0
    %575 = vmatpush2.msra.mxu0 0.0
    %576 = vmatprep.subr.mxu0 0.0
    %577 = vmatpush2.msra.mxu0 0.0
    %578 = vmatprep.subr.mxu0 0.0
    %579 = vmatpush2.msra.mxu0 0.0
    %580 = vmatprep.subr.mxu0 0.0
    %581 = vmatpush2.msra.mxu0 0.0
    %582 = vmatprep.subr.mxu0 0.0
    %583 = vmatpush2.msra.mxu0 0.0
    %584 = vmatprep.subr.mxu0 0.0
    %585 = vmatpush2.msra.mxu0 0.0
    %586 = vmatprep.subr.mxu0 0.0
    %587 = vmatpush2.msra.mxu0 0.0
    %588 = vmatprep.mubr.f32.mxu0 0.0
    %v589 = vand.u32 %v56, 4294901760
    %590 = vmatmul.mubr.f32.gmra.mxu0 %v589
    %v591 = vpop.f32.mrf.mxu0
    %v592 = vadd.f32 %v513, %v591
    %v593 = vpop.f32.mrf.mxu0
    %594 = vdwg.mxu0
    %v595 = vld [vmem:[%s1] sm:$0x3]
    %597 = vset.pattern.permute.xlu0 0
    %598 = vperm.xlu0 %597, %v595
    %v599 = vpop.permute.xlu0 %598
    %v601 = vmul.f32 %v592, %v599
    %vm602 = vcmask 254976
    %603 = vst.msk [vmem:[#allocation4] sm:$0x3] %vm602, %v601
    %v604 = vld [vmem:[%s0] sm:$0x3]
    %605 = vset.pattern.permute.xlu0 1
    %606 = vperm.xlu0 %605, %v604
    %v607 = vpop.permute.xlu0 %606
    %vm608 = vcmp.eq.s32.totalorder %v40, %v607
    %v609 = vsel %vm608, 1, 0
    %v610 = vcvt.s32.f32 %v609
    %v612 = vsel %vm54, %v610, 0
    %614 = vmatprep.subr.mxu0 0.0
    %615 = vmatpush1.msra.mxu0 0.0
    %616 = vmatprep.subr.mxu0 0.0
    %617 = vmatpush1.msra.mxu0 0.0
    %618 = vmatprep.subr.mxu0 0.0
    %619 = vmatpush1.msra.mxu0 0.0
    %620 = vmatprep.subr.mxu0 0.0
    %621 = vmatpush1.msra.mxu0 0.0
    %622 = vmatprep.subr.mxu0 0.0
    %623 = vmatpush1.msra.mxu0 0.0
    %624 = vmatprep.subr.mxu0 0.0
    %625 = vmatpush1.msra.mxu0 0.0
    %626 = vmatprep.subr.mxu0 0.0
    %627 = vmatpush1.msra.mxu0 0.0
    %628 = vmatprep.subr.mxu0 0.0
    %629 = vmatpush1.msra.mxu0 0.0
    %630 = vmatprep.subr.mxu0 0.0
    %v631 = vand.u32 %v37, 4294901760
    %632 = vmatpush1.msra.mxu0 %v631
    %633 = vmatprep.subr.mxu0 0.0
    %v634 = vand.u32 %v36, 4294901760
    %635 = vmatpush1.msra.mxu0 %v634
    %636 = vmatprep.subr.mxu0 0.0
    %v637 = vand.u32 %v35, 4294901760
    %638 = vmatpush1.msra.mxu0 %v637
    %639 = vmatprep.subr.mxu0 0.0
    %v640 = vand.u32 %v34, 4294901760
    %641 = vmatpush1.msra.mxu0 %v640
    %642 = vmatprep.subr.mxu0 0.0
    %v643 = vand.u32 %v33, 4294901760
    %644 = vmatpush1.msra.mxu0 %v643
    %645 = vmatprep.subr.mxu0 0.0
    %v646 = vand.u32 %v32, 4294901760
    %647 = vmatpush1.msra.mxu0 %v646
    %648 = vmatprep.subr.mxu0 0.0
    %v649 = vand.u32 %v31, 4294901760
    %650 = vmatpush1.msra.mxu0 %v649
    %651 = vmatprep.subr.mxu0 0.0
    %v652 = vand.u32 %v30, 4294901760
    %653 = vmatpush1.msra.mxu0 %v652
    %654 = vmatprep.subr.mxu0 0.0
    %655 = vmatpush2.msra.mxu0 0.0
    %656 = vmatprep.subr.mxu0 0.0
    %657 = vmatpush2.msra.mxu0 0.0
    %658 = vmatprep.subr.mxu0 0.0
    %659 = vmatpush2.msra.mxu0 0.0
    %660 = vmatprep.subr.mxu0 0.0
    %661 = vmatpush2.msra.mxu0 0.0
    %662 = vmatprep.subr.mxu0 0.0
    %663 = vmatpush2.msra.mxu0 0.0
    %664 = vmatprep.subr.mxu0 0.0
    %665 = vmatpush2.msra.mxu0 0.0
    %666 = vmatprep.subr.mxu0 0.0
    %667 = vmatpush2.msra.mxu0 0.0
    %668 = vmatprep.subr.mxu0 0.0
    %669 = vmatpush2.msra.mxu0 0.0
    %670 = vmatprep.subr.mxu0 0.0
    %671 = vmatpush2.msra.mxu0 0.0
    %672 = vmatprep.subr.mxu0 0.0
    %673 = vmatpush2.msra.mxu0 0.0
    %674 = vmatprep.subr.mxu0 0.0
    %675 = vmatpush2.msra.mxu0 0.0
    %676 = vmatprep.subr.mxu0 0.0
    %677 = vmatpush2.msra.mxu0 0.0
    %678 = vmatprep.subr.mxu0 0.0
    %679 = vmatpush2.msra.mxu0 0.0
    %680 = vmatprep.subr.mxu0 0.0
    %681 = vmatpush2.msra.mxu0 0.0
    %682 = vmatprep.subr.mxu0 0.0
    %683 = vmatpush2.msra.mxu0 0.0
    %684 = vmatprep.subr.mxu0 0.0
    %685 = vmatpush2.msra.mxu0 0.0
    %686 = vmatprep.mubr.f32.mxu0 0.0
    %v687 = vand.u32 %v612, 4294901760
    %v688 = vsub.f32 %v612, %v687
    %v689 = vand.u32 %v688, 4294901760
    %v690 = vsub.f32 %v688, %v689
    %v691 = vand.u32 %v690, 4294901760
    %692 = vmatmul.mubr.f32.gmra.mxu0 %v691
    %v693 = vpop.f32.mrf.mxu0
    %v694 = vadd.f32 %v52, %v693
    %v695 = vpop.f32.mrf.mxu0
    %696 = vdwg.mxu0
    %697 = vmatprep.subr.mxu0 0.0
    %698 = vmatpush1.msra.mxu0 0.0
    %699 = vmatprep.subr.mxu0 0.0
    %700 = vmatpush1.msra.mxu0 0.0
    %701 = vmatprep.subr.mxu0 0.0
    %702 = vmatpush1.msra.mxu0 0.0
    %703 = vmatprep.subr.mxu0 0.0
    %704 = vmatpush1.msra.mxu0 0.0
    %705 = vmatprep.subr.mxu0 0.0
    %706 = vmatpush1.msra.mxu0 0.0
    %707 = vmatprep.subr.mxu0 0.0
    %708 = vmatpush1.msra.mxu0 0.0
    %709 = vmatprep.subr.mxu0 0.0
    %710 = vmatpush1.msra.mxu0 0.0
    %711 = vmatprep.subr.mxu0 0.0
    %712 = vmatpush1.msra.mxu0 0.0
    %713 = vmatprep.subr.mxu0 0.0
    %v714 = vand.u32 %v37, 4294901760
    %v715 = vsub.f32 %v37, %v714
    %v716 = vand.u32 %v715, 4294901760
    %v717 = vsub.f32 %v715, %v716
    %v718 = vand.u32 %v717, 4294901760
    %719 = vmatpush1.msra.mxu0 %v718
    %720 = vmatprep.subr.mxu0 0.0
    %v721 = vand.u32 %v36, 4294901760
    %v722 = vsub.f32 %v36, %v721
    %v723 = vand.u32 %v722, 4294901760
    %v724 = vsub.f32 %v722, %v723
    %v725 = vand.u32 %v724, 4294901760
    %726 = vmatpush1.msra.mxu0 %v725
    %727 = vmatprep.subr.mxu0 0.0
    %v728 = vand.u32 %v35, 4294901760
    %v729 = vsub.f32 %v35, %v728
    %v730 = vand.u32 %v729, 4294901760
    %v731 = vsub.f32 %v729, %v730
    %v732 = vand.u32 %v731, 4294901760
    %733 = vmatpush1.msra.mxu0 %v732
    %734 = vmatprep.subr.mxu0 0.0
    %v735 = vand.u32 %v34, 4294901760
    %v736 = vsub.f32 %v34, %v735
    %v737 = vand.u32 %v736, 4294901760
    %v738 = vsub.f32 %v736, %v737
    %v739 = vand.u32 %v738, 4294901760
    %740 = vmatpush1.msra.mxu0 %v739
    %741 = vmatprep.subr.mxu0 0.0
    %v742 = vand.u32 %v33, 4294901760
    %v743 = vsub.f32 %v33, %v742
    %v744 = vand.u32 %v743, 4294901760
    %v745 = vsub.f32 %v743, %v744
    %v746 = vand.u32 %v745, 4294901760
    %747 = vmatpush1.msra.mxu0 %v746
    %748 = vmatprep.subr.mxu0 0.0
    %v749 = vand.u32 %v32, 4294901760
    %v750 = vsub.f32 %v32, %v749
    %v751 = vand.u32 %v750, 4294901760
    %v752 = vsub.f32 %v750, %v751
    %v753 = vand.u32 %v752, 4294901760
    %754 = vmatpush1.msra.mxu0 %v753
    %755 = vmatprep.subr.mxu0 0.0
    %v756 = vand.u32 %v31, 4294901760
    %v757 = vsub.f32 %v31, %v756
    %v758 = vand.u32 %v757, 4294901760
    %v759 = vsub.f32 %v757, %v758
    %v760 = vand.u32 %v759, 4294901760
    %761 = vmatpush1.msra.mxu0 %v760
    %762 = vmatprep.subr.mxu0 0.0
    %v763 = vand.u32 %v30, 4294901760
    %v764 = vsub.f32 %v30, %v763
    %v765 = vand.u32 %v764, 4294901760
    %v766 = vsub.f32 %v764, %v765
    %v767 = vand.u32 %v766, 4294901760
    %768 = vmatpush1.msra.mxu0 %v767
    %769 = vmatprep.subr.mxu0 0.0
    %770 = vmatpush2.msra.mxu0 0.0
    %771 = vmatprep.subr.mxu0 0.0
    %772 = vmatpush2.msra.mxu0 0.0
    %773 = vmatprep.subr.mxu0 0.0
    %774 = vmatpush2.msra.mxu0 0.0
    %775 = vmatprep.subr.mxu0 0.0
    %776 = vmatpush2.msra.mxu0 0.0
    %777 = vmatprep.subr.mxu0 0.0
    %778 = vmatpush2.msra.mxu0 0.0
    %779 = vmatprep.subr.mxu0 0.0
    %780 = vmatpush2.msra.mxu0 0.0
    %781 = vmatprep.subr.mxu0 0.0
    %782 = vmatpush2.msra.mxu0 0.0
    %783 = vmatprep.subr.mxu0 0.0
    %784 = vmatpush2.msra.mxu0 0.0
    %785 = vmatprep.subr.mxu0 0.0
    %786 = vmatpush2.msra.mxu0 0.0
    %787 = vmatprep.subr.mxu0 0.0
    %788 = vmatpush2.msra.mxu0 0.0
    %789 = vmatprep.subr.mxu0 0.0
    %790 = vmatpush2.msra.mxu0 0.0
    %791 = vmatprep.subr.mxu0 0.0
    %792 = vmatpush2.msra.mxu0 0.0
    %793 = vmatprep.subr.mxu0 0.0
    %794 = vmatpush2.msra.mxu0 0.0
    %795 = vmatprep.subr.mxu0 0.0
    %796 = vmatpush2.msra.mxu0 0.0
    %797 = vmatprep.subr.mxu0 0.0
    %798 = vmatpush2.msra.mxu0 0.0
    %799 = vmatprep.subr.mxu0 0.0
    %800 = vmatpush2.msra.mxu0 0.0
    %801 = vmatprep.mubr.f32.mxu0 0.0
    %v802 = vand.u32 %v612, 4294901760
    %803 = vmatmul.mubr.f32.gmra.mxu0 %v802
    %v804 = vpop.f32.mrf.mxu0
    %v805 = vadd.f32 %v694, %v804
    %v806 = vpop.f32.mrf.mxu0
    %807 = vdwg.mxu0
    %808 = vmatprep.subr.mxu0 0.0
    %809 = vmatpush1.msra.mxu0 0.0
    %810 = vmatprep.subr.mxu0 0.0
    %811 = vmatpush1.msra.mxu0 0.0
    %812 = vmatprep.subr.mxu0 0.0
    %813 = vmatpush1.msra.mxu0 0.0
    %814 = vmatprep.subr.mxu0 0.0
    %815 = vmatpush1.msra.mxu0 0.0
    %816 = vmatprep.subr.mxu0 0.0
    %817 = vmatpush1.msra.mxu0 0.0
    %818 = vmatprep.subr.mxu0 0.0
    %819 = vmatpush1.msra.mxu0 0.0
    %820 = vmatprep.subr.mxu0 0.0
    %821 = vmatpush1.msra.mxu0 0.0
    %822 = vmatprep.subr.mxu0 0.0
    %823 = vmatpush1.msra.mxu0 0.0
    %824 = vmatprep.subr.mxu0 0.0
    %v825 = vand.u32 %v37, 4294901760
    %v826 = vsub.f32 %v37, %v825
    %827 = vmatpush1.msra.mxu0 %v826
    %828 = vmatprep.subr.mxu0 0.0
    %v829 = vand.u32 %v36, 4294901760
    %v830 = vsub.f32 %v36, %v829
    %831 = vmatpush1.msra.mxu0 %v830
    %832 = vmatprep.subr.mxu0 0.0
    %v833 = vand.u32 %v35, 4294901760
    %v834 = vsub.f32 %v35, %v833
    %835 = vmatpush1.msra.mxu0 %v834
    %836 = vmatprep.subr.mxu0 0.0
    %v837 = vand.u32 %v34, 4294901760
    %v838 = vsub.f32 %v34, %v837
    %839 = vmatpush1.msra.mxu0 %v838
    %840 = vmatprep.subr.mxu0 0.0
    %v841 = vand.u32 %v33, 4294901760
    %v842 = vsub.f32 %v33, %v841
    %843 = vmatpush1.msra.mxu0 %v842
    %844 = vmatprep.subr.mxu0 0.0
    %v845 = vand.u32 %v32, 4294901760
    %v846 = vsub.f32 %v32, %v845
    %847 = vmatpush1.msra.mxu0 %v846
    %848 = vmatprep.subr.mxu0 0.0
    %v849 = vand.u32 %v31, 4294901760
    %v850 = vsub.f32 %v31, %v849
    %851 = vmatpush1.msra.mxu0 %v850
    %852 = vmatprep.subr.mxu0 0.0
    %v853 = vand.u32 %v30, 4294901760
    %v854 = vsub.f32 %v30, %v853
    %855 = vmatpush1.msra.mxu0 %v854
    %856 = vmatprep.subr.mxu0 0.0
    %857 = vmatpush2.msra.mxu0 0.0
    %858 = vmatprep.subr.mxu0 0.0
    %859 = vmatpush2.msra.mxu0 0.0
    %860 = vmatprep.subr.mxu0 0.0
    %861 = vmatpush2.msra.mxu0 0.0
    %862 = vmatprep.subr.mxu0 0.0
    %863 = vmatpush2.msra.mxu0 0.0
    %864 = vmatprep.subr.mxu0 0.0
    %865 = vmatpush2.msra.mxu0 0.0
    %866 = vmatprep.subr.mxu0 0.0
    %867 = vmatpush2.msra.mxu0 0.0
    %868 = vmatprep.subr.mxu0 0.0
    %869 = vmatpush2.msra.mxu0 0.0
    %870 = vmatprep.subr.mxu0 0.0
    %871 = vmatpush2.msra.mxu0 0.0
    %872 = vmatprep.subr.mxu0 0.0
    %873 = vmatpush2.msra.mxu0 0.0
    %874 = vmatprep.subr.mxu0 0.0
    %875 = vmatpush2.msra.mxu0 0.0
    %876 = vmatprep.subr.mxu0 0.0
    %877 = vmatpush2.msra.mxu0 0.0
    %878 = vmatprep.subr.mxu0 0.0
    %879 = vmatpush2.msra.mxu0 0.0
    %880 = vmatprep.subr.mxu0 0.0
    %881 = vmatpush2.msra.mxu0 0.0
    %882 = vmatprep.subr.mxu0 0.0
    %883 = vmatpush2.msra.mxu0 0.0
    %884 = vmatprep.subr.mxu0 0.0
    %885 = vmatpush2.msra.mxu0 0.0
    %886 = vmatprep.subr.mxu0 0.0
    %887 = vmatpush2.msra.mxu0 0.0
    %888 = vmatprep.mubr.f32.mxu0 0.0
    %v889 = vand.u32 %v612, 4294901760
    %v890 = vsub.f32 %v612, %v889
    %891 = vmatmul.mubr.f32.gmra.mxu0 %v890
    %v892 = vpop.f32.mrf.mxu0
    %v893 = vadd.f32 %v805, %v892
    %v894 = vpop.f32.mrf.mxu0
    %895 = vdwg.mxu0
    %896 = vmatprep.subr.mxu0 0.0
    %897 = vmatpush1.msra.mxu0 0.0
    %898 = vmatprep.subr.mxu0 0.0
    %899 = vmatpush1.msra.mxu0 0.0
    %900 = vmatprep.subr.mxu0 0.0
    %901 = vmatpush1.msra.mxu0 0.0
    %902 = vmatprep.subr.mxu0 0.0
    %903 = vmatpush1.msra.mxu0 0.0
    %904 = vmatprep.subr.mxu0 0.0
    %905 = vmatpush1.msra.mxu0 0.0
    %906 = vmatprep.subr.mxu0 0.0
    %907 = vmatpush1.msra.mxu0 0.0
    %908 = vmatprep.subr.mxu0 0.0
    %909 = vmatpush1.msra.mxu0 0.0
    %910 = vmatprep.subr.mxu0 0.0
    %911 = vmatpush1.msra.mxu0 0.0
    %912 = vmatprep.subr.mxu0 0.0
    %v913 = vand.u32 %v37, 4294901760
    %914 = vmatpush1.msra.mxu0 %v913
    %915 = vmatprep.subr.mxu0 0.0
    %v916 = vand.u32 %v36, 4294901760
    %917 = vmatpush1.msra.mxu0 %v916
    %918 = vmatprep.subr.mxu0 0.0
    %v919 = vand.u32 %v35, 4294901760
    %920 = vmatpush1.msra.mxu0 %v919
    %921 = vmatprep.subr.mxu0 0.0
    %v922 = vand.u32 %v34, 4294901760
    %923 = vmatpush1.msra.mxu0 %v922
    %924 = vmatprep.subr.mxu0 0.0
    %v925 = vand.u32 %v33, 4294901760
    %926 = vmatpush1.msra.mxu0 %v925
    %927 = vmatprep.subr.mxu0 0.0
    %v928 = vand.u32 %v32, 4294901760
    %929 = vmatpush1.msra.mxu0 %v928
    %930 = vmatprep.subr.mxu0 0.0
    %v931 = vand.u32 %v31, 4294901760
    %932 = vmatpush1.msra.mxu0 %v931
    %933 = vmatprep.subr.mxu0 0.0
    %v934 = vand.u32 %v30, 4294901760
    %935 = vmatpush1.msra.mxu0 %v934
    %936 = vmatprep.subr.mxu0 0.0
    %937 = vmatpush2.msra.mxu0 0.0
    %938 = vmatprep.subr.mxu0 0.0
    %939 = vmatpush2.msra.mxu0 0.0
    %940 = vmatprep.subr.mxu0 0.0
    %941 = vmatpush2.msra.mxu0 0.0
    %942 = vmatprep.subr.mxu0 0.0
    %943 = vmatpush2.msra.mxu0 0.0
    %944 = vmatprep.subr.mxu0 0.0
    %945 = vmatpush2.msra.mxu0 0.0
    %946 = vmatprep.subr.mxu0 0.0
    %947 = vmatpush2.msra.mxu0 0.0
    %948 = vmatprep.subr.mxu0 0.0
    %949 = vmatpush2.msra.mxu0 0.0
    %950 = vmatprep.subr.mxu0 0.0
    %951 = vmatpush2.msra.mxu0 0.0
    %952 = vmatprep.subr.mxu0 0.0
    %953 = vmatpush2.msra.mxu0 0.0
    %954 = vmatprep.subr.mxu0 0.0
    %955 = vmatpush2.msra.mxu0 0.0
    %956 = vmatprep.subr.mxu0 0.0
    %957 = vmatpush2.msra.mxu0 0.0
    %958 = vmatprep.subr.mxu0 0.0
    %959 = vmatpush2.msra.mxu0 0.0
    %960 = vmatprep.subr.mxu0 0.0
    %961 = vmatpush2.msra.mxu0 0.0
    %962 = vmatprep.subr.mxu0 0.0
    %963 = vmatpush2.msra.mxu0 0.0
    %964 = vmatprep.subr.mxu0 0.0
    %965 = vmatpush2.msra.mxu0 0.0
    %966 = vmatprep.subr.mxu0 0.0
    %967 = vmatpush2.msra.mxu0 0.0
    %968 = vmatprep.mubr.f32.mxu0 0.0
    %v969 = vand.u32 %v612, 4294901760
    %v970 = vsub.f32 %v612, %v969
    %v971 = vand.u32 %v970, 4294901760
    %972 = vmatmul.mubr.f32.gmra.mxu0 %v971
    %v973 = vpop.f32.mrf.mxu0
    %v974 = vadd.f32 %v893, %v973
    %v975 = vpop.f32.mrf.mxu0
    %976 = vdwg.mxu0
    %977 = vmatprep.subr.mxu0 0.0
    %978 = vmatpush1.msra.mxu0 0.0
    %979 = vmatprep.subr.mxu0 0.0
    %980 = vmatpush1.msra.mxu0 0.0
    %981 = vmatprep.subr.mxu0 0.0
    %982 = vmatpush1.msra.mxu0 0.0
    %983 = vmatprep.subr.mxu0 0.0
    %984 = vmatpush1.msra.mxu0 0.0
    %985 = vmatprep.subr.mxu0 0.0
    %986 = vmatpush1.msra.mxu0 0.0
    %987 = vmatprep.subr.mxu0 0.0
    %988 = vmatpush1.msra.mxu0 0.0
    %989 = vmatprep.subr.mxu0 0.0
    %990 = vmatpush1.msra.mxu0 0.0
    %991 = vmatprep.subr.mxu0 0.0
    %992 = vmatpush1.msra.mxu0 0.0
    %993 = vmatprep.subr.mxu0 0.0
    %v994 = vand.u32 %v37, 4294901760
    %v995 = vsub.f32 %v37, %v994
    %v996 = vand.u32 %v995, 4294901760
    %997 = vmatpush1.msra.mxu0 %v996
    %998 = vmatprep.subr.mxu0 0.0
    %v999 = vand.u32 %v36, 4294901760
    %v1000 = vsub.f32 %v36, %v999
    %v1001 = vand.u32 %v1000, 4294901760
    %1002 = vmatpush1.msra.mxu0 %v1001
    %1003 = vmatprep.subr.mxu0 0.0
    %v1004 = vand.u32 %v35, 4294901760
    %v1005 = vsub.f32 %v35, %v1004
    %v1006 = vand.u32 %v1005, 4294901760
    %1007 = vmatpush1.msra.mxu0 %v1006
    %1008 = vmatprep.subr.mxu0 0.0
    %v1009 = vand.u32 %v34, 4294901760
    %v1010 = vsub.f32 %v34, %v1009
    %v1011 = vand.u32 %v1010, 4294901760
    %1012 = vmatpush1.msra.mxu0 %v1011
    %1013 = vmatprep.subr.mxu0 0.0
    %v1014 = vand.u32 %v33, 4294901760
    %v1015 = vsub.f32 %v33, %v1014
    %v1016 = vand.u32 %v1015, 4294901760
    %1017 = vmatpush1.msra.mxu0 %v1016
    %1018 = vmatprep.subr.mxu0 0.0
    %v1019 = vand.u32 %v32, 4294901760
    %v1020 = vsub.f32 %v32, %v1019
    %v1021 = vand.u32 %v1020, 4294901760
    %1022 = vmatpush1.msra.mxu0 %v1021
    %1023 = vmatprep.subr.mxu0 0.0
    %v1024 = vand.u32 %v31, 4294901760
    %v1025 = vsub.f32 %v31, %v1024
    %v1026 = vand.u32 %v1025, 4294901760
    %1027 = vmatpush1.msra.mxu0 %v1026
    %1028 = vmatprep.subr.mxu0 0.0
    %v1029 = vand.u32 %v30, 4294901760
    %v1030 = vsub.f32 %v30, %v1029
    %v1031 = vand.u32 %v1030, 4294901760
    %1032 = vmatpush1.msra.mxu0 %v1031
    %1033 = vmatprep.subr.mxu0 0.0
    %1034 = vmatpush2.msra.mxu0 0.0
    %1035 = vmatprep.subr.mxu0 0.0
    %1036 = vmatpush2.msra.mxu0 0.0
    %1037 = vmatprep.subr.mxu0 0.0
    %1038 = vmatpush2.msra.mxu0 0.0
    %1039 = vmatprep.subr.mxu0 0.0
    %1040 = vmatpush2.msra.mxu0 0.0
    %1041 = vmatprep.subr.mxu0 0.0
    %1042 = vmatpush2.msra.mxu0 0.0
    %1043 = vmatprep.subr.mxu0 0.0
    %1044 = vmatpush2.msra.mxu0 0.0
    %1045 = vmatprep.subr.mxu0 0.0
    %1046 = vmatpush2.msra.mxu0 0.0
    %1047 = vmatprep.subr.mxu0 0.0
    %1048 = vmatpush2.msra.mxu0 0.0
    %1049 = vmatprep.subr.mxu0 0.0
    %1050 = vmatpush2.msra.mxu0 0.0
    %1051 = vmatprep.subr.mxu0 0.0
    %1052 = vmatpush2.msra.mxu0 0.0
    %1053 = vmatprep.subr.mxu0 0.0
    %1054 = vmatpush2.msra.mxu0 0.0
    %1055 = vmatprep.subr.mxu0 0.0
    %1056 = vmatpush2.msra.mxu0 0.0
    %1057 = vmatprep.subr.mxu0 0.0
    %1058 = vmatpush2.msra.mxu0 0.0
    %1059 = vmatprep.subr.mxu0 0.0
    %1060 = vmatpush2.msra.mxu0 0.0
    %1061 = vmatprep.subr.mxu0 0.0
    %1062 = vmatpush2.msra.mxu0 0.0
    %1063 = vmatprep.subr.mxu0 0.0
    %1064 = vmatpush2.msra.mxu0 0.0
    %1065 = vmatprep.mubr.f32.mxu0 0.0
    %v1066 = vand.u32 %v612, 4294901760
    %1067 = vmatmul.mubr.f32.gmra.mxu0 %v1066
    %v1068 = vpop.f32.mrf.mxu0
    %v1069 = vadd.f32 %v974, %v1068
    %v1070 = vpop.f32.mrf.mxu0
    %1071 = vdwg.mxu0
    %1072 = vmatprep.subr.mxu0 0.0
    %1073 = vmatpush1.msra.mxu0 0.0
    %1074 = vmatprep.subr.mxu0 0.0
    %1075 = vmatpush1.msra.mxu0 0.0
    %1076 = vmatprep.subr.mxu0 0.0
    %1077 = vmatpush1.msra.mxu0 0.0
    %1078 = vmatprep.subr.mxu0 0.0
    %1079 = vmatpush1.msra.mxu0 0.0
    %1080 = vmatprep.subr.mxu0 0.0
    %1081 = vmatpush1.msra.mxu0 0.0
    %1082 = vmatprep.subr.mxu0 0.0
    %1083 = vmatpush1.msra.mxu0 0.0
    %1084 = vmatprep.subr.mxu0 0.0
    %1085 = vmatpush1.msra.mxu0 0.0
    %1086 = vmatprep.subr.mxu0 0.0
    %1087 = vmatpush1.msra.mxu0 0.0
    %1088 = vmatprep.subr.mxu0 0.0
    %v1089 = vand.u32 %v37, 4294901760
    %1090 = vmatpush1.msra.mxu0 %v1089
    %1091 = vmatprep.subr.mxu0 0.0
    %v1092 = vand.u32 %v36, 4294901760
    %1093 = vmatpush1.msra.mxu0 %v1092
    %1094 = vmatprep.subr.mxu0 0.0
    %v1095 = vand.u32 %v35, 4294901760
    %1096 = vmatpush1.msra.mxu0 %v1095
    %1097 = vmatprep.subr.mxu0 0.0
    %v1098 = vand.u32 %v34, 4294901760
    %1099 = vmatpush1.msra.mxu0 %v1098
    %1100 = vmatprep.subr.mxu0 0.0
    %v1101 = vand.u32 %v33, 4294901760
    %1102 = vmatpush1.msra.mxu0 %v1101
    %1103 = vmatprep.subr.mxu0 0.0
    %v1104 = vand.u32 %v32, 4294901760
    %1105 = vmatpush1.msra.mxu0 %v1104
    %1106 = vmatprep.subr.mxu0 0.0
    %v1107 = vand.u32 %v31, 4294901760
    %1108 = vmatpush1.msra.mxu0 %v1107
    %1109 = vmatprep.subr.mxu0 0.0
    %v1110 = vand.u32 %v30, 4294901760
    %1111 = vmatpush1.msra.mxu0 %v1110
    %1112 = vmatprep.subr.mxu0 0.0
    %1113 = vmatpush2.msra.mxu0 0.0
    %1114 = vmatprep.subr.mxu0 0.0
    %1115 = vmatpush2.msra.mxu0 0.0
    %1116 = vmatprep.subr.mxu0 0.0
    %1117 = vmatpush2.msra.mxu0 0.0
    %1118 = vmatprep.subr.mxu0 0.0
    %1119 = vmatpush2.msra.mxu0 0.0
    %1120 = vmatprep.subr.mxu0 0.0
    %1121 = vmatpush2.msra.mxu0 0.0
    %1122 = vmatprep.subr.mxu0 0.0
    %1123 = vmatpush2.msra.mxu0 0.0
    %1124 = vmatprep.subr.mxu0 0.0
    %1125 = vmatpush2.msra.mxu0 0.0
    %1126 = vmatprep.subr.mxu0 0.0
    %1127 = vmatpush2.msra.mxu0 0.0
    %1128 = vmatprep.subr.mxu0 0.0
    %1129 = vmatpush2.msra.mxu0 0.0
    %1130 = vmatprep.subr.mxu0 0.0
    %1131 = vmatpush2.msra.mxu0 0.0
    %1132 = vmatprep.subr.mxu0 0.0
    %1133 = vmatpush2.msra.mxu0 0.0
    %1134 = vmatprep.subr.mxu0 0.0
    %1135 = vmatpush2.msra.mxu0 0.0
    %1136 = vmatprep.subr.mxu0 0.0
    %1137 = vmatpush2.msra.mxu0 0.0
    %1138 = vmatprep.subr.mxu0 0.0
    %1139 = vmatpush2.msra.mxu0 0.0
    %1140 = vmatprep.subr.mxu0 0.0
    %1141 = vmatpush2.msra.mxu0 0.0
    %1142 = vmatprep.subr.mxu0 0.0
    %1143 = vmatpush2.msra.mxu0 0.0
    %1144 = vmatprep.mubr.f32.mxu0 0.0
    %v1145 = vand.u32 %v612, 4294901760
    %1146 = vmatmul.mubr.f32.gmra.mxu0 %v1145
    %v1147 = vpop.f32.mrf.mxu0
    %v1148 = vadd.f32 %v1069, %v1147
    %v1149 = vpop.f32.mrf.mxu0
    %1150 = vdwg.mxu0
    %v1151 = vld [vmem:[%s1] sm:$0x3]
    %1153 = vset.pattern.permute.xlu0 1
    %1154 = vperm.xlu0 %1153, %v1151
    %v1155 = vpop.permute.xlu0 %1154
    %v1157 = vmul.f32 %v1148, %v1155
    %v1160 = vunpack.c.l.s4 1983009808
    %v1161 = vunpack.c.0.s8 %v1160
    %v1162 = vlaneseq
    %v1163 = vshrl.u32 %v1162, 7
    %v1164 = vsub.s32 %v1161, %v1163
    %v1165 = vrot.slane %v1157, %v1164
    %1166 = vrot.lane.b32.xlu0 %v1165, 32
    %v1167 = vpop.permute.xlu0 %1166
    %vm1169 = vcmask 517376
    %1170 = vst.msk [vmem:[#allocation4] sm:$0x3] %vm1169, %v1167
    %v1171 = vld [vmem:[%s0] sm:$0x3]
    %1172 = vset.pattern.permute.xlu0 2
    %1173 = vperm.xlu0 %1172, %v1171
    %v1174 = vpop.permute.xlu0 %1173
    %vm1175 = vcmp.eq.s32.totalorder %v40, %v1174
    %v1176 = vsel %vm1175, 1, 0
    %v1177 = vcvt.s32.f32 %v1176
    %v1179 = vsel %vm54, %v1177, 0
    %1181 = vmatprep.subr.mxu0 0.0
    %1182 = vmatpush1.msra.mxu0 0.0
    %1183 = vmatprep.subr.mxu0 0.0
    %1184 = vmatpush1.msra.mxu0 0.0
    %1185 = vmatprep.subr.mxu0 0.0
    %1186 = vmatpush1.msra.mxu0 0.0
    %1187 = vmatprep.subr.mxu0 0.0
    %1188 = vmatpush1.msra.mxu0 0.0
    %1189 = vmatprep.subr.mxu0 0.0
    %1190 = vmatpush1.msra.mxu0 0.0
    %1191 = vmatprep.subr.mxu0 0.0
    %1192 = vmatpush1.msra.mxu0 0.0
    %1193 = vmatprep.subr.mxu0 0.0
    %1194 = vmatpush1.msra.mxu0 0.0
    %1195 = vmatprep.subr.mxu0 0.0
    %1196 = vmatpush1.msra.mxu0 0.0
    %1197 = vmatprep.subr.mxu0 0.0
    %v1198 = vand.u32 %v37, 4294901760
    %1199 = vmatpush1.msra.mxu0 %v1198
    %1200 = vmatprep.subr.mxu0 0.0
    %v1201 = vand.u32 %v36, 4294901760
    %1202 = vmatpush1.msra.mxu0 %v1201
    %1203 = vmatprep.subr.mxu0 0.0
    %v1204 = vand.u32 %v35, 4294901760
    %1205 = vmatpush1.msra.mxu0 %v1204
    %1206 = vmatprep.subr.mxu0 0.0
    %v1207 = vand.u32 %v34, 4294901760
    %1208 = vmatpush1.msra.mxu0 %v1207
    %1209 = vmatprep.subr.mxu0 0.0
    %v1210 = vand.u32 %v33, 4294901760
    %1211 = vmatpush1.msra.mxu0 %v1210
    %1212 = vmatprep.subr.mxu0 0.0
    %v1213 = vand.u32 %v32, 4294901760
    %1214 = vmatpush1.msra.mxu0 %v1213
    %1215 = vmatprep.subr.mxu0 0.0
    %v1216 = vand.u32 %v31, 4294901760
    %1217 = vmatpush1.msra.mxu0 %v1216
    %1218 = vmatprep.subr.mxu0 0.0
    %v1219 = vand.u32 %v30, 4294901760
    %1220 = vmatpush1.msra.mxu0 %v1219
    %1221 = vmatprep.subr.mxu0 0.0
    %1222 = vmatpush2.msra.mxu0 0.0
    %1223 = vmatprep.subr.mxu0 0.0
    %1224 = vmatpush2.msra.mxu0 0.0
    %1225 = vmatprep.subr.mxu0 0.0
    %1226 = vmatpush2.msra.mxu0 0.0
    %1227 = vmatprep.subr.mxu0 0.0
    %1228 = vmatpush2.msra.mxu0 0.0
    %1229 = vmatprep.subr.mxu0 0.0
    %1230 = vmatpush2.msra.mxu0 0.0
    %1231 = vmatprep.subr.mxu0 0.0
    %1232 = vmatpush2.msra.mxu0 0.0
    %1233 = vmatprep.subr.mxu0 0.0
    %1234 = vmatpush2.msra.mxu0 0.0
    %1235 = vmatprep.subr.mxu0 0.0
    %1236 = vmatpush2.msra.mxu0 0.0
    %1237 = vmatprep.subr.mxu0 0.0
    %1238 = vmatpush2.msra.mxu0 0.0
    %1239 = vmatprep.subr.mxu0 0.0
    %1240 = vmatpush2.msra.mxu0 0.0
    %1241 = vmatprep.subr.mxu0 0.0
    %1242 = vmatpush2.msra.mxu0 0.0
    %1243 = vmatprep.subr.mxu0 0.0
    %1244 = vmatpush2.msra.mxu0 0.0
    %1245 = vmatprep.subr.mxu0 0.0
    %1246 = vmatpush2.msra.mxu0 0.0
    %1247 = vmatprep.subr.mxu0 0.0
    %1248 = vmatpush2.msra.mxu0 0.0
    %1249 = vmatprep.subr.mxu0 0.0
    %1250 = vmatpush2.msra.mxu0 0.0
    %1251 = vmatprep.subr.mxu0 0.0
    %1252 = vmatpush2.msra.mxu0 0.0
    %1253 = vmatprep.mubr.f32.mxu0 0.0
    %v1254 = vand.u32 %v1179, 4294901760
    %v1255 = vsub.f32 %v1179, %v1254
    %v1256 = vand.u32 %v1255, 4294901760
    %v1257 = vsub.f32 %v1255, %v1256
    %v1258 = vand.u32 %v1257, 4294901760
    %1259 = vmatmul.mubr.f32.gmra.mxu0 %v1258
    %v1260 = vpop.f32.mrf.mxu0
    %v1261 = vadd.f32 %v52, %v1260
    %v1262 = vpop.f32.mrf.mxu0
    %1263 = vdwg.mxu0
    %1264 = vmatprep.subr.mxu0 0.0
    %1265 = vmatpush1.msra.mxu0 0.0
    %1266 = vmatprep.subr.mxu0 0.0
    %1267 = vmatpush1.msra.mxu0 0.0
    %1268 = vmatprep.subr.mxu0 0.0
    %1269 = vmatpush1.msra.mxu0 0.0
    %1270 = vmatprep.subr.mxu0 0.0
    %1271 = vmatpush1.msra.mxu0 0.0
    %1272 = vmatprep.subr.mxu0 0.0
    %1273 = vmatpush1.msra.mxu0 0.0
    %1274 = vmatprep.subr.mxu0 0.0
    %1275 = vmatpush1.msra.mxu0 0.0
    %1276 = vmatprep.subr.mxu0 0.0
    %1277 = vmatpush1.msra.mxu0 0.0
    %1278 = vmatprep.subr.mxu0 0.0
    %1279 = vmatpush1.msra.mxu0 0.0
    %1280 = vmatprep.subr.mxu0 0.0
    %v1281 = vand.u32 %v37, 4294901760
    %v1282 = vsub.f32 %v37, %v1281
    %v1283 = vand.u32 %v1282, 4294901760
    %v1284 = vsub.f32 %v1282, %v1283
    %v1285 = vand.u32 %v1284, 4294901760
    %1286 = vmatpush1.msra.mxu0 %v1285
    %1287 = vmatprep.subr.mxu0 0.0
    %v1288 = vand.u32 %v36, 4294901760
    %v1289 = vsub.f32 %v36, %v1288
    %v1290 = vand.u32 %v1289, 4294901760
    %v1291 = vsub.f32 %v1289, %v1290
    %v1292 = vand.u32 %v1291, 4294901760
    %1293 = vmatpush1.msra.mxu0 %v1292
    %1294 = vmatprep.subr.mxu0 0.0
    %v1295 = vand.u32 %v35, 4294901760
    %v1296 = vsub.f32 %v35, %v1295
    %v1297 = vand.u32 %v1296, 4294901760
    %v1298 = vsub.f32 %v1296, %v1297
    %v1299 = vand.u32 %v1298, 4294901760
    %1300 = vmatpush1.msra.mxu0 %v1299
    %1301 = vmatprep.subr.mxu0 0.0
    %v1302 = vand.u32 %v34, 4294901760
    %v1303 = vsub.f32 %v34, %v1302
    %v1304 = vand.u32 %v1303, 4294901760
    %v1305 = vsub.f32 %v1303, %v1304
    %v1306 = vand.u32 %v1305, 4294901760
    %1307 = vmatpush1.msra.mxu0 %v1306
    %1308 = vmatprep.subr.mxu0 0.0
    %v1309 = vand.u32 %v33, 4294901760
    %v1310 = vsub.f32 %v33, %v1309
    %v1311 = vand.u32 %v1310, 4294901760
    %v1312 = vsub.f32 %v1310, %v1311
    %v1313 = vand.u32 %v1312, 4294901760
    %1314 = vmatpush1.msra.mxu0 %v1313
    %1315 = vmatprep.subr.mxu0 0.0
    %v1316 = vand.u32 %v32, 4294901760
    %v1317 = vsub.f32 %v32, %v1316
    %v1318 = vand.u32 %v1317, 4294901760
    %v1319 = vsub.f32 %v1317, %v1318
    %v1320 = vand.u32 %v1319, 4294901760
    %1321 = vmatpush1.msra.mxu0 %v1320
    %1322 = vmatprep.subr.mxu0 0.0
    %v1323 = vand.u32 %v31, 4294901760
    %v1324 = vsub.f32 %v31, %v1323
    %v1325 = vand.u32 %v1324, 4294901760
    %v1326 = vsub.f32 %v1324, %v1325
    %v1327 = vand.u32 %v1326, 4294901760
    %1328 = vmatpush1.msra.mxu0 %v1327
    %1329 = vmatprep.subr.mxu0 0.0
    %v1330 = vand.u32 %v30, 4294901760
    %v1331 = vsub.f32 %v30, %v1330
    %v1332 = vand.u32 %v1331, 4294901760
    %v1333 = vsub.f32 %v1331, %v1332
    %v1334 = vand.u32 %v1333, 4294901760
    %1335 = vmatpush1.msra.mxu0 %v1334
    %1336 = vmatprep.subr.mxu0 0.0
    %1337 = vmatpush2.msra.mxu0 0.0
    %1338 = vmatprep.subr.mxu0 0.0
    %1339 = vmatpush2.msra.mxu0 0.0
    %1340 = vmatprep.subr.mxu0 0.0
    %1341 = vmatpush2.msra.mxu0 0.0
    %1342 = vmatprep.subr.mxu0 0.0
    %1343 = vmatpush2.msra.mxu0 0.0
    %1344 = vmatprep.subr.mxu0 0.0
    %1345 = vmatpush2.msra.mxu0 0.0
    %1346 = vmatprep.subr.mxu0 0.0
    %1347 = vmatpush2.msra.mxu0 0.0
    %1348 = vmatprep.subr.mxu0 0.0
    %1349 = vmatpush2.msra.mxu0 0.0
    %1350 = vmatprep.subr.mxu0 0.0
    %1351 = vmatpush2.msra.mxu0 0.0
    %1352 = vmatprep.subr.mxu0 0.0
    %1353 = vmatpush2.msra.mxu0 0.0
    %1354 = vmatprep.subr.mxu0 0.0
    %1355 = vmatpush2.msra.mxu0 0.0
    %1356 = vmatprep.subr.mxu0 0.0
    %1357 = vmatpush2.msra.mxu0 0.0
    %1358 = vmatprep.subr.mxu0 0.0
    %1359 = vmatpush2.msra.mxu0 0.0
    %1360 = vmatprep.subr.mxu0 0.0
    %1361 = vmatpush2.msra.mxu0 0.0
    %1362 = vmatprep.subr.mxu0 0.0
    %1363 = vmatpush2.msra.mxu0 0.0
    %1364 = vmatprep.subr.mxu0 0.0
    %1365 = vmatpush2.msra.mxu0 0.0
    %1366 = vmatprep.subr.mxu0 0.0
    %1367 = vmatpush2.msra.mxu0 0.0
    %1368 = vmatprep.mubr.f32.mxu0 0.0
    %v1369 = vand.u32 %v1179, 4294901760
    %1370 = vmatmul.mubr.f32.gmra.mxu0 %v1369
    %v1371 = vpop.f32.mrf.mxu0
    %v1372 = vadd.f32 %v1261, %v1371
    %v1373 = vpop.f32.mrf.mxu0
    %1374 = vdwg.mxu0
    %1375 = vmatprep.subr.mxu0 0.0
    %1376 = vmatpush1.msra.mxu0 0.0
    %1377 = vmatprep.subr.mxu0 0.0
    %1378 = vmatpush1.msra.mxu0 0.0
    %1379 = vmatprep.subr.mxu0 0.0
    %1380 = vmatpush1.msra.mxu0 0.0
    %1381 = vmatprep.subr.mxu0 0.0
    %1382 = vmatpush1.msra.mxu0 0.0
    %1383 = vmatprep.subr.mxu0 0.0
    %1384 = vmatpush1.msra.mxu0 0.0
    %1385 = vmatprep.subr.mxu0 0.0
    %1386 = vmatpush1.msra.mxu0 0.0
    %1387 = vmatprep.subr.mxu0 0.0
    %1388 = vmatpush1.msra.mxu0 0.0
    %1389 = vmatprep.subr.mxu0 0.0
    %1390 = vmatpush1.msra.mxu0 0.0
    %1391 = vmatprep.subr.mxu0 0.0
    %v1392 = vand.u32 %v37, 4294901760
    %v1393 = vsub.f32 %v37, %v1392
    %1394 = vmatpush1.msra.mxu0 %v1393
    %1395 = vmatprep.subr.mxu0 0.0
    %v1396 = vand.u32 %v36, 4294901760
    %v1397 = vsub.f32 %v36, %v1396
    %1398 = vmatpush1.msra.mxu0 %v1397
    %1399 = vmatprep.subr.mxu0 0.0
    %v1400 = vand.u32 %v35, 4294901760
    %v1401 = vsub.f32 %v35, %v1400
    %1402 = vmatpush1.msra.mxu0 %v1401
    %1403 = vmatprep.subr.mxu0 0.0
    %v1404 = vand.u32 %v34, 4294901760
    %v1405 = vsub.f32 %v34, %v1404
    %1406 = vmatpush1.msra.mxu0 %v1405
    %1407 = vmatprep.subr.mxu0 0.0
    %v1408 = vand.u32 %v33, 4294901760
    %v1409 = vsub.f32 %v33, %v1408
    %1410 = vmatpush1.msra.mxu0 %v1409
    %1411 = vmatprep.subr.mxu0 0.0
    %v1412 = vand.u32 %v32, 4294901760
    %v1413 = vsub.f32 %v32, %v1412
    %1414 = vmatpush1.msra.mxu0 %v1413
    %1415 = vmatprep.subr.mxu0 0.0
    %v1416 = vand.u32 %v31, 4294901760
    %v1417 = vsub.f32 %v31, %v1416
    %1418 = vmatpush1.msra.mxu0 %v1417
    %1419 = vmatprep.subr.mxu0 0.0
    %v1420 = vand.u32 %v30, 4294901760
    %v1421 = vsub.f32 %v30, %v1420
    %1422 = vmatpush1.msra.mxu0 %v1421
    %1423 = vmatprep.subr.mxu0 0.0
    %1424 = vmatpush2.msra.mxu0 0.0
    %1425 = vmatprep.subr.mxu0 0.0
    %1426 = vmatpush2.msra.mxu0 0.0
    %1427 = vmatprep.subr.mxu0 0.0
    %1428 = vmatpush2.msra.mxu0 0.0
    %1429 = vmatprep.subr.mxu0 0.0
    %1430 = vmatpush2.msra.mxu0 0.0
    %1431 = vmatprep.subr.mxu0 0.0
    %1432 = vmatpush2.msra.mxu0 0.0
    %1433 = vmatprep.subr.mxu0 0.0
    %1434 = vmatpush2.msra.mxu0 0.0
    %1435 = vmatprep.subr.mxu0 0.0
    %1436 = vmatpush2.msra.mxu0 0.0
    %1437 = vmatprep.subr.mxu0 0.0
    %1438 = vmatpush2.msra.mxu0 0.0
    %1439 = vmatprep.subr.mxu0 0.0
    %1440 = vmatpush2.msra.mxu0 0.0
    %1441 = vmatprep.subr.mxu0 0.0
    %1442 = vmatpush2.msra.mxu0 0.0
    %1443 = vmatprep.subr.mxu0 0.0
    %1444 = vmatpush2.msra.mxu0 0.0
    %1445 = vmatprep.subr.mxu0 0.0
    %1446 = vmatpush2.msra.mxu0 0.0
    %1447 = vmatprep.subr.mxu0 0.0
    %1448 = vmatpush2.msra.mxu0 0.0
    %1449 = vmatprep.subr.mxu0 0.0
    %1450 = vmatpush2.msra.mxu0 0.0
    %1451 = vmatprep.subr.mxu0 0.0
    %1452 = vmatpush2.msra.mxu0 0.0
    %1453 = vmatprep.subr.mxu0 0.0
    %1454 = vmatpush2.msra.mxu0 0.0
    %1455 = vmatprep.mubr.f32.mxu0 0.0
    %v1456 = vand.u32 %v1179, 4294901760
    %v1457 = vsub.f32 %v1179, %v1456
    %1458 = vmatmul.mubr.f32.gmra.mxu0 %v1457
    %v1459 = vpop.f32.mrf.mxu0
    %v1460 = vadd.f32 %v1372, %v1459
    %v1461 = vpop.f32.mrf.mxu0
    %1462 = vdwg.mxu0
    %1463 = vmatprep.subr.mxu0 0.0
    %1464 = vmatpush1.msra.mxu0 0.0
    %1465 = vmatprep.subr.mxu0 0.0
    %1466 = vmatpush1.msra.mxu0 0.0
    %1467 = vmatprep.subr.mxu0 0.0
    %1468 = vmatpush1.msra.mxu0 0.0
    %1469 = vmatprep.subr.mxu0 0.0
    %1470 = vmatpush1.msra.mxu0 0.0
    %1471 = vmatprep.subr.mxu0 0.0
    %1472 = vmatpush1.msra.mxu0 0.0
    %1473 = vmatprep.subr.mxu0 0.0
    %1474 = vmatpush1.msra.mxu0 0.0
    %1475 = vmatprep.subr.mxu0 0.0
    %1476 = vmatpush1.msra.mxu0 0.0
    %1477 = vmatprep.subr.mxu0 0.0
    %1478 = vmatpush1.msra.mxu0 0.0
    %1479 = vmatprep.subr.mxu0 0.0
    %v1480 = vand.u32 %v37, 4294901760
    %1481 = vmatpush1.msra.mxu0 %v1480
    %1482 = vmatprep.subr.mxu0 0.0
    %v1483 = vand.u32 %v36, 4294901760
    %1484 = vmatpush1.msra.mxu0 %v1483
    %1485 = vmatprep.subr.mxu0 0.0
    %v1486 = vand.u32 %v35, 4294901760
    %1487 = vmatpush1.msra.mxu0 %v1486
    %1488 = vmatprep.subr.mxu0 0.0
    %v1489 = vand.u32 %v34, 4294901760
    %1490 = vmatpush1.msra.mxu0 %v1489
    %1491 = vmatprep.subr.mxu0 0.0
    %v1492 = vand.u32 %v33, 4294901760
    %1493 = vmatpush1.msra.mxu0 %v1492
    %1494 = vmatprep.subr.mxu0 0.0
    %v1495 = vand.u32 %v32, 4294901760
    %1496 = vmatpush1.msra.mxu0 %v1495
    %1497 = vmatprep.subr.mxu0 0.0
    %v1498 = vand.u32 %v31, 4294901760
    %1499 = vmatpush1.msra.mxu0 %v1498
    %1500 = vmatprep.subr.mxu0 0.0
    %v1501 = vand.u32 %v30, 4294901760
    %1502 = vmatpush1.msra.mxu0 %v1501
    %1503 = vmatprep.subr.mxu0 0.0
    %1504 = vmatpush2.msra.mxu0 0.0
    %1505 = vmatprep.subr.mxu0 0.0
    %1506 = vmatpush2.msra.mxu0 0.0
    %1507 = vmatprep.subr.mxu0 0.0
    %1508 = vmatpush2.msra.mxu0 0.0
    %1509 = vmatprep.subr.mxu0 0.0
    %1510 = vmatpush2.msra.mxu0 0.0
    %1511 = vmatprep.subr.mxu0 0.0
    %1512 = vmatpush2.msra.mxu0 0.0
    %1513 = vmatprep.subr.mxu0 0.0
    %1514 = vmatpush2.msra.mxu0 0.0
    %1515 = vmatprep.subr.mxu0 0.0
    %1516 = vmatpush2.msra.mxu0 0.0
    %1517 = vmatprep.subr.mxu0 0.0
    %1518 = vmatpush2.msra.mxu0 0.0
    %1519 = vmatprep.subr.mxu0 0.0
    %1520 = vmatpush2.msra.mxu0 0.0
    %1521 = vmatprep.subr.mxu0 0.0
    %1522 = vmatpush2.msra.mxu0 0.0
    %1523 = vmatprep.subr.mxu0 0.0
    %1524 = vmatpush2.msra.mxu0 0.0
    %1525 = vmatprep.subr.mxu0 0.0
    %1526 = vmatpush2.msra.mxu0 0.0
    %1527 = vmatprep.subr.mxu0 0.0
    %1528 = vmatpush2.msra.mxu0 0.0
    %1529 = vmatprep.subr.mxu0 0.0
    %1530 = vmatpush2.msra.mxu0 0.0
    %1531 = vmatprep.subr.mxu0 0.0
    %1532 = vmatpush2.msra.mxu0 0.0
    %1533 = vmatprep.subr.mxu0 0.0
    %1534 = vmatpush2.msra.mxu0 0.0
    %1535 = vmatprep.mubr.f32.mxu0 0.0
    %v1536 = vand.u32 %v1179, 4294901760
    %v1537 = vsub.f32 %v1179, %v1536
    %v1538 = vand.u32 %v1537, 4294901760
    %1539 = vmatmul.mubr.f32.gmra.mxu0 %v1538
    %v1540 = vpop.f32.mrf.mxu0
    %v1541 = vadd.f32 %v1460, %v1540
    %v1542 = vpop.f32.mrf.mxu0
    %1543 = vdwg.mxu0
    %1544 = vmatprep.subr.mxu0 0.0
    %1545 = vmatpush1.msra.mxu0 0.0
    %1546 = vmatprep.subr.mxu0 0.0
    %1547 = vmatpush1.msra.mxu0 0.0
    %1548 = vmatprep.subr.mxu0 0.0
    %1549 = vmatpush1.msra.mxu0 0.0
    %1550 = vmatprep.subr.mxu0 0.0
    %1551 = vmatpush1.msra.mxu0 0.0
    %1552 = vmatprep.subr.mxu0 0.0
    %1553 = vmatpush1.msra.mxu0 0.0
    %1554 = vmatprep.subr.mxu0 0.0
    %1555 = vmatpush1.msra.mxu0 0.0
    %1556 = vmatprep.subr.mxu0 0.0
    %1557 = vmatpush1.msra.mxu0 0.0
    %1558 = vmatprep.subr.mxu0 0.0
    %1559 = vmatpush1.msra.mxu0 0.0
    %1560 = vmatprep.subr.mxu0 0.0
    %v1561 = vand.u32 %v37, 4294901760
    %v1562 = vsub.f32 %v37, %v1561
    %v1563 = vand.u32 %v1562, 4294901760
    %1564 = vmatpush1.msra.mxu0 %v1563
    %1565 = vmatprep.subr.mxu0 0.0
    %v1566 = vand.u32 %v36, 4294901760
    %v1567 = vsub.f32 %v36, %v1566
    %v1568 = vand.u32 %v1567, 4294901760
    %1569 = vmatpush1.msra.mxu0 %v1568
    %1570 = vmatprep.subr.mxu0 0.0
    %v1571 = vand.u32 %v35, 4294901760
    %v1572 = vsub.f32 %v35, %v1571
    %v1573 = vand.u32 %v1572, 4294901760
    %1574 = vmatpush1.msra.mxu0 %v1573
    %1575 = vmatprep.subr.mxu0 0.0
    %v1576 = vand.u32 %v34, 4294901760
    %v1577 = vsub.f32 %v34, %v1576
    %v1578 = vand.u32 %v1577, 4294901760
    %1579 = vmatpush1.msra.mxu0 %v1578
    %1580 = vmatprep.subr.mxu0 0.0
    %v1581 = vand.u32 %v33, 4294901760
    %v1582 = vsub.f32 %v33, %v1581
    %v1583 = vand.u32 %v1582, 4294901760
    %1584 = vmatpush1.msra.mxu0 %v1583
    %1585 = vmatprep.subr.mxu0 0.0
    %v1586 = vand.u32 %v32, 4294901760
    %v1587 = vsub.f32 %v32, %v1586
    %v1588 = vand.u32 %v1587, 4294901760
    %1589 = vmatpush1.msra.mxu0 %v1588
    %1590 = vmatprep.subr.mxu0 0.0
    %v1591 = vand.u32 %v31, 4294901760
    %v1592 = vsub.f32 %v31, %v1591
    %v1593 = vand.u32 %v1592, 4294901760
    %1594 = vmatpush1.msra.mxu0 %v1593
    %1595 = vmatprep.subr.mxu0 0.0
    %v1596 = vand.u32 %v30, 4294901760
    %v1597 = vsub.f32 %v30, %v1596
    %v1598 = vand.u32 %v1597, 4294901760
    %1599 = vmatpush1.msra.mxu0 %v1598
    %1600 = vmatprep.subr.mxu0 0.0
    %1601 = vmatpush2.msra.mxu0 0.0
    %1602 = vmatprep.subr.mxu0 0.0
    %1603 = vmatpush2.msra.mxu0 0.0
    %1604 = vmatprep.subr.mxu0 0.0
    %1605 = vmatpush2.msra.mxu0 0.0
    %1606 = vmatprep.subr.mxu0 0.0
    %1607 = vmatpush2.msra.mxu0 0.0
    %1608 = vmatprep.subr.mxu0 0.0
    %1609 = vmatpush2.msra.mxu0 0.0
    %1610 = vmatprep.subr.mxu0 0.0
    %1611 = vmatpush2.msra.mxu0 0.0
    %1612 = vmatprep.subr.mxu0 0.0
    %1613 = vmatpush2.msra.mxu0 0.0
    %1614 = vmatprep.subr.mxu0 0.0
    %1615 = vmatpush2.msra.mxu0 0.0
    %1616 = vmatprep.subr.mxu0 0.0
    %1617 = vmatpush2.msra.mxu0 0.0
    %1618 = vmatprep.subr.mxu0 0.0
    %1619 = vmatpush2.msra.mxu0 0.0
    %1620 = vmatprep.subr.mxu0 0.0
    %1621 = vmatpush2.msra.mxu0 0.0
    %1622 = vmatprep.subr.mxu0 0.0
    %1623 = vmatpush2.msra.mxu0 0.0
    %1624 = vmatprep.subr.mxu0 0.0
    %1625 = vmatpush2.msra.mxu0 0.0
    %1626 = vmatprep.subr.mxu0 0.0
    %1627 = vmatpush2.msra.mxu0 0.0
    %1628 = vmatprep.subr.mxu0 0.0
    %1629 = vmatpush2.msra.mxu0 0.0
    %1630 = vmatprep.subr.mxu0 0.0
    %1631 = vmatpush2.msra.mxu0 0.0
    %1632 = vmatprep.mubr.f32.mxu0 0.0
    %v1633 = vand.u32 %v1179, 4294901760
    %1634 = vmatmul.mubr.f32.gmra.mxu0 %v1633
    %v1635 = vpop.f32.mrf.mxu0
    %v1636 = vadd.f32 %v1541, %v1635
    %v1637 = vpop.f32.mrf.mxu0
    %1638 = vdwg.mxu0
    %1639 = vmatprep.subr.mxu0 0.0
    %1640 = vmatpush1.msra.mxu0 0.0
    %1641 = vmatprep.subr.mxu0 0.0
    %1642 = vmatpush1.msra.mxu0 0.0
    %1643 = vmatprep.subr.mxu0 0.0
    %1644 = vmatpush1.msra.mxu0 0.0
    %1645 = vmatprep.subr.mxu0 0.0
    %1646 = vmatpush1.msra.mxu0 0.0
    %1647 = vmatprep.subr.mxu0 0.0
    %1648 = vmatpush1.msra.mxu0 0.0
    %1649 = vmatprep.subr.mxu0 0.0
    %1650 = vmatpush1.msra.mxu0 0.0
    %1651 = vmatprep.subr.mxu0 0.0
    %1652 = vmatpush1.msra.mxu0 0.0
    %1653 = vmatprep.subr.mxu0 0.0
    %1654 = vmatpush1.msra.mxu0 0.0
    %1655 = vmatprep.subr.mxu0 0.0
    %v1656 = vand.u32 %v37, 4294901760
    %1657 = vmatpush1.msra.mxu0 %v1656
    %1658 = vmatprep.subr.mxu0 0.0
    %v1659 = vand.u32 %v36, 4294901760
    %1660 = vmatpush1.msra.mxu0 %v1659
    %1661 = vmatprep.subr.mxu0 0.0
    %v1662 = vand.u32 %v35, 4294901760
    %1663 = vmatpush1.msra.mxu0 %v1662
    %1664 = vmatprep.subr.mxu0 0.0
    %v1665 = vand.u32 %v34, 4294901760
    %1666 = vmatpush1.msra.mxu0 %v1665
    %1667 = vmatprep.subr.mxu0 0.0
    %v1668 = vand.u32 %v33, 4294901760
    %1669 = vmatpush1.msra.mxu0 %v1668
    %1670 = vmatprep.subr.mxu0 0.0
    %v1671 = vand.u32 %v32, 4294901760
    %1672 = vmatpush1.msra.mxu0 %v1671
    %1673 = vmatprep.subr.mxu0 0.0
    %v1674 = vand.u32 %v31, 4294901760
    %1675 = vmatpush1.msra.mxu0 %v1674
    %1676 = vmatprep.subr.mxu0 0.0
    %v1677 = vand.u32 %v30, 4294901760
    %1678 = vmatpush1.msra.mxu0 %v1677
    %1679 = vmatprep.subr.mxu0 0.0
    %1680 = vmatpush2.msra.mxu0 0.0
    %1681 = vmatprep.subr.mxu0 0.0
    %1682 = vmatpush2.msra.mxu0 0.0
    %1683 = vmatprep.subr.mxu0 0.0
    %1684 = vmatpush2.msra.mxu0 0.0
    %1685 = vmatprep.subr.mxu0 0.0
    %1686 = vmatpush2.msra.mxu0 0.0
    %1687 = vmatprep.subr.mxu0 0.0
    %1688 = vmatpush2.msra.mxu0 0.0
    %1689 = vmatprep.subr.mxu0 0.0
    %1690 = vmatpush2.msra.mxu0 0.0
    %1691 = vmatprep.subr.mxu0 0.0
    %1692 = vmatpush2.msra.mxu0 0.0
    %1693 = vmatprep.subr.mxu0 0.0
    %1694 = vmatpush2.msra.mxu0 0.0
    %1695 = vmatprep.subr.mxu0 0.0
    %1696 = vmatpush2.msra.mxu0 0.0
    %1697 = vmatprep.subr.mxu0 0.0
    %1698 = vmatpush2.msra.mxu0 0.0
    %1699 = vmatprep.subr.mxu0 0.0
    %1700 = vmatpush2.msra.mxu0 0.0
    %1701 = vmatprep.subr.mxu0 0.0
    %1702 = vmatpush2.msra.mxu0 0.0
    %1703 = vmatprep.subr.mxu0 0.0
    %1704 = vmatpush2.msra.mxu0 0.0
    %1705 = vmatprep.subr.mxu0 0.0
    %1706 = vmatpush2.msra.mxu0 0.0
    %1707 = vmatprep.subr.mxu0 0.0
    %1708 = vmatpush2.msra.mxu0 0.0
    %1709 = vmatprep.subr.mxu0 0.0
    %1710 = vmatpush2.msra.mxu0 0.0
    %1711 = vmatprep.mubr.f32.mxu0 0.0
    %v1712 = vand.u32 %v1179, 4294901760
    %1713 = vmatmul.mubr.f32.gmra.mxu0 %v1712
    %v1714 = vpop.f32.mrf.mxu0
    %v1715 = vadd.f32 %v1636, %v1714
    %v1716 = vpop.f32.mrf.mxu0
    %1717 = vdwg.mxu0
    %v1718 = vld [vmem:[%s1] sm:$0x3]
    %1720 = vset.pattern.permute.xlu0 2
    %1721 = vperm.xlu0 %1720, %v1718
    %v1722 = vpop.permute.xlu0 %1721
    %v1724 = vmul.f32 %v1715, %v1722
    %v1727 = vunpack.c.l.s4 1983009808
    %v1728 = vunpack.c.0.s8 %v1727
    %v1729 = vlaneseq
    %v1730 = vshrl.u32 %v1729, 7
    %v1731 = vsub.s32 %v1728, %v1730
    %v1732 = vrot.slane %v1724, %v1731
    %1733 = vrot.lane.b32.xlu0 %v1732, 64
    %v1734 = vpop.permute.xlu0 %1733
    %vm1736 = vcmask 779776
    %1737 = vst.msk [vmem:[#allocation4] sm:$0x3] %vm1736, %v1734
    %v1738 = vld [vmem:[%s0] sm:$0x3]
    %1739 = vset.pattern.permute.xlu0 3
    %1740 = vperm.xlu0 %1739, %v1738
    %v1741 = vpop.permute.xlu0 %1740
    %vm1742 = vcmp.eq.s32.totalorder %v40, %v1741
    %v1743 = vsel %vm1742, 1, 0
    %v1744 = vcvt.s32.f32 %v1743
    %v1746 = vsel %vm54, %v1744, 0
    %1748 = vmatprep.subr.mxu0 0.0
    %1749 = vmatpush1.msra.mxu0 0.0
    %1750 = vmatprep.subr.mxu0 0.0
    %1751 = vmatpush1.msra.mxu0 0.0
    %1752 = vmatprep.subr.mxu0 0.0
    %1753 = vmatpush1.msra.mxu0 0.0
    %1754 = vmatprep.subr.mxu0 0.0
    %1755 = vmatpush1.msra.mxu0 0.0
    %1756 = vmatprep.subr.mxu0 0.0
    %1757 = vmatpush1.msra.mxu0 0.0
    %1758 = vmatprep.subr.mxu0 0.0
    %1759 = vmatpush1.msra.mxu0 0.0
    %1760 = vmatprep.subr.mxu0 0.0
    %1761 = vmatpush1.msra.mxu0 0.0
    %1762 = vmatprep.subr.mxu0 0.0
    %1763 = vmatpush1.msra.mxu0 0.0
    %1764 = vmatprep.subr.mxu0 0.0
    %v1765 = vand.u32 %v37, 4294901760
    %1766 = vmatpush1.msra.mxu0 %v1765
    %1767 = vmatprep.subr.mxu0 0.0
    %v1768 = vand.u32 %v36, 4294901760
    %1769 = vmatpush1.msra.mxu0 %v1768
    %1770 = vmatprep.subr.mxu0 0.0
    %v1771 = vand.u32 %v35, 4294901760
    %1772 = vmatpush1.msra.mxu0 %v1771
    %1773 = vmatprep.subr.mxu0 0.0
    %v1774 = vand.u32 %v34, 4294901760
    %1775 = vmatpush1.msra.mxu0 %v1774
    %1776 = vmatprep.subr.mxu0 0.0
    %v1777 = vand.u32 %v33, 4294901760
    %1778 = vmatpush1.msra.mxu0 %v1777
    %1779 = vmatprep.subr.mxu0 0.0
    %v1780 = vand.u32 %v32, 4294901760
    %1781 = vmatpush1.msra.mxu0 %v1780
    %1782 = vmatprep.subr.mxu0 0.0
    %v1783 = vand.u32 %v31, 4294901760
    %1784 = vmatpush1.msra.mxu0 %v1783
    %1785 = vmatprep.subr.mxu0 0.0
    %v1786 = vand.u32 %v30, 4294901760
    %1787 = vmatpush1.msra.mxu0 %v1786
    %1788 = vmatprep.subr.mxu0 0.0
    %1789 = vmatpush2.msra.mxu0 0.0
    %1790 = vmatprep.subr.mxu0 0.0
    %1791 = vmatpush2.msra.mxu0 0.0
    %1792 = vmatprep.subr.mxu0 0.0
    %1793 = vmatpush2.msra.mxu0 0.0
    %1794 = vmatprep.subr.mxu0 0.0
    %1795 = vmatpush2.msra.mxu0 0.0
    %1796 = vmatprep.subr.mxu0 0.0
    %1797 = vmatpush2.msra.mxu0 0.0
    %1798 = vmatprep.subr.mxu0 0.0
    %1799 = vmatpush2.msra.mxu0 0.0
    %1800 = vmatprep.subr.mxu0 0.0
    %1801 = vmatpush2.msra.mxu0 0.0
    %1802 = vmatprep.subr.mxu0 0.0
    %1803 = vmatpush2.msra.mxu0 0.0
    %1804 = vmatprep.subr.mxu0 0.0
    %1805 = vmatpush2.msra.mxu0 0.0
    %1806 = vmatprep.subr.mxu0 0.0
    %1807 = vmatpush2.msra.mxu0 0.0
    %1808 = vmatprep.subr.mxu0 0.0
    %1809 = vmatpush2.msra.mxu0 0.0
    %1810 = vmatprep.subr.mxu0 0.0
    %1811 = vmatpush2.msra.mxu0 0.0
    %1812 = vmatprep.subr.mxu0 0.0
    %1813 = vmatpush2.msra.mxu0 0.0
    %1814 = vmatprep.subr.mxu0 0.0
    %1815 = vmatpush2.msra.mxu0 0.0
    %1816 = vmatprep.subr.mxu0 0.0
    %1817 = vmatpush2.msra.mxu0 0.0
    %1818 = vmatprep.subr.mxu0 0.0
    %1819 = vmatpush2.msra.mxu0 0.0
    %1820 = vmatprep.mubr.f32.mxu0 0.0
    %v1821 = vand.u32 %v1746, 4294901760
    %v1822 = vsub.f32 %v1746, %v1821
    %v1823 = vand.u32 %v1822, 4294901760
    %v1824 = vsub.f32 %v1822, %v1823
    %v1825 = vand.u32 %v1824, 4294901760
    %1826 = vmatmul.mubr.f32.gmra.mxu0 %v1825
    %v1827 = vpop.f32.mrf.mxu0
    %v1828 = vadd.f32 %v52, %v1827
    %v1829 = vpop.f32.mrf.mxu0
    %1830 = vdwg.mxu0
    %1831 = vmatprep.subr.mxu0 0.0
    %1832 = vmatpush1.msra.mxu0 0.0
    %1833 = vmatprep.subr.mxu0 0.0
    %1834 = vmatpush1.msra.mxu0 0.0
    %1835 = vmatprep.subr.mxu0 0.0
    %1836 = vmatpush1.msra.mxu0 0.0
    %1837 = vmatprep.subr.mxu0 0.0
    %1838 = vmatpush1.msra.mxu0 0.0
    %1839 = vmatprep.subr.mxu0 0.0
    %1840 = vmatpush1.msra.mxu0 0.0
    %1841 = vmatprep.subr.mxu0 0.0
    %1842 = vmatpush1.msra.mxu0 0.0
    %1843 = vmatprep.subr.mxu0 0.0
    %1844 = vmatpush1.msra.mxu0 0.0
    %1845 = vmatprep.subr.mxu0 0.0
    %1846 = vmatpush1.msra.mxu0 0.0
    %1847 = vmatprep.subr.mxu0 0.0
    %v1848 = vand.u32 %v37, 4294901760
    %v1849 = vsub.f32 %v37, %v1848
    %v1850 = vand.u32 %v1849, 4294901760
    %v1851 = vsub.f32 %v1849, %v1850
    %v1852 = vand.u32 %v1851, 4294901760
    %1853 = vmatpush1.msra.mxu0 %v1852
    %1854 = vmatprep.subr.mxu0 0.0
    %v1855 = vand.u32 %v36, 4294901760
    %v1856 = vsub.f32 %v36, %v1855
    %v1857 = vand.u32 %v1856, 4294901760
    %v1858 = vsub.f32 %v1856, %v1857
    %v1859 = vand.u32 %v1858, 4294901760
    %1860 = vmatpush1.msra.mxu0 %v1859
    %1861 = vmatprep.subr.mxu0 0.0
    %v1862 = vand.u32 %v35, 4294901760
    %v1863 = vsub.f32 %v35, %v1862
    %v1864 = vand.u32 %v1863, 4294901760
    %v1865 = vsub.f32 %v1863, %v1864
    %v1866 = vand.u32 %v1865, 4294901760
    %1867 = vmatpush1.msra.mxu0 %v1866
    %1868 = vmatprep.subr.mxu0 0.0
    %v1869 = vand.u32 %v34, 4294901760
    %v1870 = vsub.f32 %v34, %v1869
    %v1871 = vand.u32 %v1870, 4294901760
    %v1872 = vsub.f32 %v1870, %v1871
    %v1873 = vand.u32 %v1872, 4294901760
    %1874 = vmatpush1.msra.mxu0 %v1873
    %1875 = vmatprep.subr.mxu0 0.0
    %v1876 = vand.u32 %v33, 4294901760
    %v1877 = vsub.f32 %v33, %v1876
    %v1878 = vand.u32 %v1877, 4294901760
    %v1879 = vsub.f32 %v1877, %v1878
    %v1880 = vand.u32 %v1879, 4294901760
    %1881 = vmatpush1.msra.mxu0 %v1880
    %1882 = vmatprep.subr.mxu0 0.0
    %v1883 = vand.u32 %v32, 4294901760
    %v1884 = vsub.f32 %v32, %v1883
    %v1885 = vand.u32 %v1884, 4294901760
    %v1886 = vsub.f32 %v1884, %v1885
    %v1887 = vand.u32 %v1886, 4294901760
    %1888 = vmatpush1.msra.mxu0 %v1887
    %1889 = vmatprep.subr.mxu0 0.0
    %v1890 = vand.u32 %v31, 4294901760
    %v1891 = vsub.f32 %v31, %v1890
    %v1892 = vand.u32 %v1891, 4294901760
    %v1893 = vsub.f32 %v1891, %v1892
    %v1894 = vand.u32 %v1893, 4294901760
    %1895 = vmatpush1.msra.mxu0 %v1894
    %1896 = vmatprep.subr.mxu0 0.0
    %v1897 = vand.u32 %v30, 4294901760
    %v1898 = vsub.f32 %v30, %v1897
    %v1899 = vand.u32 %v1898, 4294901760
    %v1900 = vsub.f32 %v1898, %v1899
    %v1901 = vand.u32 %v1900, 4294901760
    %1902 = vmatpush1.msra.mxu0 %v1901
    %1903 = vmatprep.subr.mxu0 0.0
    %1904 = vmatpush2.msra.mxu0 0.0
    %1905 = vmatprep.subr.mxu0 0.0
    %1906 = vmatpush2.msra.mxu0 0.0
    %1907 = vmatprep.subr.mxu0 0.0
    %1908 = vmatpush2.msra.mxu0 0.0
    %1909 = vmatprep.subr.mxu0 0.0
    %1910 = vmatpush2.msra.mxu0 0.0
    %1911 = vmatprep.subr.mxu0 0.0
    %1912 = vmatpush2.msra.mxu0 0.0
    %1913 = vmatprep.subr.mxu0 0.0
    %1914 = vmatpush2.msra.mxu0 0.0
    %1915 = vmatprep.subr.mxu0 0.0
    %1916 = vmatpush2.msra.mxu0 0.0
    %1917 = vmatprep.subr.mxu0 0.0
    %1918 = vmatpush2.msra.mxu0 0.0
    %1919 = vmatprep.subr.mxu0 0.0
    %1920 = vmatpush2.msra.mxu0 0.0
    %1921 = vmatprep.subr.mxu0 0.0
    %1922 = vmatpush2.msra.mxu0 0.0
    %1923 = vmatprep.subr.mxu0 0.0
    %1924 = vmatpush2.msra.mxu0 0.0
    %1925 = vmatprep.subr.mxu0 0.0
    %1926 = vmatpush2.msra.mxu0 0.0
    %1927 = vmatprep.subr.mxu0 0.0
    %1928 = vmatpush2.msra.mxu0 0.0
    %1929 = vmatprep.subr.mxu0 0.0
    %1930 = vmatpush2.msra.mxu0 0.0
    %1931 = vmatprep.subr.mxu0 0.0
    %1932 = vmatpush2.msra.mxu0 0.0
    %1933 = vmatprep.subr.mxu0 0.0
    %1934 = vmatpush2.msra.mxu0 0.0
    %1935 = vmatprep.mubr.f32.mxu0 0.0
    %v1936 = vand.u32 %v1746, 4294901760
    %1937 = vmatmul.mubr.f32.gmra.mxu0 %v1936
    %v1938 = vpop.f32.mrf.mxu0
    %v1939 = vadd.f32 %v1828, %v1938
    %v1940 = vpop.f32.mrf.mxu0
    %1941 = vdwg.mxu0
    %1942 = vmatprep.subr.mxu0 0.0
    %1943 = vmatpush1.msra.mxu0 0.0
    %1944 = vmatprep.subr.mxu0 0.0
    %1945 = vmatpush1.msra.mxu0 0.0
    %1946 = vmatprep.subr.mxu0 0.0
    %1947 = vmatpush1.msra.mxu0 0.0
    %1948 = vmatprep.subr.mxu0 0.0
    %1949 = vmatpush1.msra.mxu0 0.0
    %1950 = vmatprep.subr.mxu0 0.0
    %1951 = vmatpush1.msra.mxu0 0.0
    %1952 = vmatprep.subr.mxu0 0.0
    %1953 = vmatpush1.msra.mxu0 0.0
    %1954 = vmatprep.subr.mxu0 0.0
    %1955 = vmatpush1.msra.mxu0 0.0
    %1956 = vmatprep.subr.mxu0 0.0
    %1957 = vmatpush1.msra.mxu0 0.0
    %1958 = vmatprep.subr.mxu0 0.0
    %v1959 = vand.u32 %v37, 4294901760
    %v1960 = vsub.f32 %v37, %v1959
    %1961 = vmatpush1.msra.mxu0 %v1960
    %1962 = vmatprep.subr.mxu0 0.0
    %v1963 = vand.u32 %v36, 4294901760
    %v1964 = vsub.f32 %v36, %v1963
    %1965 = vmatpush1.msra.mxu0 %v1964
    %1966 = vmatprep.subr.mxu0 0.0
    %v1967 = vand.u32 %v35, 4294901760
    %v1968 = vsub.f32 %v35, %v1967
    %1969 = vmatpush1.msra.mxu0 %v1968
    %1970 = vmatprep.subr.mxu0 0.0
    %v1971 = vand.u32 %v34, 4294901760
    %v1972 = vsub.f32 %v34, %v1971
    %1973 = vmatpush1.msra.mxu0 %v1972
    %1974 = vmatprep.subr.mxu0 0.0
    %v1975 = vand.u32 %v33, 4294901760
    %v1976 = vsub.f32 %v33, %v1975
    %1977 = vmatpush1.msra.mxu0 %v1976
    %1978 = vmatprep.subr.mxu0 0.0
    %v1979 = vand.u32 %v32, 4294901760
    %v1980 = vsub.f32 %v32, %v1979
    %1981 = vmatpush1.msra.mxu0 %v1980
    %1982 = vmatprep.subr.mxu0 0.0
    %v1983 = vand.u32 %v31, 4294901760
    %v1984 = vsub.f32 %v31, %v1983
    %1985 = vmatpush1.msra.mxu0 %v1984
    %1986 = vmatprep.subr.mxu0 0.0
    %v1987 = vand.u32 %v30, 4294901760
    %v1988 = vsub.f32 %v30, %v1987
    %1989 = vmatpush1.msra.mxu0 %v1988
    %1990 = vmatprep.subr.mxu0 0.0
    %1991 = vmatpush2.msra.mxu0 0.0
    %1992 = vmatprep.subr.mxu0 0.0
    %1993 = vmatpush2.msra.mxu0 0.0
    %1994 = vmatprep.subr.mxu0 0.0
    %1995 = vmatpush2.msra.mxu0 0.0
    %1996 = vmatprep.subr.mxu0 0.0
    %1997 = vmatpush2.msra.mxu0 0.0
    %1998 = vmatprep.subr.mxu0 0.0
    %1999 = vmatpush2.msra.mxu0 0.0
    %2000 = vmatprep.subr.mxu0 0.0
    %2001 = vmatpush2.msra.mxu0 0.0
    %2002 = vmatprep.subr.mxu0 0.0
    %2003 = vmatpush2.msra.mxu0 0.0
    %2004 = vmatprep.subr.mxu0 0.0
    %2005 = vmatpush2.msra.mxu0 0.0
    %2006 = vmatprep.subr.mxu0 0.0
    %2007 = vmatpush2.msra.mxu0 0.0
    %2008 = vmatprep.subr.mxu0 0.0
    %2009 = vmatpush2.msra.mxu0 0.0
    %2010 = vmatprep.subr.mxu0 0.0
    %2011 = vmatpush2.msra.mxu0 0.0
    %2012 = vmatprep.subr.mxu0 0.0
    %2013 = vmatpush2.msra.mxu0 0.0
    %2014 = vmatprep.subr.mxu0 0.0
    %2015 = vmatpush2.msra.mxu0 0.0
    %2016 = vmatprep.subr.mxu0 0.0
    %2017 = vmatpush2.msra.mxu0 0.0
    %2018 = vmatprep.subr.mxu0 0.0
    %2019 = vmatpush2.msra.mxu0 0.0
    %2020 = vmatprep.subr.mxu0 0.0
    %2021 = vmatpush2.msra.mxu0 0.0
    %2022 = vmatprep.mubr.f32.mxu0 0.0
    %v2023 = vand.u32 %v1746, 4294901760
    %v2024 = vsub.f32 %v1746, %v2023
    %2025 = vmatmul.mubr.f32.gmra.mxu0 %v2024
    %v2026 = vpop.f32.mrf.mxu0
    %v2027 = vadd.f32 %v1939, %v2026
    %v2028 = vpop.f32.mrf.mxu0
    %2029 = vdwg.mxu0
    %2030 = vmatprep.subr.mxu0 0.0
    %2031 = vmatpush1.msra.mxu0 0.0
    %2032 = vmatprep.subr.mxu0 0.0
    %2033 = vmatpush1.msra.mxu0 0.0
    %2034 = vmatprep.subr.mxu0 0.0
    %2035 = vmatpush1.msra.mxu0 0.0
    %2036 = vmatprep.subr.mxu0 0.0
    %2037 = vmatpush1.msra.mxu0 0.0
    %2038 = vmatprep.subr.mxu0 0.0
    %2039 = vmatpush1.msra.mxu0 0.0
    %2040 = vmatprep.subr.mxu0 0.0
    %2041 = vmatpush1.msra.mxu0 0.0
    %2042 = vmatprep.subr.mxu0 0.0
    %2043 = vmatpush1.msra.mxu0 0.0
    %2044 = vmatprep.subr.mxu0 0.0
    %2045 = vmatpush1.msra.mxu0 0.0
    %2046 = vmatprep.subr.mxu0 0.0
    %v2047 = vand.u32 %v37, 4294901760
    %2048 = vmatpush1.msra.mxu0 %v2047
    %2049 = vmatprep.subr.mxu0 0.0
    %v2050 = vand.u32 %v36, 4294901760
    %2051 = vmatpush1.msra.mxu0 %v2050
    %2052 = vmatprep.subr.mxu0 0.0
    %v2053 = vand.u32 %v35, 4294901760
    %2054 = vmatpush1.msra.mxu0 %v2053
    %2055 = vmatprep.subr.mxu0 0.0
    %v2056 = vand.u32 %v34, 4294901760
    %2057 = vmatpush1.msra.mxu0 %v2056
    %2058 = vmatprep.subr.mxu0 0.0
    %v2059 = vand.u32 %v33, 4294901760
    %2060 = vmatpush1.msra.mxu0 %v2059
    %2061 = vmatprep.subr.mxu0 0.0
    %v2062 = vand.u32 %v32, 4294901760
    %2063 = vmatpush1.msra.mxu0 %v2062
    %2064 = vmatprep.subr.mxu0 0.0
    %v2065 = vand.u32 %v31, 4294901760
    %2066 = vmatpush1.msra.mxu0 %v2065
    %2067 = vmatprep.subr.mxu0 0.0
    %v2068 = vand.u32 %v30, 4294901760
    %2069 = vmatpush1.msra.mxu0 %v2068
    %2070 = vmatprep.subr.mxu0 0.0
    %2071 = vmatpush2.msra.mxu0 0.0
    %2072 = vmatprep.subr.mxu0 0.0
    %2073 = vmatpush2.msra.mxu0 0.0
    %2074 = vmatprep.subr.mxu0 0.0
    %2075 = vmatpush2.msra.mxu0 0.0
    %2076 = vmatprep.subr.mxu0 0.0
    %2077 = vmatpush2.msra.mxu0 0.0
    %2078 = vmatprep.subr.mxu0 0.0
    %2079 = vmatpush2.msra.mxu0 0.0
    %2080 = vmatprep.subr.mxu0 0.0
    %2081 = vmatpush2.msra.mxu0 0.0
    %2082 = vmatprep.subr.mxu0 0.0
    %2083 = vmatpush2.msra.mxu0 0.0
    %2084 = vmatprep.subr.mxu0 0.0
    %2085 = vmatpush2.msra.mxu0 0.0
    %2086 = vmatprep.subr.mxu0 0.0
    %2087 = vmatpush2.msra.mxu0 0.0
    %2088 = vmatprep.subr.mxu0 0.0
    %2089 = vmatpush2.msra.mxu0 0.0
    %2090 = vmatprep.subr.mxu0 0.0
    %2091 = vmatpush2.msra.mxu0 0.0
    %2092 = vmatprep.subr.mxu0 0.0
    %2093 = vmatpush2.msra.mxu0 0.0
    %2094 = vmatprep.subr.mxu0 0.0
    %2095 = vmatpush2.msra.mxu0 0.0
    %2096 = vmatprep.subr.mxu0 0.0
    %2097 = vmatpush2.msra.mxu0 0.0
    %2098 = vmatprep.subr.mxu0 0.0
    %2099 = vmatpush2.msra.mxu0 0.0
    %2100 = vmatprep.subr.mxu0 0.0
    %2101 = vmatpush2.msra.mxu0 0.0
    %2102 = vmatprep.mubr.f32.mxu0 0.0
    %v2103 = vand.u32 %v1746, 4294901760
    %v2104 = vsub.f32 %v1746, %v2103
    %v2105 = vand.u32 %v2104, 4294901760
    %2106 = vmatmul.mubr.f32.gmra.mxu0 %v2105
    %v2107 = vpop.f32.mrf.mxu0
    %v2108 = vadd.f32 %v2027, %v2107
    %v2109 = vpop.f32.mrf.mxu0
    %2110 = vdwg.mxu0
    %2111 = vmatprep.subr.mxu0 0.0
    %2112 = vmatpush1.msra.mxu0 0.0
    %2113 = vmatprep.subr.mxu0 0.0
    %2114 = vmatpush1.msra.mxu0 0.0
    %2115 = vmatprep.subr.mxu0 0.0
    %2116 = vmatpush1.msra.mxu0 0.0
    %2117 = vmatprep.subr.mxu0 0.0
    %2118 = vmatpush1.msra.mxu0 0.0
    %2119 = vmatprep.subr.mxu0 0.0
    %2120 = vmatpush1.msra.mxu0 0.0
    %2121 = vmatprep.subr.mxu0 0.0
    %2122 = vmatpush1.msra.mxu0 0.0
    %2123 = vmatprep.subr.mxu0 0.0
    %2124 = vmatpush1.msra.mxu0 0.0
    %2125 = vmatprep.subr.mxu0 0.0
    %2126 = vmatpush1.msra.mxu0 0.0
    %2127 = vmatprep.subr.mxu0 0.0
    %v2128 = vand.u32 %v37, 4294901760
    %v2129 = vsub.f32 %v37, %v2128
    %v2130 = vand.u32 %v2129, 4294901760
    %2131 = vmatpush1.msra.mxu0 %v2130
    %2132 = vmatprep.subr.mxu0 0.0
    %v2133 = vand.u32 %v36, 4294901760
    %v2134 = vsub.f32 %v36, %v2133
    %v2135 = vand.u32 %v2134, 4294901760
    %2136 = vmatpush1.msra.mxu0 %v2135
    %2137 = vmatprep.subr.mxu0 0.0
    %v2138 = vand.u32 %v35, 4294901760
    %v2139 = vsub.f32 %v35, %v2138
    %v2140 = vand.u32 %v2139, 4294901760
    %2141 = vmatpush1.msra.mxu0 %v2140
    %2142 = vmatprep.subr.mxu0 0.0
    %v2143 = vand.u32 %v34, 4294901760
    %v2144 = vsub.f32 %v34, %v2143
    %v2145 = vand.u32 %v2144, 4294901760
    %2146 = vmatpush1.msra.mxu0 %v2145
    %2147 = vmatprep.subr.mxu0 0.0
    %v2148 = vand.u32 %v33, 4294901760
    %v2149 = vsub.f32 %v33, %v2148
    %v2150 = vand.u32 %v2149, 4294901760
    %2151 = vmatpush1.msra.mxu0 %v2150
    %2152 = vmatprep.subr.mxu0 0.0
    %v2153 = vand.u32 %v32, 4294901760
    %v2154 = vsub.f32 %v32, %v2153
    %v2155 = vand.u32 %v2154, 4294901760
    %2156 = vmatpush1.msra.mxu0 %v2155
    %2157 = vmatprep.subr.mxu0 0.0
    %v2158 = vand.u32 %v31, 4294901760
    %v2159 = vsub.f32 %v31, %v2158
    %v2160 = vand.u32 %v2159, 4294901760
    %2161 = vmatpush1.msra.mxu0 %v2160
    %2162 = vmatprep.subr.mxu0 0.0
    %v2163 = vand.u32 %v30, 4294901760
    %v2164 = vsub.f32 %v30, %v2163
    %v2165 = vand.u32 %v2164, 4294901760
    %2166 = vmatpush1.msra.mxu0 %v2165
    %2167 = vmatprep.subr.mxu0 0.0
    %2168 = vmatpush2.msra.mxu0 0.0
    %2169 = vmatprep.subr.mxu0 0.0
    %2170 = vmatpush2.msra.mxu0 0.0
    %2171 = vmatprep.subr.mxu0 0.0
    %2172 = vmatpush2.msra.mxu0 0.0
    %2173 = vmatprep.subr.mxu0 0.0
    %2174 = vmatpush2.msra.mxu0 0.0
    %2175 = vmatprep.subr.mxu0 0.0
    %2176 = vmatpush2.msra.mxu0 0.0
    %2177 = vmatprep.subr.mxu0 0.0
    %2178 = vmatpush2.msra.mxu0 0.0
    %2179 = vmatprep.subr.mxu0 0.0
    %2180 = vmatpush2.msra.mxu0 0.0
    %2181 = vmatprep.subr.mxu0 0.0
    %2182 = vmatpush2.msra.mxu0 0.0
    %2183 = vmatprep.subr.mxu0 0.0
    %2184 = vmatpush2.msra.mxu0 0.0
    %2185 = vmatprep.subr.mxu0 0.0
    %2186 = vmatpush2.msra.mxu0 0.0
    %2187 = vmatprep.subr.mxu0 0.0
    %2188 = vmatpush2.msra.mxu0 0.0
    %2189 = vmatprep.subr.mxu0 0.0
    %2190 = vmatpush2.msra.mxu0 0.0
    %2191 = vmatprep.subr.mxu0 0.0
    %2192 = vmatpush2.msra.mxu0 0.0
    %2193 = vmatprep.subr.mxu0 0.0
    %2194 = vmatpush2.msra.mxu0 0.0
    %2195 = vmatprep.subr.mxu0 0.0
    %2196 = vmatpush2.msra.mxu0 0.0
    %2197 = vmatprep.subr.mxu0 0.0
    %2198 = vmatpush2.msra.mxu0 0.0
    %2199 = vmatprep.mubr.f32.mxu0 0.0
    %v2200 = vand.u32 %v1746, 4294901760
    %2201 = vmatmul.mubr.f32.gmra.mxu0 %v2200
    %v2202 = vpop.f32.mrf.mxu0
    %v2203 = vadd.f32 %v2108, %v2202
    %v2204 = vpop.f32.mrf.mxu0
    %2205 = vdwg.mxu0
    %2206 = vmatprep.subr.mxu0 0.0
    %2207 = vmatpush1.msra.mxu0 0.0
    %2208 = vmatprep.subr.mxu0 0.0
    %2209 = vmatpush1.msra.mxu0 0.0
    %2210 = vmatprep.subr.mxu0 0.0
    %2211 = vmatpush1.msra.mxu0 0.0
    %2212 = vmatprep.subr.mxu0 0.0
    %2213 = vmatpush1.msra.mxu0 0.0
    %2214 = vmatprep.subr.mxu0 0.0
    %2215 = vmatpush1.msra.mxu0 0.0
    %2216 = vmatprep.subr.mxu0 0.0
    %2217 = vmatpush1.msra.mxu0 0.0
    %2218 = vmatprep.subr.mxu0 0.0
    %2219 = vmatpush1.msra.mxu0 0.0
    %2220 = vmatprep.subr.mxu0 0.0
    %2221 = vmatpush1.msra.mxu0 0.0
    %2222 = vmatprep.subr.mxu0 0.0
    %v2223 = vand.u32 %v37, 4294901760
    %2224 = vmatpush1.msra.mxu0 %v2223
    %2225 = vmatprep.subr.mxu0 0.0
    %v2226 = vand.u32 %v36, 4294901760
    %2227 = vmatpush1.msra.mxu0 %v2226
    %2228 = vmatprep.subr.mxu0 0.0
    %v2229 = vand.u32 %v35, 4294901760
    %2230 = vmatpush1.msra.mxu0 %v2229
    %2231 = vmatprep.subr.mxu0 0.0
    %v2232 = vand.u32 %v34, 4294901760
    %2233 = vmatpush1.msra.mxu0 %v2232
    %2234 = vmatprep.subr.mxu0 0.0
    %v2235 = vand.u32 %v33, 4294901760
    %2236 = vmatpush1.msra.mxu0 %v2235
    %2237 = vmatprep.subr.mxu0 0.0
    %v2238 = vand.u32 %v32, 4294901760
    %2239 = vmatpush1.msra.mxu0 %v2238
    %2240 = vmatprep.subr.mxu0 0.0
    %v2241 = vand.u32 %v31, 4294901760
    %2242 = vmatpush1.msra.mxu0 %v2241
    %2243 = vmatprep.subr.mxu0 0.0
    %v2244 = vand.u32 %v30, 4294901760
    %2245 = vmatpush1.msra.mxu0 %v2244
    %2246 = vmatprep.subr.mxu0 0.0
    %2247 = vmatpush2.msra.mxu0 0.0
    %2248 = vmatprep.subr.mxu0 0.0
    %2249 = vmatpush2.msra.mxu0 0.0
    %2250 = vmatprep.subr.mxu0 0.0
    %2251 = vmatpush2.msra.mxu0 0.0
    %2252 = vmatprep.subr.mxu0 0.0
    %2253 = vmatpush2.msra.mxu0 0.0
    %2254 = vmatprep.subr.mxu0 0.0
    %2255 = vmatpush2.msra.mxu0 0.0
    %2256 = vmatprep.subr.mxu0 0.0
    %2257 = vmatpush2.msra.mxu0 0.0
    %2258 = vmatprep.subr.mxu0 0.0
    %2259 = vmatpush2.msra.mxu0 0.0
    %2260 = vmatprep.subr.mxu0 0.0
    %2261 = vmatpush2.msra.mxu0 0.0
    %2262 = vmatprep.subr.mxu0 0.0
    %2263 = vmatpush2.msra.mxu0 0.0
    %2264 = vmatprep.subr.mxu0 0.0
    %2265 = vmatpush2.msra.mxu0 0.0
    %2266 = vmatprep.subr.mxu0 0.0
    %2267 = vmatpush2.msra.mxu0 0.0
    %2268 = vmatprep.subr.mxu0 0.0
    %2269 = vmatpush2.msra.mxu0 0.0
    %2270 = vmatprep.subr.mxu0 0.0
    %2271 = vmatpush2.msra.mxu0 0.0
    %2272 = vmatprep.subr.mxu0 0.0
    %2273 = vmatpush2.msra.mxu0 0.0
    %2274 = vmatprep.subr.mxu0 0.0
    %2275 = vmatpush2.msra.mxu0 0.0
    %2276 = vmatprep.subr.mxu0 0.0
    %2277 = vmatpush2.msra.mxu0 0.0
    %2278 = vmatprep.mubr.f32.mxu0 0.0
    %v2279 = vand.u32 %v1746, 4294901760
    %2280 = vmatmul.mubr.f32.gmra.mxu0 %v2279
    %v2281 = vpop.f32.mrf.mxu0
    %v2282 = vadd.f32 %v2203, %v2281
    %v2283 = vpop.f32.mrf.mxu0
    %2284 = vdwg.mxu0
    %v2285 = vld [vmem:[%s1] sm:$0x3]
    %2287 = vset.pattern.permute.xlu0 3
    %2288 = vperm.xlu0 %2287, %v2285
    %v2289 = vpop.permute.xlu0 %2288
    %v2291 = vmul.f32 %v2282, %v2289
    %v2294 = vunpack.c.l.s4 1983009808
    %v2295 = vunpack.c.0.s8 %v2294
    %v2296 = vlaneseq
    %v2297 = vshrl.u32 %v2296, 7
    %v2298 = vsub.s32 %v2295, %v2297
    %v2299 = vrot.slane %v2291, %v2298
    %2300 = vrot.lane.b32.xlu0 %v2299, 96
    %v2301 = vpop.permute.xlu0 %2300
    %vm2303 = vcmask 1042176
    %2304 = vst.msk [vmem:[#allocation4] sm:$0x3] %vm2303, %v2301
    %v2305 = vld [vmem:[%s0] sm:$0x3]
    %2306 = vset.pattern.permute.xlu0 4
    %2307 = vperm.xlu0 %2306, %v2305
    %v2308 = vpop.permute.xlu0 %2307
    %vm2309 = vcmp.eq.s32.totalorder %v40, %v2308
    %v2310 = vsel %vm2309, 1, 0
    %v2311 = vcvt.s32.f32 %v2310
    %v2313 = vsel %vm54, %v2311, 0
    %2315 = vmatprep.subr.mxu0 0.0
    %2316 = vmatpush1.msra.mxu0 0.0
    %2317 = vmatprep.subr.mxu0 0.0
    %2318 = vmatpush1.msra.mxu0 0.0
    %2319 = vmatprep.subr.mxu0 0.0
    %2320 = vmatpush1.msra.mxu0 0.0
    %2321 = vmatprep.subr.mxu0 0.0
    %2322 = vmatpush1.msra.mxu0 0.0
    %2323 = vmatprep.subr.mxu0 0.0
    %2324 = vmatpush1.msra.mxu0 0.0
    %2325 = vmatprep.subr.mxu0 0.0
    %2326 = vmatpush1.msra.mxu0 0.0
    %2327 = vmatprep.subr.mxu0 0.0
    %2328 = vmatpush1.msra.mxu0 0.0
    %2329 = vmatprep.subr.mxu0 0.0
    %2330 = vmatpush1.msra.mxu0 0.0
    %2331 = vmatprep.subr.mxu0 0.0
    %v2332 = vand.u32 %v37, 4294901760
    %2333 = vmatpush1.msra.mxu0 %v2332
    %2334 = vmatprep.subr.mxu0 0.0
    %v2335 = vand.u32 %v36, 4294901760
    %2336 = vmatpush1.msra.mxu0 %v2335
    %2337 = vmatprep.subr.mxu0 0.0
    %v2338 = vand.u32 %v35, 4294901760
    %2339 = vmatpush1.msra.mxu0 %v2338
    %2340 = vmatprep.subr.mxu0 0.0
    %v2341 = vand.u32 %v34, 4294901760
    %2342 = vmatpush1.msra.mxu0 %v2341
    %2343 = vmatprep.subr.mxu0 0.0
    %v2344 = vand.u32 %v33, 4294901760
    %2345 = vmatpush1.msra.mxu0 %v2344
    %2346 = vmatprep.subr.mxu0 0.0
    %v2347 = vand.u32 %v32, 4294901760
    %2348 = vmatpush1.msra.mxu0 %v2347
    %2349 = vmatprep.subr.mxu0 0.0
    %v2350 = vand.u32 %v31, 4294901760
    %2351 = vmatpush1.msra.mxu0 %v2350
    %2352 = vmatprep.subr.mxu0 0.0
    %v2353 = vand.u32 %v30, 4294901760
    %2354 = vmatpush1.msra.mxu0 %v2353
    %2355 = vmatprep.subr.mxu0 0.0
    %2356 = vmatpush2.msra.mxu0 0.0
    %2357 = vmatprep.subr.mxu0 0.0
    %2358 = vmatpush2.msra.mxu0 0.0
    %2359 = vmatprep.subr.mxu0 0.0
    %2360 = vmatpush2.msra.mxu0 0.0
    %2361 = vmatprep.subr.mxu0 0.0
    %2362 = vmatpush2.msra.mxu0 0.0
    %2363 = vmatprep.subr.mxu0 0.0
    %2364 = vmatpush2.msra.mxu0 0.0
    %2365 = vmatprep.subr.mxu0 0.0
    %2366 = vmatpush2.msra.mxu0 0.0
    %2367 = vmatprep.subr.mxu0 0.0
    %2368 = vmatpush2.msra.mxu0 0.0
    %2369 = vmatprep.subr.mxu0 0.0
    %2370 = vmatpush2.msra.mxu0 0.0
    %2371 = vmatprep.subr.mxu0 0.0
    %2372 = vmatpush2.msra.mxu0 0.0
    %2373 = vmatprep.subr.mxu0 0.0
    %2374 = vmatpush2.msra.mxu0 0.0
    %2375 = vmatprep.subr.mxu0 0.0
    %2376 = vmatpush2.msra.mxu0 0.0
    %2377 = vmatprep.subr.mxu0 0.0
    %2378 = vmatpush2.msra.mxu0 0.0
    %2379 = vmatprep.subr.mxu0 0.0
    %2380 = vmatpush2.msra.mxu0 0.0
    %2381 = vmatprep.subr.mxu0 0.0
    %2382 = vmatpush2.msra.mxu0 0.0
    %2383 = vmatprep.subr.mxu0 0.0
    %2384 = vmatpush2.msra.mxu0 0.0
    %2385 = vmatprep.subr.mxu0 0.0
    %2386 = vmatpush2.msra.mxu0 0.0
    %2387 = vmatprep.mubr.f32.mxu0 0.0
    %v2388 = vand.u32 %v2313, 4294901760
    %v2389 = vsub.f32 %v2313, %v2388
    %v2390 = vand.u32 %v2389, 4294901760
    %v2391 = vsub.f32 %v2389, %v2390
    %v2392 = vand.u32 %v2391, 4294901760
    %2393 = vmatmul.mubr.f32.gmra.mxu0 %v2392
    %v2394 = vpop.f32.mrf.mxu0
    %v2395 = vadd.f32 %v52, %v2394
    %v2396 = vpop.f32.mrf.mxu0
    %2397 = vdwg.mxu0
    %2398 = vmatprep.subr.mxu0 0.0
    %2399 = vmatpush1.msra.mxu0 0.0
    %2400 = vmatprep.subr.mxu0 0.0
    %2401 = vmatpush1.msra.mxu0 0.0
    %2402 = vmatprep.subr.mxu0 0.0
    %2403 = vmatpush1.msra.mxu0 0.0
    %2404 = vmatprep.subr.mxu0 0.0
    %2405 = vmatpush1.msra.mxu0 0.0
    %2406 = vmatprep.subr.mxu0 0.0
    %2407 = vmatpush1.msra.mxu0 0.0
    %2408 = vmatprep.subr.mxu0 0.0
    %2409 = vmatpush1.msra.mxu0 0.0
    %2410 = vmatprep.subr.mxu0 0.0
    %2411 = vmatpush1.msra.mxu0 0.0
    %2412 = vmatprep.subr.mxu0 0.0
    %2413 = vmatpush1.msra.mxu0 0.0
    %2414 = vmatprep.subr.mxu0 0.0
    %v2415 = vand.u32 %v37, 4294901760
    %v2416 = vsub.f32 %v37, %v2415
    %v2417 = vand.u32 %v2416, 4294901760
    %v2418 = vsub.f32 %v2416, %v2417
    %v2419 = vand.u32 %v2418, 4294901760
    %2420 = vmatpush1.msra.mxu0 %v2419
    %2421 = vmatprep.subr.mxu0 0.0
    %v2422 = vand.u32 %v36, 4294901760
    %v2423 = vsub.f32 %v36, %v2422
    %v2424 = vand.u32 %v2423, 4294901760
    %v2425 = vsub.f32 %v2423, %v2424
    %v2426 = vand.u32 %v2425, 4294901760
    %2427 = vmatpush1.msra.mxu0 %v2426
    %2428 = vmatprep.subr.mxu0 0.0
    %v2429 = vand.u32 %v35, 4294901760
    %v2430 = vsub.f32 %v35, %v2429
    %v2431 = vand.u32 %v2430, 4294901760
    %v2432 = vsub.f32 %v2430, %v2431
    %v2433 = vand.u32 %v2432, 4294901760
    %2434 = vmatpush1.msra.mxu0 %v2433
    %2435 = vmatprep.subr.mxu0 0.0
    %v2436 = vand.u32 %v34, 4294901760
    %v2437 = vsub.f32 %v34, %v2436
    %v2438 = vand.u32 %v2437, 4294901760
    %v2439 = vsub.f32 %v2437, %v2438
    %v2440 = vand.u32 %v2439, 4294901760
    %2441 = vmatpush1.msra.mxu0 %v2440
    %2442 = vmatprep.subr.mxu0 0.0
    %v2443 = vand.u32 %v33, 4294901760
    %v2444 = vsub.f32 %v33, %v2443
    %v2445 = vand.u32 %v2444, 4294901760
    %v2446 = vsub.f32 %v2444, %v2445
    %v2447 = vand.u32 %v2446, 4294901760
    %2448 = vmatpush1.msra.mxu0 %v2447
    %2449 = vmatprep.subr.mxu0 0.0
    %v2450 = vand.u32 %v32, 4294901760
    %v2451 = vsub.f32 %v32, %v2450
    %v2452 = vand.u32 %v2451, 4294901760
    %v2453 = vsub.f32 %v2451, %v2452
    %v2454 = vand.u32 %v2453, 4294901760
    %2455 = vmatpush1.msra.mxu0 %v2454
    %2456 = vmatprep.subr.mxu0 0.0
    %v2457 = vand.u32 %v31, 4294901760
    %v2458 = vsub.f32 %v31, %v2457
    %v2459 = vand.u32 %v2458, 4294901760
    %v2460 = vsub.f32 %v2458, %v2459
    %v2461 = vand.u32 %v2460, 4294901760
    %2462 = vmatpush1.msra.mxu0 %v2461
    %2463 = vmatprep.subr.mxu0 0.0
    %v2464 = vand.u32 %v30, 4294901760
    %v2465 = vsub.f32 %v30, %v2464
    %v2466 = vand.u32 %v2465, 4294901760
    %v2467 = vsub.f32 %v2465, %v2466
    %v2468 = vand.u32 %v2467, 4294901760
    %2469 = vmatpush1.msra.mxu0 %v2468
    %2470 = vmatprep.subr.mxu0 0.0
    %2471 = vmatpush2.msra.mxu0 0.0
    %2472 = vmatprep.subr.mxu0 0.0
    %2473 = vmatpush2.msra.mxu0 0.0
    %2474 = vmatprep.subr.mxu0 0.0
    %2475 = vmatpush2.msra.mxu0 0.0
    %2476 = vmatprep.subr.mxu0 0.0
    %2477 = vmatpush2.msra.mxu0 0.0
    %2478 = vmatprep.subr.mxu0 0.0
    %2479 = vmatpush2.msra.mxu0 0.0
    %2480 = vmatprep.subr.mxu0 0.0
    %2481 = vmatpush2.msra.mxu0 0.0
    %2482 = vmatprep.subr.mxu0 0.0
    %2483 = vmatpush2.msra.mxu0 0.0
    %2484 = vmatprep.subr.mxu0 0.0
    %2485 = vmatpush2.msra.mxu0 0.0
    %2486 = vmatprep.subr.mxu0 0.0
    %2487 = vmatpush2.msra.mxu0 0.0
    %2488 = vmatprep.subr.mxu0 0.0
    %2489 = vmatpush2.msra.mxu0 0.0
    %2490 = vmatprep.subr.mxu0 0.0
    %2491 = vmatpush2.msra.mxu0 0.0
    %2492 = vmatprep.subr.mxu0 0.0
    %2493 = vmatpush2.msra.mxu0 0.0
    %2494 = vmatprep.subr.mxu0 0.0
    %2495 = vmatpush2.msra.mxu0 0.0
    %2496 = vmatprep.subr.mxu0 0.0
    %2497 = vmatpush2.msra.mxu0 0.0
    %2498 = vmatprep.subr.mxu0 0.0
    %2499 = vmatpush2.msra.mxu0 0.0
    %2500 = vmatprep.subr.mxu0 0.0
    %2501 = vmatpush2.msra.mxu0 0.0
    %2502 = vmatprep.mubr.f32.mxu0 0.0
    %v2503 = vand.u32 %v2313, 4294901760
    %2504 = vmatmul.mubr.f32.gmra.mxu0 %v2503
    %v2505 = vpop.f32.mrf.mxu0
    %v2506 = vadd.f32 %v2395, %v2505
    %v2507 = vpop.f32.mrf.mxu0
    %2508 = vdwg.mxu0
    %2509 = vmatprep.subr.mxu0 0.0
    %2510 = vmatpush1.msra.mxu0 0.0
    %2511 = vmatprep.subr.mxu0 0.0
    %2512 = vmatpush1.msra.mxu0 0.0
    %2513 = vmatprep.subr.mxu0 0.0
    %2514 = vmatpush1.msra.mxu0 0.0
    %2515 = vmatprep.subr.mxu0 0.0
    %2516 = vmatpush1.msra.mxu0 0.0
    %2517 = vmatprep.subr.mxu0 0.0
    %2518 = vmatpush1.msra.mxu0 0.0
    %2519 = vmatprep.subr.mxu0 0.0
    %2520 = vmatpush1.msra.mxu0 0.0
    %2521 = vmatprep.subr.mxu0 0.0
    %2522 = vmatpush1.msra.mxu0 0.0
    %2523 = vmatprep.subr.mxu0 0.0
    %2524 = vmatpush1.msra.mxu0 0.0
    %2525 = vmatprep.subr.mxu0 0.0
    %v2526 = vand.u32 %v37, 4294901760
    %v2527 = vsub.f32 %v37, %v2526
    %2528 = vmatpush1.msra.mxu0 %v2527
    %2529 = vmatprep.subr.mxu0 0.0
    %v2530 = vand.u32 %v36, 4294901760
    %v2531 = vsub.f32 %v36, %v2530
    %2532 = vmatpush1.msra.mxu0 %v2531
    %2533 = vmatprep.subr.mxu0 0.0
    %v2534 = vand.u32 %v35, 4294901760
    %v2535 = vsub.f32 %v35, %v2534
    %2536 = vmatpush1.msra.mxu0 %v2535
    %2537 = vmatprep.subr.mxu0 0.0
    %v2538 = vand.u32 %v34, 4294901760
    %v2539 = vsub.f32 %v34, %v2538
    %2540 = vmatpush1.msra.mxu0 %v2539
    %2541 = vmatprep.subr.mxu0 0.0
    %v2542 = vand.u32 %v33, 4294901760
    %v2543 = vsub.f32 %v33, %v2542
    %2544 = vmatpush1.msra.mxu0 %v2543
    %2545 = vmatprep.subr.mxu0 0.0
    %v2546 = vand.u32 %v32, 4294901760
    %v2547 = vsub.f32 %v32, %v2546
    %2548 = vmatpush1.msra.mxu0 %v2547
    %2549 = vmatprep.subr.mxu0 0.0
    %v2550 = vand.u32 %v31, 4294901760
    %v2551 = vsub.f32 %v31, %v2550
    %2552 = vmatpush1.msra.mxu0 %v2551
    %2553 = vmatprep.subr.mxu0 0.0
    %v2554 = vand.u32 %v30, 4294901760
    %v2555 = vsub.f32 %v30, %v2554
    %2556 = vmatpush1.msra.mxu0 %v2555
    %2557 = vmatprep.subr.mxu0 0.0
    %2558 = vmatpush2.msra.mxu0 0.0
    %2559 = vmatprep.subr.mxu0 0.0
    %2560 = vmatpush2.msra.mxu0 0.0
    %2561 = vmatprep.subr.mxu0 0.0
    %2562 = vmatpush2.msra.mxu0 0.0
    %2563 = vmatprep.subr.mxu0 0.0
    %2564 = vmatpush2.msra.mxu0 0.0
    %2565 = vmatprep.subr.mxu0 0.0
    %2566 = vmatpush2.msra.mxu0 0.0
    %2567 = vmatprep.subr.mxu0 0.0
    %2568 = vmatpush2.msra.mxu0 0.0
    %2569 = vmatprep.subr.mxu0 0.0
    %2570 = vmatpush2.msra.mxu0 0.0
    %2571 = vmatprep.subr.mxu0 0.0
    %2572 = vmatpush2.msra.mxu0 0.0
    %2573 = vmatprep.subr.mxu0 0.0
    %2574 = vmatpush2.msra.mxu0 0.0
    %2575 = vmatprep.subr.mxu0 0.0
    %2576 = vmatpush2.msra.mxu0 0.0
    %2577 = vmatprep.subr.mxu0 0.0
    %2578 = vmatpush2.msra.mxu0 0.0
    %2579 = vmatprep.subr.mxu0 0.0
    %2580 = vmatpush2.msra.mxu0 0.0
    %2581 = vmatprep.subr.mxu0 0.0
    %2582 = vmatpush2.msra.mxu0 0.0
    %2583 = vmatprep.subr.mxu0 0.0
    %2584 = vmatpush2.msra.mxu0 0.0
    %2585 = vmatprep.subr.mxu0 0.0
    %2586 = vmatpush2.msra.mxu0 0.0
    %2587 = vmatprep.subr.mxu0 0.0
    %2588 = vmatpush2.msra.mxu0 0.0
    %2589 = vmatprep.mubr.f32.mxu0 0.0
    %v2590 = vand.u32 %v2313, 4294901760
    %v2591 = vsub.f32 %v2313, %v2590
    %2592 = vmatmul.mubr.f32.gmra.mxu0 %v2591
    %v2593 = vpop.f32.mrf.mxu0
    %v2594 = vadd.f32 %v2506, %v2593
    %v2595 = vpop.f32.mrf.mxu0
    %2596 = vdwg.mxu0
    %2597 = vmatprep.subr.mxu0 0.0
    %2598 = vmatpush1.msra.mxu0 0.0
    %2599 = vmatprep.subr.mxu0 0.0
    %2600 = vmatpush1.msra.mxu0 0.0
    %2601 = vmatprep.subr.mxu0 0.0
    %2602 = vmatpush1.msra.mxu0 0.0
    %2603 = vmatprep.subr.mxu0 0.0
    %2604 = vmatpush1.msra.mxu0 0.0
    %2605 = vmatprep.subr.mxu0 0.0
    %2606 = vmatpush1.msra.mxu0 0.0
    %2607 = vmatprep.subr.mxu0 0.0
    %2608 = vmatpush1.msra.mxu0 0.0
    %2609 = vmatprep.subr.mxu0 0.0
    %2610 = vmatpush1.msra.mxu0 0.0
    %2611 = vmatprep.subr.mxu0 0.0
    %2612 = vmatpush1.msra.mxu0 0.0
    %2613 = vmatprep.subr.mxu0 0.0
    %v2614 = vand.u32 %v37, 4294901760
    %2615 = vmatpush1.msra.mxu0 %v2614
    %2616 = vmatprep.subr.mxu0 0.0
    %v2617 = vand.u32 %v36, 4294901760
    %2618 = vmatpush1.msra.mxu0 %v2617
    %2619 = vmatprep.subr.mxu0 0.0
    %v2620 = vand.u32 %v35, 4294901760
    %2621 = vmatpush1.msra.mxu0 %v2620
    %2622 = vmatprep.subr.mxu0 0.0
    %v2623 = vand.u32 %v34, 4294901760
    %2624 = vmatpush1.msra.mxu0 %v2623
    %2625 = vmatprep.subr.mxu0 0.0
    %v2626 = vand.u32 %v33, 4294901760
    %2627 = vmatpush1.msra.mxu0 %v2626
    %2628 = vmatprep.subr.mxu0 0.0
    %v2629 = vand.u32 %v32, 4294901760
    %2630 = vmatpush1.msra.mxu0 %v2629
    %2631 = vmatprep.subr.mxu0 0.0
    %v2632 = vand.u32 %v31, 4294901760
    %2633 = vmatpush1.msra.mxu0 %v2632
    %2634 = vmatprep.subr.mxu0 0.0
    %v2635 = vand.u32 %v30, 4294901760
    %2636 = vmatpush1.msra.mxu0 %v2635
    %2637 = vmatprep.subr.mxu0 0.0
    %2638 = vmatpush2.msra.mxu0 0.0
    %2639 = vmatprep.subr.mxu0 0.0
    %2640 = vmatpush2.msra.mxu0 0.0
    %2641 = vmatprep.subr.mxu0 0.0
    %2642 = vmatpush2.msra.mxu0 0.0
    %2643 = vmatprep.subr.mxu0 0.0
    %2644 = vmatpush2.msra.mxu0 0.0
    %2645 = vmatprep.subr.mxu0 0.0
    %2646 = vmatpush2.msra.mxu0 0.0
    %2647 = vmatprep.subr.mxu0 0.0
    %2648 = vmatpush2.msra.mxu0 0.0
    %2649 = vmatprep.subr.mxu0 0.0
    %2650 = vmatpush2.msra.mxu0 0.0
    %2651 = vmatprep.subr.mxu0 0.0
    %2652 = vmatpush2.msra.mxu0 0.0
    %2653 = vmatprep.subr.mxu0 0.0
    %2654 = vmatpush2.msra.mxu0 0.0
    %2655 = vmatprep.subr.mxu0 0.0
    %2656 = vmatpush2.msra.mxu0 0.0
    %2657 = vmatprep.subr.mxu0 0.0
    %2658 = vmatpush2.msra.mxu0 0.0
    %2659 = vmatprep.subr.mxu0 0.0
    %2660 = vmatpush2.msra.mxu0 0.0
    %2661 = vmatprep.subr.mxu0 0.0
    %2662 = vmatpush2.msra.mxu0 0.0
    %2663 = vmatprep.subr.mxu0 0.0
    %2664 = vmatpush2.msra.mxu0 0.0
    %2665 = vmatprep.subr.mxu0 0.0
    %2666 = vmatpush2.msra.mxu0 0.0
    %2667 = vmatprep.subr.mxu0 0.0
    %2668 = vmatpush2.msra.mxu0 0.0
    %2669 = vmatprep.mubr.f32.mxu0 0.0
    %v2670 = vand.u32 %v2313, 4294901760
    %v2671 = vsub.f32 %v2313, %v2670
    %v2672 = vand.u32 %v2671, 4294901760
    %2673 = vmatmul.mubr.f32.gmra.mxu0 %v2672
    %v2674 = vpop.f32.mrf.mxu0
    %v2675 = vadd.f32 %v2594, %v2674
    %v2676 = vpop.f32.mrf.mxu0
    %2677 = vdwg.mxu0
    %2678 = vmatprep.subr.mxu0 0.0
    %2679 = vmatpush1.msra.mxu0 0.0
    %2680 = vmatprep.subr.mxu0 0.0
    %2681 = vmatpush1.msra.mxu0 0.0
    %2682 = vmatprep.subr.mxu0 0.0
    %2683 = vmatpush1.msra.mxu0 0.0
    %2684 = vmatprep.subr.mxu0 0.0
    %2685 = vmatpush1.msra.mxu0 0.0
    %2686 = vmatprep.subr.mxu0 0.0
    %2687 = vmatpush1.msra.mxu0 0.0
    %2688 = vmatprep.subr.mxu0 0.0
    %2689 = vmatpush1.msra.mxu0 0.0
    %2690 = vmatprep.subr.mxu0 0.0
    %2691 = vmatpush1.msra.mxu0 0.0
    %2692 = vmatprep.subr.mxu0 0.0
    %2693 = vmatpush1.msra.mxu0 0.0
    %2694 = vmatprep.subr.mxu0 0.0
    %v2695 = vand.u32 %v37, 4294901760
    %v2696 = vsub.f32 %v37, %v2695
    %v2697 = vand.u32 %v2696, 4294901760
    %2698 = vmatpush1.msra.mxu0 %v2697
    %2699 = vmatprep.subr.mxu0 0.0
    %v2700 = vand.u32 %v36, 4294901760
    %v2701 = vsub.f32 %v36, %v2700
    %v2702 = vand.u32 %v2701, 4294901760
    %2703 = vmatpush1.msra.mxu0 %v2702
    %2704 = vmatprep.subr.mxu0 0.0
    %v2705 = vand.u32 %v35, 4294901760
    %v2706 = vsub.f32 %v35, %v2705
    %v2707 = vand.u32 %v2706, 4294901760
    %2708 = vmatpush1.msra.mxu0 %v2707
    %2709 = vmatprep.subr.mxu0 0.0
    %v2710 = vand.u32 %v34, 4294901760
    %v2711 = vsub.f32 %v34, %v2710
    %v2712 = vand.u32 %v2711, 4294901760
    %2713 = vmatpush1.msra.mxu0 %v2712
    %2714 = vmatprep.subr.mxu0 0.0
    %v2715 = vand.u32 %v33, 4294901760
    %v2716 = vsub.f32 %v33, %v2715
    %v2717 = vand.u32 %v2716, 4294901760
    %2718 = vmatpush1.msra.mxu0 %v2717
    %2719 = vmatprep.subr.mxu0 0.0
    %v2720 = vand.u32 %v32, 4294901760
    %v2721 = vsub.f32 %v32, %v2720
    %v2722 = vand.u32 %v2721, 4294901760
    %2723 = vmatpush1.msra.mxu0 %v2722
    %2724 = vmatprep.subr.mxu0 0.0
    %v2725 = vand.u32 %v31, 4294901760
    %v2726 = vsub.f32 %v31, %v2725
    %v2727 = vand.u32 %v2726, 4294901760
    %2728 = vmatpush1.msra.mxu0 %v2727
    %2729 = vmatprep.subr.mxu0 0.0
    %v2730 = vand.u32 %v30, 4294901760
    %v2731 = vsub.f32 %v30, %v2730
    %v2732 = vand.u32 %v2731, 4294901760
    %2733 = vmatpush1.msra.mxu0 %v2732
    %2734 = vmatprep.subr.mxu0 0.0
    %2735 = vmatpush2.msra.mxu0 0.0
    %2736 = vmatprep.subr.mxu0 0.0
    %2737 = vmatpush2.msra.mxu0 0.0
    %2738 = vmatprep.subr.mxu0 0.0
    %2739 = vmatpush2.msra.mxu0 0.0
    %2740 = vmatprep.subr.mxu0 0.0
    %2741 = vmatpush2.msra.mxu0 0.0
    %2742 = vmatprep.subr.mxu0 0.0
    %2743 = vmatpush2.msra.mxu0 0.0
    %2744 = vmatprep.subr.mxu0 0.0
    %2745 = vmatpush2.msra.mxu0 0.0
    %2746 = vmatprep.subr.mxu0 0.0
    %2747 = vmatpush2.msra.mxu0 0.0
    %2748 = vmatprep.subr.mxu0 0.0
    %2749 = vmatpush2.msra.mxu0 0.0
    %2750 = vmatprep.subr.mxu0 0.0
    %2751 = vmatpush2.msra.mxu0 0.0
    %2752 = vmatprep.subr.mxu0 0.0
    %2753 = vmatpush2.msra.mxu0 0.0
    %2754 = vmatprep.subr.mxu0 0.0
    %2755 = vmatpush2.msra.mxu0 0.0
    %2756 = vmatprep.subr.mxu0 0.0
    %2757 = vmatpush2.msra.mxu0 0.0
    %2758 = vmatprep.subr.mxu0 0.0
    %2759 = vmatpush2.msra.mxu0 0.0
    %2760 = vmatprep.subr.mxu0 0.0
    %2761 = vmatpush2.msra.mxu0 0.0
    %2762 = vmatprep.subr.mxu0 0.0
    %2763 = vmatpush2.msra.mxu0 0.0
    %2764 = vmatprep.subr.mxu0 0.0
    %2765 = vmatpush2.msra.mxu0 0.0
    %2766 = vmatprep.mubr.f32.mxu0 0.0
    %v2767 = vand.u32 %v2313, 4294901760
    %2768 = vmatmul.mubr.f32.gmra.mxu0 %v2767
    %v2769 = vpop.f32.mrf.mxu0
    %v2770 = vadd.f32 %v2675, %v2769
    %v2771 = vpop.f32.mrf.mxu0
    %2772 = vdwg.mxu0
    %2773 = vmatprep.subr.mxu0 0.0
    %2774 = vmatpush1.msra.mxu0 0.0
    %2775 = vmatprep.subr.mxu0 0.0
    %2776 = vmatpush1.msra.mxu0 0.0
    %2777 = vmatprep.subr.mxu0 0.0
    %2778 = vmatpush1.msra.mxu0 0.0
    %2779 = vmatprep.subr.mxu0 0.0
    %2780 = vmatpush1.msra.mxu0 0.0
    %2781 = vmatprep.subr.mxu0 0.0
    %2782 = vmatpush1.msra.mxu0 0.0
    %2783 = vmatprep.subr.mxu0 0.0
    %2784 = vmatpush1.msra.mxu0 0.0
    %2785 = vmatprep.subr.mxu0 0.0
    %2786 = vmatpush1.msra.mxu0 0.0
    %2787 = vmatprep.subr.mxu0 0.0
    %2788 = vmatpush1.msra.mxu0 0.0
    %2789 = vmatprep.subr.mxu0 0.0
    %v2790 = vand.u32 %v37, 4294901760
    %2791 = vmatpush1.msra.mxu0 %v2790
    %2792 = vmatprep.subr.mxu0 0.0
    %v2793 = vand.u32 %v36, 4294901760
    %2794 = vmatpush1.msra.mxu0 %v2793
    %2795 = vmatprep.subr.mxu0 0.0
    %v2796 = vand.u32 %v35, 4294901760
    %2797 = vmatpush1.msra.mxu0 %v2796
    %2798 = vmatprep.subr.mxu0 0.0
    %v2799 = vand.u32 %v34, 4294901760
    %2800 = vmatpush1.msra.mxu0 %v2799
    %2801 = vmatprep.subr.mxu0 0.0
    %v2802 = vand.u32 %v33, 4294901760
    %2803 = vmatpush1.msra.mxu0 %v2802
    %2804 = vmatprep.subr.mxu0 0.0
    %v2805 = vand.u32 %v32, 4294901760
    %2806 = vmatpush1.msra.mxu0 %v2805
    %2807 = vmatprep.subr.mxu0 0.0
    %v2808 = vand.u32 %v31, 4294901760
    %2809 = vmatpush1.msra.mxu0 %v2808
    %2810 = vmatprep.subr.mxu0 0.0
    %v2811 = vand.u32 %v30, 4294901760
    %2812 = vmatpush1.msra.mxu0 %v2811
    %2813 = vmatprep.subr.mxu0 0.0
    %2814 = vmatpush2.msra.mxu0 0.0
    %2815 = vmatprep.subr.mxu0 0.0
    %2816 = vmatpush2.msra.mxu0 0.0
    %2817 = vmatprep.subr.mxu0 0.0
    %2818 = vmatpush2.msra.mxu0 0.0
    %2819 = vmatprep.subr.mxu0 0.0
    %2820 = vmatpush2.msra.mxu0 0.0
    %2821 = vmatprep.subr.mxu0 0.0
    %2822 = vmatpush2.msra.mxu0 0.0
    %2823 = vmatprep.subr.mxu0 0.0
    %2824 = vmatpush2.msra.mxu0 0.0
    %2825 = vmatprep.subr.mxu0 0.0
    %2826 = vmatpush2.msra.mxu0 0.0
    %2827 = vmatprep.subr.mxu0 0.0
    %2828 = vmatpush2.msra.mxu0 0.0
    %2829 = vmatprep.subr.mxu0 0.0
    %2830 = vmatpush2.msra.mxu0 0.0
    %2831 = vmatprep.subr.mxu0 0.0
    %2832 = vmatpush2.msra.mxu0 0.0
    %2833 = vmatprep.subr.mxu0 0.0
    %2834 = vmatpush2.msra.mxu0 0.0
    %2835 = vmatprep.subr.mxu0 0.0
    %2836 = vmatpush2.msra.mxu0 0.0
    %2837 = vmatprep.subr.mxu0 0.0
    %2838 = vmatpush2.msra.mxu0 0.0
    %2839 = vmatprep.subr.mxu0 0.0
    %2840 = vmatpush2.msra.mxu0 0.0
    %2841 = vmatprep.subr.mxu0 0.0
    %2842 = vmatpush2.msra.mxu0 0.0
    %2843 = vmatprep.subr.mxu0 0.0
    %2844 = vmatpush2.msra.mxu0 0.0
    %2845 = vmatprep.mubr.f32.mxu0 0.0
    %v2846 = vand.u32 %v2313, 4294901760
    %2847 = vmatmul.mubr.f32.gmra.mxu0 %v2846
    %v2848 = vpop.f32.mrf.mxu0
    %v2849 = vadd.f32 %v2770, %v2848
    %v2850 = vpop.f32.mrf.mxu0
    %2851 = vdwg.mxu0
    %v2852 = vld [vmem:[%s1] sm:$0x3]
    %2854 = vset.pattern.permute.xlu0 4
    %2855 = vperm.xlu0 %2854, %v2852
    %v2856 = vpop.permute.xlu0 %2855
    %v2858 = vmul.f32 %v2849, %v2856
    %2859 = vst.msk [vmem:[#allocation4 + $0x2] sm:$0x3] %vm602, %v2858
    %v2860 = vld [vmem:[%s0] sm:$0x3]
    %2861 = vset.pattern.permute.xlu0 5
    %2862 = vperm.xlu0 %2861, %v2860
    %v2863 = vpop.permute.xlu0 %2862
    %vm2864 = vcmp.eq.s32.totalorder %v40, %v2863
    %v2865 = vsel %vm2864, 1, 0
    %v2866 = vcvt.s32.f32 %v2865
    %v2868 = vsel %vm54, %v2866, 0
    %2870 = vmatprep.subr.mxu0 0.0
    %2871 = vmatpush1.msra.mxu0 0.0
    %2872 = vmatprep.subr.mxu0 0.0
    %2873 = vmatpush1.msra.mxu0 0.0
    %2874 = vmatprep.subr.mxu0 0.0
    %2875 = vmatpush1.msra.mxu0 0.0
    %2876 = vmatprep.subr.mxu0 0.0
    %2877 = vmatpush1.msra.mxu0 0.0
    %2878 = vmatprep.subr.mxu0 0.0
    %2879 = vmatpush1.msra.mxu0 0.0
    %2880 = vmatprep.subr.mxu0 0.0
    %2881 = vmatpush1.msra.mxu0 0.0
    %2882 = vmatprep.subr.mxu0 0.0
    %2883 = vmatpush1.msra.mxu0 0.0
    %2884 = vmatprep.subr.mxu0 0.0
    %2885 = vmatpush1.msra.mxu0 0.0
    %2886 = vmatprep.subr.mxu0 0.0
    %v2887 = vand.u32 %v37, 4294901760
    %2888 = vmatpush1.msra.mxu0 %v2887
    %2889 = vmatprep.subr.mxu0 0.0
    %v2890 = vand.u32 %v36, 4294901760
    %2891 = vmatpush1.msra.mxu0 %v2890
    %2892 = vmatprep.subr.mxu0 0.0
    %v2893 = vand.u32 %v35, 4294901760
    %2894 = vmatpush1.msra.mxu0 %v2893
    %2895 = vmatprep.subr.mxu0 0.0
    %v2896 = vand.u32 %v34, 4294901760
    %2897 = vmatpush1.msra.mxu0 %v2896
    %2898 = vmatprep.subr.mxu0 0.0
    %v2899 = vand.u32 %v33, 4294901760
    %2900 = vmatpush1.msra.mxu0 %v2899
    %2901 = vmatprep.subr.mxu0 0.0
    %v2902 = vand.u32 %v32, 4294901760
    %2903 = vmatpush1.msra.mxu0 %v2902
    %2904 = vmatprep.subr.mxu0 0.0
    %v2905 = vand.u32 %v31, 4294901760
    %2906 = vmatpush1.msra.mxu0 %v2905
    %2907 = vmatprep.subr.mxu0 0.0
    %v2908 = vand.u32 %v30, 4294901760
    %2909 = vmatpush1.msra.mxu0 %v2908
    %2910 = vmatprep.subr.mxu0 0.0
    %2911 = vmatpush2.msra.mxu0 0.0
    %2912 = vmatprep.subr.mxu0 0.0
    %2913 = vmatpush2.msra.mxu0 0.0
    %2914 = vmatprep.subr.mxu0 0.0
    %2915 = vmatpush2.msra.mxu0 0.0
    %2916 = vmatprep.subr.mxu0 0.0
    %2917 = vmatpush2.msra.mxu0 0.0
    %2918 = vmatprep.subr.mxu0 0.0
    %2919 = vmatpush2.msra.mxu0 0.0
    %2920 = vmatprep.subr.mxu0 0.0
    %2921 = vmatpush2.msra.mxu0 0.0
    %2922 = vmatprep.subr.mxu0 0.0
    %2923 = vmatpush2.msra.mxu0 0.0
    %2924 = vmatprep.subr.mxu0 0.0
    %2925 = vmatpush2.msra.mxu0 0.0
    %2926 = vmatprep.subr.mxu0 0.0
    %2927 = vmatpush2.msra.mxu0 0.0
    %2928 = vmatprep.subr.mxu0 0.0
    %2929 = vmatpush2.msra.mxu0 0.0
    %2930 = vmatprep.subr.mxu0 0.0
    %2931 = vmatpush2.msra.mxu0 0.0
    %2932 = vmatprep.subr.mxu0 0.0
    %2933 = vmatpush2.msra.mxu0 0.0
    %2934 = vmatprep.subr.mxu0 0.0
    %2935 = vmatpush2.msra.mxu0 0.0
    %2936 = vmatprep.subr.mxu0 0.0
    %2937 = vmatpush2.msra.mxu0 0.0
    %2938 = vmatprep.subr.mxu0 0.0
    %2939 = vmatpush2.msra.mxu0 0.0
    %2940 = vmatprep.subr.mxu0 0.0
    %2941 = vmatpush2.msra.mxu0 0.0
    %2942 = vmatprep.mubr.f32.mxu0 0.0
    %v2943 = vand.u32 %v2868, 4294901760
    %v2944 = vsub.f32 %v2868, %v2943
    %v2945 = vand.u32 %v2944, 4294901760
    %v2946 = vsub.f32 %v2944, %v2945
    %v2947 = vand.u32 %v2946, 4294901760
    %2948 = vmatmul.mubr.f32.gmra.mxu0 %v2947
    %v2949 = vpop.f32.mrf.mxu0
    %v2950 = vadd.f32 %v52, %v2949
    %v2951 = vpop.f32.mrf.mxu0
    %2952 = vdwg.mxu0
    %2953 = vmatprep.subr.mxu0 0.0
    %2954 = vmatpush1.msra.mxu0 0.0
    %2955 = vmatprep.subr.mxu0 0.0
    %2956 = vmatpush1.msra.mxu0 0.0
    %2957 = vmatprep.subr.mxu0 0.0
    %2958 = vmatpush1.msra.mxu0 0.0
    %2959 = vmatprep.subr.mxu0 0.0
    %2960 = vmatpush1.msra.mxu0 0.0
    %2961 = vmatprep.subr.mxu0 0.0
    %2962 = vmatpush1.msra.mxu0 0.0
    %2963 = vmatprep.subr.mxu0 0.0
    %2964 = vmatpush1.msra.mxu0 0.0
    %2965 = vmatprep.subr.mxu0 0.0
    %2966 = vmatpush1.msra.mxu0 0.0
    %2967 = vmatprep.subr.mxu0 0.0
    %2968 = vmatpush1.msra.mxu0 0.0
    %2969 = vmatprep.subr.mxu0 0.0
    %v2970 = vand.u32 %v37, 4294901760
    %v2971 = vsub.f32 %v37, %v2970
    %v2972 = vand.u32 %v2971, 4294901760
    %v2973 = vsub.f32 %v2971, %v2972
    %v2974 = vand.u32 %v2973, 4294901760
    %2975 = vmatpush1.msra.mxu0 %v2974
    %2976 = vmatprep.subr.mxu0 0.0
    %v2977 = vand.u32 %v36, 4294901760
    %v2978 = vsub.f32 %v36, %v2977
    %v2979 = vand.u32 %v2978, 4294901760
    %v2980 = vsub.f32 %v2978, %v2979
    %v2981 = vand.u32 %v2980, 4294901760
    %2982 = vmatpush1.msra.mxu0 %v2981
    %2983 = vmatprep.subr.mxu0 0.0
    %v2984 = vand.u32 %v35, 4294901760
    %v2985 = vsub.f32 %v35, %v2984
    %v2986 = vand.u32 %v2985, 4294901760
    %v2987 = vsub.f32 %v2985, %v2986
    %v2988 = vand.u32 %v2987, 4294901760
    %2989 = vmatpush1.msra.mxu0 %v2988
    %2990 = vmatprep.subr.mxu0 0.0
    %v2991 = vand.u32 %v34, 4294901760
    %v2992 = vsub.f32 %v34, %v2991
    %v2993 = vand.u32 %v2992, 4294901760
    %v2994 = vsub.f32 %v2992, %v2993
    %v2995 = vand.u32 %v2994, 4294901760
    %2996 = vmatpush1.msra.mxu0 %v2995
    %2997 = vmatprep.subr.mxu0 0.0
    %v2998 = vand.u32 %v33, 4294901760
    %v2999 = vsub.f32 %v33, %v2998
    %v3000 = vand.u32 %v2999, 4294901760
    %v3001 = vsub.f32 %v2999, %v3000
    %v3002 = vand.u32 %v3001, 4294901760
    %3003 = vmatpush1.msra.mxu0 %v3002
    %3004 = vmatprep.subr.mxu0 0.0
    %v3005 = vand.u32 %v32, 4294901760
    %v3006 = vsub.f32 %v32, %v3005
    %v3007 = vand.u32 %v3006, 4294901760
    %v3008 = vsub.f32 %v3006, %v3007
    %v3009 = vand.u32 %v3008, 4294901760
    %3010 = vmatpush1.msra.mxu0 %v3009
    %3011 = vmatprep.subr.mxu0 0.0
    %v3012 = vand.u32 %v31, 4294901760
    %v3013 = vsub.f32 %v31, %v3012
    %v3014 = vand.u32 %v3013, 4294901760
    %v3015 = vsub.f32 %v3013, %v3014
    %v3016 = vand.u32 %v3015, 4294901760
    %3017 = vmatpush1.msra.mxu0 %v3016
    %3018 = vmatprep.subr.mxu0 0.0
    %v3019 = vand.u32 %v30, 4294901760
    %v3020 = vsub.f32 %v30, %v3019
    %v3021 = vand.u32 %v3020, 4294901760
    %v3022 = vsub.f32 %v3020, %v3021
    %v3023 = vand.u32 %v3022, 4294901760
    %3024 = vmatpush1.msra.mxu0 %v3023
    %3025 = vmatprep.subr.mxu0 0.0
    %3026 = vmatpush2.msra.mxu0 0.0
    %3027 = vmatprep.subr.mxu0 0.0
    %3028 = vmatpush2.msra.mxu0 0.0
    %3029 = vmatprep.subr.mxu0 0.0
    %3030 = vmatpush2.msra.mxu0 0.0
    %3031 = vmatprep.subr.mxu0 0.0
    %3032 = vmatpush2.msra.mxu0 0.0
    %3033 = vmatprep.subr.mxu0 0.0
    %3034 = vmatpush2.msra.mxu0 0.0
    %3035 = vmatprep.subr.mxu0 0.0
    %3036 = vmatpush2.msra.mxu0 0.0
    %3037 = vmatprep.subr.mxu0 0.0
    %3038 = vmatpush2.msra.mxu0 0.0
    %3039 = vmatprep.subr.mxu0 0.0
    %3040 = vmatpush2.msra.mxu0 0.0
    %3041 = vmatprep.subr.mxu0 0.0
    %3042 = vmatpush2.msra.mxu0 0.0
    %3043 = vmatprep.subr.mxu0 0.0
    %3044 = vmatpush2.msra.mxu0 0.0
    %3045 = vmatprep.subr.mxu0 0.0
    %3046 = vmatpush2.msra.mxu0 0.0
    %3047 = vmatprep.subr.mxu0 0.0
    %3048 = vmatpush2.msra.mxu0 0.0
    %3049 = vmatprep.subr.mxu0 0.0
    %3050 = vmatpush2.msra.mxu0 0.0
    %3051 = vmatprep.subr.mxu0 0.0
    %3052 = vmatpush2.msra.mxu0 0.0
    %3053 = vmatprep.subr.mxu0 0.0
    %3054 = vmatpush2.msra.mxu0 0.0
    %3055 = vmatprep.subr.mxu0 0.0
    %3056 = vmatpush2.msra.mxu0 0.0
    %3057 = vmatprep.mubr.f32.mxu0 0.0
    %v3058 = vand.u32 %v2868, 4294901760
    %3059 = vmatmul.mubr.f32.gmra.mxu0 %v3058
    %v3060 = vpop.f32.mrf.mxu0
    %v3061 = vadd.f32 %v2950, %v3060
    %v3062 = vpop.f32.mrf.mxu0
    %3063 = vdwg.mxu0
    %3064 = vmatprep.subr.mxu0 0.0
    %3065 = vmatpush1.msra.mxu0 0.0
    %3066 = vmatprep.subr.mxu0 0.0
    %3067 = vmatpush1.msra.mxu0 0.0
    %3068 = vmatprep.subr.mxu0 0.0
    %3069 = vmatpush1.msra.mxu0 0.0
    %3070 = vmatprep.subr.mxu0 0.0
    %3071 = vmatpush1.msra.mxu0 0.0
    %3072 = vmatprep.subr.mxu0 0.0
    %3073 = vmatpush1.msra.mxu0 0.0
    %3074 = vmatprep.subr.mxu0 0.0
    %3075 = vmatpush1.msra.mxu0 0.0
    %3076 = vmatprep.subr.mxu0 0.0
    %3077 = vmatpush1.msra.mxu0 0.0
    %3078 = vmatprep.subr.mxu0 0.0
    %3079 = vmatpush1.msra.mxu0 0.0
    %3080 = vmatprep.subr.mxu0 0.0
    %v3081 = vand.u32 %v37, 4294901760
    %v3082 = vsub.f32 %v37, %v3081
    %3083 = vmatpush1.msra.mxu0 %v3082
    %3084 = vmatprep.subr.mxu0 0.0
    %v3085 = vand.u32 %v36, 4294901760
    %v3086 = vsub.f32 %v36, %v3085
    %3087 = vmatpush1.msra.mxu0 %v3086
    %3088 = vmatprep.subr.mxu0 0.0
    %v3089 = vand.u32 %v35, 4294901760
    %v3090 = vsub.f32 %v35, %v3089
    %3091 = vmatpush1.msra.mxu0 %v3090
    %3092 = vmatprep.subr.mxu0 0.0
    %v3093 = vand.u32 %v34, 4294901760
    %v3094 = vsub.f32 %v34, %v3093
    %3095 = vmatpush1.msra.mxu0 %v3094
    %3096 = vmatprep.subr.mxu0 0.0
    %v3097 = vand.u32 %v33, 4294901760
    %v3098 = vsub.f32 %v33, %v3097
    %3099 = vmatpush1.msra.mxu0 %v3098
    %3100 = vmatprep.subr.mxu0 0.0
    %v3101 = vand.u32 %v32, 4294901760
    %v3102 = vsub.f32 %v32, %v3101
    %3103 = vmatpush1.msra.mxu0 %v3102
    %3104 = vmatprep.subr.mxu0 0.0
    %v3105 = vand.u32 %v31, 4294901760
    %v3106 = vsub.f32 %v31, %v3105
    %3107 = vmatpush1.msra.mxu0 %v3106
    %3108 = vmatprep.subr.mxu0 0.0
    %v3109 = vand.u32 %v30, 4294901760
    %v3110 = vsub.f32 %v30, %v3109
    %3111 = vmatpush1.msra.mxu0 %v3110
    %3112 = vmatprep.subr.mxu0 0.0
    %3113 = vmatpush2.msra.mxu0 0.0
    %3114 = vmatprep.subr.mxu0 0.0
    %3115 = vmatpush2.msra.mxu0 0.0
    %3116 = vmatprep.subr.mxu0 0.0
    %3117 = vmatpush2.msra.mxu0 0.0
    %3118 = vmatprep.subr.mxu0 0.0
    %3119 = vmatpush2.msra.mxu0 0.0
    %3120 = vmatprep.subr.mxu0 0.0
    %3121 = vmatpush2.msra.mxu0 0.0
    %3122 = vmatprep.subr.mxu0 0.0
    %3123 = vmatpush2.msra.mxu0 0.0
    %3124 = vmatprep.subr.mxu0 0.0
    %3125 = vmatpush2.msra.mxu0 0.0
    %3126 = vmatprep.subr.mxu0 0.0
    %3127 = vmatpush2.msra.mxu0 0.0
    %3128 = vmatprep.subr.mxu0 0.0
    %3129 = vmatpush2.msra.mxu0 0.0
    %3130 = vmatprep.subr.mxu0 0.0
    %3131 = vmatpush2.msra.mxu0 0.0
    %3132 = vmatprep.subr.mxu0 0.0
    %3133 = vmatpush2.msra.mxu0 0.0
    %3134 = vmatprep.subr.mxu0 0.0
    %3135 = vmatpush2.msra.mxu0 0.0
    %3136 = vmatprep.subr.mxu0 0.0
    %3137 = vmatpush2.msra.mxu0 0.0
    %3138 = vmatprep.subr.mxu0 0.0
    %3139 = vmatpush2.msra.mxu0 0.0
    %3140 = vmatprep.subr.mxu0 0.0
    %3141 = vmatpush2.msra.mxu0 0.0
    %3142 = vmatprep.subr.mxu0 0.0
    %3143 = vmatpush2.msra.mxu0 0.0
    %3144 = vmatprep.mubr.f32.mxu0 0.0
    %v3145 = vand.u32 %v2868, 4294901760
    %v3146 = vsub.f32 %v2868, %v3145
    %3147 = vmatmul.mubr.f32.gmra.mxu0 %v3146
    %v3148 = vpop.f32.mrf.mxu0
    %v3149 = vadd.f32 %v3061, %v3148
    %v3150 = vpop.f32.mrf.mxu0
    %3151 = vdwg.mxu0
    %3152 = vmatprep.subr.mxu0 0.0
    %3153 = vmatpush1.msra.mxu0 0.0
    %3154 = vmatprep.subr.mxu0 0.0
    %3155 = vmatpush1.msra.mxu0 0.0
    %3156 = vmatprep.subr.mxu0 0.0
    %3157 = vmatpush1.msra.mxu0 0.0
    %3158 = vmatprep.subr.mxu0 0.0
    %3159 = vmatpush1.msra.mxu0 0.0
    %3160 = vmatprep.subr.mxu0 0.0
    %3161 = vmatpush1.msra.mxu0 0.0
    %3162 = vmatprep.subr.mxu0 0.0
    %3163 = vmatpush1.msra.mxu0 0.0
    %3164 = vmatprep.subr.mxu0 0.0
    %3165 = vmatpush1.msra.mxu0 0.0
    %3166 = vmatprep.subr.mxu0 0.0
    %3167 = vmatpush1.msra.mxu0 0.0
    %3168 = vmatprep.subr.mxu0 0.0
    %v3169 = vand.u32 %v37, 4294901760
    %3170 = vmatpush1.msra.mxu0 %v3169
    %3171 = vmatprep.subr.mxu0 0.0
    %v3172 = vand.u32 %v36, 4294901760
    %3173 = vmatpush1.msra.mxu0 %v3172
    %3174 = vmatprep.subr.mxu0 0.0
    %v3175 = vand.u32 %v35, 4294901760
    %3176 = vmatpush1.msra.mxu0 %v3175
    %3177 = vmatprep.subr.mxu0 0.0
    %v3178 = vand.u32 %v34, 4294901760
    %3179 = vmatpush1.msra.mxu0 %v3178
    %3180 = vmatprep.subr.mxu0 0.0
    %v3181 = vand.u32 %v33, 4294901760
    %3182 = vmatpush1.msra.mxu0 %v3181
    %3183 = vmatprep.subr.mxu0 0.0
    %v3184 = vand.u32 %v32, 4294901760
    %3185 = vmatpush1.msra.mxu0 %v3184
    %3186 = vmatprep.subr.mxu0 0.0
    %v3187 = vand.u32 %v31, 4294901760
    %3188 = vmatpush1.msra.mxu0 %v3187
    %3189 = vmatprep.subr.mxu0 0.0
    %v3190 = vand.u32 %v30, 4294901760
    %3191 = vmatpush1.msra.mxu0 %v3190
    %3192 = vmatprep.subr.mxu0 0.0
    %3193 = vmatpush2.msra.mxu0 0.0
    %3194 = vmatprep.subr.mxu0 0.0
    %3195 = vmatpush2.msra.mxu0 0.0
    %3196 = vmatprep.subr.mxu0 0.0
    %3197 = vmatpush2.msra.mxu0 0.0
    %3198 = vmatprep.subr.mxu0 0.0
    %3199 = vmatpush2.msra.mxu0 0.0
    %3200 = vmatprep.subr.mxu0 0.0
    %3201 = vmatpush2.msra.mxu0 0.0
    %3202 = vmatprep.subr.mxu0 0.0
    %3203 = vmatpush2.msra.mxu0 0.0
    %3204 = vmatprep.subr.mxu0 0.0
    %3205 = vmatpush2.msra.mxu0 0.0
    %3206 = vmatprep.subr.mxu0 0.0
    %3207 = vmatpush2.msra.mxu0 0.0
    %3208 = vmatprep.subr.mxu0 0.0
    %3209 = vmatpush2.msra.mxu0 0.0
    %3210 = vmatprep.subr.mxu0 0.0
    %3211 = vmatpush2.msra.mxu0 0.0
    %3212 = vmatprep.subr.mxu0 0.0
    %3213 = vmatpush2.msra.mxu0 0.0
    %3214 = vmatprep.subr.mxu0 0.0
    %3215 = vmatpush2.msra.mxu0 0.0
    %3216 = vmatprep.subr.mxu0 0.0
    %3217 = vmatpush2.msra.mxu0 0.0
    %3218 = vmatprep.subr.mxu0 0.0
    %3219 = vmatpush2.msra.mxu0 0.0
    %3220 = vmatprep.subr.mxu0 0.0
    %3221 = vmatpush2.msra.mxu0 0.0
    %3222 = vmatprep.subr.mxu0 0.0
    %3223 = vmatpush2.msra.mxu0 0.0
    %3224 = vmatprep.mubr.f32.mxu0 0.0
    %v3225 = vand.u32 %v2868, 4294901760
    %v3226 = vsub.f32 %v2868, %v3225
    %v3227 = vand.u32 %v3226, 4294901760
    %3228 = vmatmul.mubr.f32.gmra.mxu0 %v3227
    %v3229 = vpop.f32.mrf.mxu0
    %v3230 = vadd.f32 %v3149, %v3229
    %v3231 = vpop.f32.mrf.mxu0
    %3232 = vdwg.mxu0
    %3233 = vmatprep.subr.mxu0 0.0
    %3234 = vmatpush1.msra.mxu0 0.0
    %3235 = vmatprep.subr.mxu0 0.0
    %3236 = vmatpush1.msra.mxu0 0.0
    %3237 = vmatprep.subr.mxu0 0.0
    %3238 = vmatpush1.msra.mxu0 0.0
    %3239 = vmatprep.subr.mxu0 0.0
    %3240 = vmatpush1.msra.mxu0 0.0
    %3241 = vmatprep.subr.mxu0 0.0
    %3242 = vmatpush1.msra.mxu0 0.0
    %3243 = vmatprep.subr.mxu0 0.0
    %3244 = vmatpush1.msra.mxu0 0.0
    %3245 = vmatprep.subr.mxu0 0.0
    %3246 = vmatpush1.msra.mxu0 0.0
    %3247 = vmatprep.subr.mxu0 0.0
    %3248 = vmatpush1.msra.mxu0 0.0
    %3249 = vmatprep.subr.mxu0 0.0
    %v3250 = vand.u32 %v37, 4294901760
    %v3251 = vsub.f32 %v37, %v3250
    %v3252 = vand.u32 %v3251, 4294901760
    %3253 = vmatpush1.msra.mxu0 %v3252
    %3254 = vmatprep.subr.mxu0 0.0
    %v3255 = vand.u32 %v36, 4294901760
    %v3256 = vsub.f32 %v36, %v3255
    %v3257 = vand.u32 %v3256, 4294901760
    %3258 = vmatpush1.msra.mxu0 %v3257
    %3259 = vmatprep.subr.mxu0 0.0
    %v3260 = vand.u32 %v35, 4294901760
    %v3261 = vsub.f32 %v35, %v3260
    %v3262 = vand.u32 %v3261, 4294901760
    %3263 = vmatpush1.msra.mxu0 %v3262
    %3264 = vmatprep.subr.mxu0 0.0
    %v3265 = vand.u32 %v34, 4294901760
    %v3266 = vsub.f32 %v34, %v3265
    %v3267 = vand.u32 %v3266, 4294901760
    %3268 = vmatpush1.msra.mxu0 %v3267
    %3269 = vmatprep.subr.mxu0 0.0
    %v3270 = vand.u32 %v33, 4294901760
    %v3271 = vsub.f32 %v33, %v3270
    %v3272 = vand.u32 %v3271, 4294901760
    %3273 = vmatpush1.msra.mxu0 %v3272
    %3274 = vmatprep.subr.mxu0 0.0
    %v3275 = vand.u32 %v32, 4294901760
    %v3276 = vsub.f32 %v32, %v3275
    %v3277 = vand.u32 %v3276, 4294901760
    %3278 = vmatpush1.msra.mxu0 %v3277
    %3279 = vmatprep.subr.mxu0 0.0
    %v3280 = vand.u32 %v31, 4294901760
    %v3281 = vsub.f32 %v31, %v3280
    %v3282 = vand.u32 %v3281, 4294901760
    %3283 = vmatpush1.msra.mxu0 %v3282
    %3284 = vmatprep.subr.mxu0 0.0
    %v3285 = vand.u32 %v30, 4294901760
    %v3286 = vsub.f32 %v30, %v3285
    %v3287 = vand.u32 %v3286, 4294901760
    %3288 = vmatpush1.msra.mxu0 %v3287
    %3289 = vmatprep.subr.mxu0 0.0
    %3290 = vmatpush2.msra.mxu0 0.0
    %3291 = vmatprep.subr.mxu0 0.0
    %3292 = vmatpush2.msra.mxu0 0.0
    %3293 = vmatprep.subr.mxu0 0.0
    %3294 = vmatpush2.msra.mxu0 0.0
    %3295 = vmatprep.subr.mxu0 0.0
    %3296 = vmatpush2.msra.mxu0 0.0
    %3297 = vmatprep.subr.mxu0 0.0
    %3298 = vmatpush2.msra.mxu0 0.0
    %3299 = vmatprep.subr.mxu0 0.0
    %3300 = vmatpush2.msra.mxu0 0.0
    %3301 = vmatprep.subr.mxu0 0.0
    %3302 = vmatpush2.msra.mxu0 0.0
    %3303 = vmatprep.subr.mxu0 0.0
    %3304 = vmatpush2.msra.mxu0 0.0
    %3305 = vmatprep.subr.mxu0 0.0
    %3306 = vmatpush2.msra.mxu0 0.0
    %3307 = vmatprep.subr.mxu0 0.0
    %3308 = vmatpush2.msra.mxu0 0.0
    %3309 = vmatprep.subr.mxu0 0.0
    %3310 = vmatpush2.msra.mxu0 0.0
    %3311 = vmatprep.subr.mxu0 0.0
    %3312 = vmatpush2.msra.mxu0 0.0
    %3313 = vmatprep.subr.mxu0 0.0
    %3314 = vmatpush2.msra.mxu0 0.0
    %3315 = vmatprep.subr.mxu0 0.0
    %3316 = vmatpush2.msra.mxu0 0.0
    %3317 = vmatprep.subr.mxu0 0.0
    %3318 = vmatpush2.msra.mxu0 0.0
    %3319 = vmatprep.subr.mxu0 0.0
    %3320 = vmatpush2.msra.mxu0 0.0
    %3321 = vmatprep.mubr.f32.mxu0 0.0
    %v3322 = vand.u32 %v2868, 4294901760
    %3323 = vmatmul.mubr.f32.gmra.mxu0 %v3322
    %v3324 = vpop.f32.mrf.mxu0
    %v3325 = vadd.f32 %v3230, %v3324
    %v3326 = vpop.f32.mrf.mxu0
    %3327 = vdwg.mxu0
    %3328 = vmatprep.subr.mxu0 0.0
    %3329 = vmatpush1.msra.mxu0 0.0
    %3330 = vmatprep.subr.mxu0 0.0
    %3331 = vmatpush1.msra.mxu0 0.0
    %3332 = vmatprep.subr.mxu0 0.0
    %3333 = vmatpush1.msra.mxu0 0.0
    %3334 = vmatprep.subr.mxu0 0.0
    %3335 = vmatpush1.msra.mxu0 0.0
    %3336 = vmatprep.subr.mxu0 0.0
    %3337 = vmatpush1.msra.mxu0 0.0
    %3338 = vmatprep.subr.mxu0 0.0
    %3339 = vmatpush1.msra.mxu0 0.0
    %3340 = vmatprep.subr.mxu0 0.0
    %3341 = vmatpush1.msra.mxu0 0.0
    %3342 = vmatprep.subr.mxu0 0.0
    %3343 = vmatpush1.msra.mxu0 0.0
    %3344 = vmatprep.subr.mxu0 0.0
    %v3345 = vand.u32 %v37, 4294901760
    %3346 = vmatpush1.msra.mxu0 %v3345
    %3347 = vmatprep.subr.mxu0 0.0
    %v3348 = vand.u32 %v36, 4294901760
    %3349 = vmatpush1.msra.mxu0 %v3348
    %3350 = vmatprep.subr.mxu0 0.0
    %v3351 = vand.u32 %v35, 4294901760
    %3352 = vmatpush1.msra.mxu0 %v3351
    %3353 = vmatprep.subr.mxu0 0.0
    %v3354 = vand.u32 %v34, 4294901760
    %3355 = vmatpush1.msra.mxu0 %v3354
    %3356 = vmatprep.subr.mxu0 0.0
    %v3357 = vand.u32 %v33, 4294901760
    %3358 = vmatpush1.msra.mxu0 %v3357
    %3359 = vmatprep.subr.mxu0 0.0
    %v3360 = vand.u32 %v32, 4294901760
    %3361 = vmatpush1.msra.mxu0 %v3360
    %3362 = vmatprep.subr.mxu0 0.0
    %v3363 = vand.u32 %v31, 4294901760
    %3364 = vmatpush1.msra.mxu0 %v3363
    %3365 = vmatprep.subr.mxu0 0.0
    %v3366 = vand.u32 %v30, 4294901760
    %3367 = vmatpush1.msra.mxu0 %v3366
    %3368 = vmatprep.subr.mxu0 0.0
    %3369 = vmatpush2.msra.mxu0 0.0
    %3370 = vmatprep.subr.mxu0 0.0
    %3371 = vmatpush2.msra.mxu0 0.0
    %3372 = vmatprep.subr.mxu0 0.0
    %3373 = vmatpush2.msra.mxu0 0.0
    %3374 = vmatprep.subr.mxu0 0.0
    %3375 = vmatpush2.msra.mxu0 0.0
    %3376 = vmatprep.subr.mxu0 0.0
    %3377 = vmatpush2.msra.mxu0 0.0
    %3378 = vmatprep.subr.mxu0 0.0
    %3379 = vmatpush2.msra.mxu0 0.0
    %3380 = vmatprep.subr.mxu0 0.0
    %3381 = vmatpush2.msra.mxu0 0.0
    %3382 = vmatprep.subr.mxu0 0.0
    %3383 = vmatpush2.msra.mxu0 0.0
    %3384 = vmatprep.subr.mxu0 0.0
    %3385 = vmatpush2.msra.mxu0 0.0
    %3386 = vmatprep.subr.mxu0 0.0
    %3387 = vmatpush2.msra.mxu0 0.0
    %3388 = vmatprep.subr.mxu0 0.0
    %3389 = vmatpush2.msra.mxu0 0.0
    %3390 = vmatprep.subr.mxu0 0.0
    %3391 = vmatpush2.msra.mxu0 0.0
    %3392 = vmatprep.subr.mxu0 0.0
    %3393 = vmatpush2.msra.mxu0 0.0
    %3394 = vmatprep.subr.mxu0 0.0
    %3395 = vmatpush2.msra.mxu0 0.0
    %3396 = vmatprep.subr.mxu0 0.0
    %3397 = vmatpush2.msra.mxu0 0.0
    %3398 = vmatprep.subr.mxu0 0.0
    %3399 = vmatpush2.msra.mxu0 0.0
    %3400 = vmatprep.mubr.f32.mxu0 0.0
    %v3401 = vand.u32 %v2868, 4294901760
    %3402 = vmatmul.mubr.f32.gmra.mxu0 %v3401
    %v3403 = vpop.f32.mrf.mxu0
    %v3404 = vadd.f32 %v3325, %v3403
    %v3405 = vpop.f32.mrf.mxu0
    %3406 = vdwg.mxu0
    %v3407 = vld [vmem:[%s1] sm:$0x3]
    %3409 = vset.pattern.permute.xlu0 5
    %3410 = vperm.xlu0 %3409, %v3407
    %v3411 = vpop.permute.xlu0 %3410
    %v3413 = vmul.f32 %v3404, %v3411
    %v3416 = vunpack.c.l.s4 1983009808
    %v3417 = vunpack.c.0.s8 %v3416
    %v3418 = vlaneseq
    %v3419 = vshrl.u32 %v3418, 7
    %v3420 = vsub.s32 %v3417, %v3419
    %v3421 = vrot.slane %v3413, %v3420
    %3422 = vrot.lane.b32.xlu0 %v3421, 32
    %v3423 = vpop.permute.xlu0 %3422
    %3425 = vst.msk [vmem:[#allocation4 + $0x2] sm:$0x3] %vm1169, %v3423
    %v3426 = vld [vmem:[%s0] sm:$0x3]
    %3427 = vset.pattern.permute.xlu0 6
    %3428 = vperm.xlu0 %3427, %v3426
    %v3429 = vpop.permute.xlu0 %3428
    %vm3430 = vcmp.eq.s32.totalorder %v40, %v3429
    %v3431 = vsel %vm3430, 1, 0
    %v3432 = vcvt.s32.f32 %v3431
    %v3434 = vsel %vm54, %v3432, 0
    %3436 = vmatprep.subr.mxu0 0.0
    %3437 = vmatpush1.msra.mxu0 0.0
    %3438 = vmatprep.subr.mxu0 0.0
    %3439 = vmatpush1.msra.mxu0 0.0
    %3440 = vmatprep.subr.mxu0 0.0
    %3441 = vmatpush1.msra.mxu0 0.0
    %3442 = vmatprep.subr.mxu0 0.0
    %3443 = vmatpush1.msra.mxu0 0.0
    %3444 = vmatprep.subr.mxu0 0.0
    %3445 = vmatpush1.msra.mxu0 0.0
    %3446 = vmatprep.subr.mxu0 0.0
    %3447 = vmatpush1.msra.mxu0 0.0
    %3448 = vmatprep.subr.mxu0 0.0
    %3449 = vmatpush1.msra.mxu0 0.0
    %3450 = vmatprep.subr.mxu0 0.0
    %3451 = vmatpush1.msra.mxu0 0.0
    %3452 = vmatprep.subr.mxu0 0.0
    %v3453 = vand.u32 %v37, 4294901760
    %3454 = vmatpush1.msra.mxu0 %v3453
    %3455 = vmatprep.subr.mxu0 0.0
    %v3456 = vand.u32 %v36, 4294901760
    %3457 = vmatpush1.msra.mxu0 %v3456
    %3458 = vmatprep.subr.mxu0 0.0
    %v3459 = vand.u32 %v35, 4294901760
    %3460 = vmatpush1.msra.mxu0 %v3459
    %3461 = vmatprep.subr.mxu0 0.0
    %v3462 = vand.u32 %v34, 4294901760
    %3463 = vmatpush1.msra.mxu0 %v3462
    %3464 = vmatprep.subr.mxu0 0.0
    %v3465 = vand.u32 %v33, 4294901760
    %3466 = vmatpush1.msra.mxu0 %v3465
    %3467 = vmatprep.subr.mxu0 0.0
    %v3468 = vand.u32 %v32, 4294901760
    %3469 = vmatpush1.msra.mxu0 %v3468
    %3470 = vmatprep.subr.mxu0 0.0
    %v3471 = vand.u32 %v31, 4294901760
    %3472 = vmatpush1.msra.mxu0 %v3471
    %3473 = vmatprep.subr.mxu0 0.0
    %v3474 = vand.u32 %v30, 4294901760
    %3475 = vmatpush1.msra.mxu0 %v3474
    %3476 = vmatprep.subr.mxu0 0.0
    %3477 = vmatpush2.msra.mxu0 0.0
    %3478 = vmatprep.subr.mxu0 0.0
    %3479 = vmatpush2.msra.mxu0 0.0
    %3480 = vmatprep.subr.mxu0 0.0
    %3481 = vmatpush2.msra.mxu0 0.0
    %3482 = vmatprep.subr.mxu0 0.0
    %3483 = vmatpush2.msra.mxu0 0.0
    %3484 = vmatprep.subr.mxu0 0.0
    %3485 = vmatpush2.msra.mxu0 0.0
    %3486 = vmatprep.subr.mxu0 0.0
    %3487 = vmatpush2.msra.mxu0 0.0
    %3488 = vmatprep.subr.mxu0 0.0
    %3489 = vmatpush2.msra.mxu0 0.0
    %3490 = vmatprep.subr.mxu0 0.0
    %3491 = vmatpush2.msra.mxu0 0.0
    %3492 = vmatprep.subr.mxu0 0.0
    %3493 = vmatpush2.msra.mxu0 0.0
    %3494 = vmatprep.subr.mxu0 0.0
    %3495 = vmatpush2.msra.mxu0 0.0
    %3496 = vmatprep.subr.mxu0 0.0
    %3497 = vmatpush2.msra.mxu0 0.0
    %3498 = vmatprep.subr.mxu0 0.0
    %3499 = vmatpush2.msra.mxu0 0.0
    %3500 = vmatprep.subr.mxu0 0.0
    %3501 = vmatpush2.msra.mxu0 0.0
    %3502 = vmatprep.subr.mxu0 0.0
    %3503 = vmatpush2.msra.mxu0 0.0
    %3504 = vmatprep.subr.mxu0 0.0
    %3505 = vmatpush2.msra.mxu0 0.0
    %3506 = vmatprep.subr.mxu0 0.0
    %3507 = vmatpush2.msra.mxu0 0.0
    %3508 = vmatprep.mubr.f32.mxu0 0.0
    %v3509 = vand.u32 %v3434, 4294901760
    %v3510 = vsub.f32 %v3434, %v3509
    %v3511 = vand.u32 %v3510, 4294901760
    %v3512 = vsub.f32 %v3510, %v3511
    %v3513 = vand.u32 %v3512, 4294901760
    %3514 = vmatmul.mubr.f32.gmra.mxu0 %v3513
    %v3515 = vpop.f32.mrf.mxu0
    %v3516 = vadd.f32 %v52, %v3515
    %v3517 = vpop.f32.mrf.mxu0
    %3518 = vdwg.mxu0
    %3519 = vmatprep.subr.mxu0 0.0
    %3520 = vmatpush1.msra.mxu0 0.0
    %3521 = vmatprep.subr.mxu0 0.0
    %3522 = vmatpush1.msra.mxu0 0.0
    %3523 = vmatprep.subr.mxu0 0.0
    %3524 = vmatpush1.msra.mxu0 0.0
    %3525 = vmatprep.subr.mxu0 0.0
    %3526 = vmatpush1.msra.mxu0 0.0
    %3527 = vmatprep.subr.mxu0 0.0
    %3528 = vmatpush1.msra.mxu0 0.0
    %3529 = vmatprep.subr.mxu0 0.0
    %3530 = vmatpush1.msra.mxu0 0.0
    %3531 = vmatprep.subr.mxu0 0.0
    %3532 = vmatpush1.msra.mxu0 0.0
    %3533 = vmatprep.subr.mxu0 0.0
    %3534 = vmatpush1.msra.mxu0 0.0
    %3535 = vmatprep.subr.mxu0 0.0
    %v3536 = vand.u32 %v37, 4294901760
    %v3537 = vsub.f32 %v37, %v3536
    %v3538 = vand.u32 %v3537, 4294901760
    %v3539 = vsub.f32 %v3537, %v3538
    %v3540 = vand.u32 %v3539, 4294901760
    %3541 = vmatpush1.msra.mxu0 %v3540
    %3542 = vmatprep.subr.mxu0 0.0
    %v3543 = vand.u32 %v36, 4294901760
    %v3544 = vsub.f32 %v36, %v3543
    %v3545 = vand.u32 %v3544, 4294901760
    %v3546 = vsub.f32 %v3544, %v3545
    %v3547 = vand.u32 %v3546, 4294901760
    %3548 = vmatpush1.msra.mxu0 %v3547
    %3549 = vmatprep.subr.mxu0 0.0
    %v3550 = vand.u32 %v35, 4294901760
    %v3551 = vsub.f32 %v35, %v3550
    %v3552 = vand.u32 %v3551, 4294901760
    %v3553 = vsub.f32 %v3551, %v3552
    %v3554 = vand.u32 %v3553, 4294901760
    %3555 = vmatpush1.msra.mxu0 %v3554
    %3556 = vmatprep.subr.mxu0 0.0
    %v3557 = vand.u32 %v34, 4294901760
    %v3558 = vsub.f32 %v34, %v3557
    %v3559 = vand.u32 %v3558, 4294901760
    %v3560 = vsub.f32 %v3558, %v3559
    %v3561 = vand.u32 %v3560, 4294901760
    %3562 = vmatpush1.msra.mxu0 %v3561
    %3563 = vmatprep.subr.mxu0 0.0
    %v3564 = vand.u32 %v33, 4294901760
    %v3565 = vsub.f32 %v33, %v3564
    %v3566 = vand.u32 %v3565, 4294901760
    %v3567 = vsub.f32 %v3565, %v3566
    %v3568 = vand.u32 %v3567, 4294901760
    %3569 = vmatpush1.msra.mxu0 %v3568
    %3570 = vmatprep.subr.mxu0 0.0
    %v3571 = vand.u32 %v32, 4294901760
    %v3572 = vsub.f32 %v32, %v3571
    %v3573 = vand.u32 %v3572, 4294901760
    %v3574 = vsub.f32 %v3572, %v3573
    %v3575 = vand.u32 %v3574, 4294901760
    %3576 = vmatpush1.msra.mxu0 %v3575
    %3577 = vmatprep.subr.mxu0 0.0
    %v3578 = vand.u32 %v31, 4294901760
    %v3579 = vsub.f32 %v31, %v3578
    %v3580 = vand.u32 %v3579, 4294901760
    %v3581 = vsub.f32 %v3579, %v3580
    %v3582 = vand.u32 %v3581, 4294901760
    %3583 = vmatpush1.msra.mxu0 %v3582
    %3584 = vmatprep.subr.mxu0 0.0
    %v3585 = vand.u32 %v30, 4294901760
    %v3586 = vsub.f32 %v30, %v3585
    %v3587 = vand.u32 %v3586, 4294901760
    %v3588 = vsub.f32 %v3586, %v3587
    %v3589 = vand.u32 %v3588, 4294901760
    %3590 = vmatpush1.msra.mxu0 %v3589
    %3591 = vmatprep.subr.mxu0 0.0
    %3592 = vmatpush2.msra.mxu0 0.0
    %3593 = vmatprep.subr.mxu0 0.0
    %3594 = vmatpush2.msra.mxu0 0.0
    %3595 = vmatprep.subr.mxu0 0.0
    %3596 = vmatpush2.msra.mxu0 0.0
    %3597 = vmatprep.subr.mxu0 0.0
    %3598 = vmatpush2.msra.mxu0 0.0
    %3599 = vmatprep.subr.mxu0 0.0
    %3600 = vmatpush2.msra.mxu0 0.0
    %3601 = vmatprep.subr.mxu0 0.0
    %3602 = vmatpush2.msra.mxu0 0.0
    %3603 = vmatprep.subr.mxu0 0.0
    %3604 = vmatpush2.msra.mxu0 0.0
    %3605 = vmatprep.subr.mxu0 0.0
    %3606 = vmatpush2.msra.mxu0 0.0
    %3607 = vmatprep.subr.mxu0 0.0
    %3608 = vmatpush2.msra.mxu0 0.0
    %3609 = vmatprep.subr.mxu0 0.0
    %3610 = vmatpush2.msra.mxu0 0.0
    %3611 = vmatprep.subr.mxu0 0.0
    %3612 = vmatpush2.msra.mxu0 0.0
    %3613 = vmatprep.subr.mxu0 0.0
    %3614 = vmatpush2.msra.mxu0 0.0
    %3615 = vmatprep.subr.mxu0 0.0
    %3616 = vmatpush2.msra.mxu0 0.0
    %3617 = vmatprep.subr.mxu0 0.0
    %3618 = vmatpush2.msra.mxu0 0.0
    %3619 = vmatprep.subr.mxu0 0.0
    %3620 = vmatpush2.msra.mxu0 0.0
    %3621 = vmatprep.subr.mxu0 0.0
    %3622 = vmatpush2.msra.mxu0 0.0
    %3623 = vmatprep.mubr.f32.mxu0 0.0
    %v3624 = vand.u32 %v3434, 4294901760
    %3625 = vmatmul.mubr.f32.gmra.mxu0 %v3624
    %v3626 = vpop.f32.mrf.mxu0
    %v3627 = vadd.f32 %v3516, %v3626
    %v3628 = vpop.f32.mrf.mxu0
    %3629 = vdwg.mxu0
    %3630 = vmatprep.subr.mxu0 0.0
    %3631 = vmatpush1.msra.mxu0 0.0
    %3632 = vmatprep.subr.mxu0 0.0
    %3633 = vmatpush1.msra.mxu0 0.0
    %3634 = vmatprep.subr.mxu0 0.0
    %3635 = vmatpush1.msra.mxu0 0.0
    %3636 = vmatprep.subr.mxu0 0.0
    %3637 = vmatpush1.msra.mxu0 0.0
    %3638 = vmatprep.subr.mxu0 0.0
    %3639 = vmatpush1.msra.mxu0 0.0
    %3640 = vmatprep.subr.mxu0 0.0
    %3641 = vmatpush1.msra.mxu0 0.0
    %3642 = vmatprep.subr.mxu0 0.0
    %3643 = vmatpush1.msra.mxu0 0.0
    %3644 = vmatprep.subr.mxu0 0.0
    %3645 = vmatpush1.msra.mxu0 0.0
    %3646 = vmatprep.subr.mxu0 0.0
    %v3647 = vand.u32 %v37, 4294901760
    %v3648 = vsub.f32 %v37, %v3647
    %3649 = vmatpush1.msra.mxu0 %v3648
    %3650 = vmatprep.subr.mxu0 0.0
    %v3651 = vand.u32 %v36, 4294901760
    %v3652 = vsub.f32 %v36, %v3651
    %3653 = vmatpush1.msra.mxu0 %v3652
    %3654 = vmatprep.subr.mxu0 0.0
    %v3655 = vand.u32 %v35, 4294901760
    %v3656 = vsub.f32 %v35, %v3655
    %3657 = vmatpush1.msra.mxu0 %v3656
    %3658 = vmatprep.subr.mxu0 0.0
    %v3659 = vand.u32 %v34, 4294901760
    %v3660 = vsub.f32 %v34, %v3659
    %3661 = vmatpush1.msra.mxu0 %v3660
    %3662 = vmatprep.subr.mxu0 0.0
    %v3663 = vand.u32 %v33, 4294901760
    %v3664 = vsub.f32 %v33, %v3663
    %3665 = vmatpush1.msra.mxu0 %v3664
    %3666 = vmatprep.subr.mxu0 0.0
    %v3667 = vand.u32 %v32, 4294901760
    %v3668 = vsub.f32 %v32, %v3667
    %3669 = vmatpush1.msra.mxu0 %v3668
    %3670 = vmatprep.subr.mxu0 0.0
    %v3671 = vand.u32 %v31, 4294901760
    %v3672 = vsub.f32 %v31, %v3671
    %3673 = vmatpush1.msra.mxu0 %v3672
    %3674 = vmatprep.subr.mxu0 0.0
    %v3675 = vand.u32 %v30, 4294901760
    %v3676 = vsub.f32 %v30, %v3675
    %3677 = vmatpush1.msra.mxu0 %v3676
    %3678 = vmatprep.subr.mxu0 0.0
    %3679 = vmatpush2.msra.mxu0 0.0
    %3680 = vmatprep.subr.mxu0 0.0
    %3681 = vmatpush2.msra.mxu0 0.0
    %3682 = vmatprep.subr.mxu0 0.0
    %3683 = vmatpush2.msra.mxu0 0.0
    %3684 = vmatprep.subr.mxu0 0.0
    %3685 = vmatpush2.msra.mxu0 0.0
    %3686 = vmatprep.subr.mxu0 0.0
    %3687 = vmatpush2.msra.mxu0 0.0
    %3688 = vmatprep.subr.mxu0 0.0
    %3689 = vmatpush2.msra.mxu0 0.0
    %3690 = vmatprep.subr.mxu0 0.0
    %3691 = vmatpush2.msra.mxu0 0.0
    %3692 = vmatprep.subr.mxu0 0.0
    %3693 = vmatpush2.msra.mxu0 0.0
    %3694 = vmatprep.subr.mxu0 0.0
    %3695 = vmatpush2.msra.mxu0 0.0
    %3696 = vmatprep.subr.mxu0 0.0
    %3697 = vmatpush2.msra.mxu0 0.0
    %3698 = vmatprep.subr.mxu0 0.0
    %3699 = vmatpush2.msra.mxu0 0.0
    %3700 = vmatprep.subr.mxu0 0.0
    %3701 = vmatpush2.msra.mxu0 0.0
    %3702 = vmatprep.subr.mxu0 0.0
    %3703 = vmatpush2.msra.mxu0 0.0
    %3704 = vmatprep.subr.mxu0 0.0
    %3705 = vmatpush2.msra.mxu0 0.0
    %3706 = vmatprep.subr.mxu0 0.0
    %3707 = vmatpush2.msra.mxu0 0.0
    %3708 = vmatprep.subr.mxu0 0.0
    %3709 = vmatpush2.msra.mxu0 0.0
    %3710 = vmatprep.mubr.f32.mxu0 0.0
    %v3711 = vand.u32 %v3434, 4294901760
    %v3712 = vsub.f32 %v3434, %v3711
    %3713 = vmatmul.mubr.f32.gmra.mxu0 %v3712
    %v3714 = vpop.f32.mrf.mxu0
    %v3715 = vadd.f32 %v3627, %v3714
    %v3716 = vpop.f32.mrf.mxu0
    %3717 = vdwg.mxu0
    %3718 = vmatprep.subr.mxu0 0.0
    %3719 = vmatpush1.msra.mxu0 0.0
    %3720 = vmatprep.subr.mxu0 0.0
    %3721 = vmatpush1.msra.mxu0 0.0
    %3722 = vmatprep.subr.mxu0 0.0
    %3723 = vmatpush1.msra.mxu0 0.0
    %3724 = vmatprep.subr.mxu0 0.0
    %3725 = vmatpush1.msra.mxu0 0.0
    %3726 = vmatprep.subr.mxu0 0.0
    %3727 = vmatpush1.msra.mxu0 0.0
    %3728 = vmatprep.subr.mxu0 0.0
    %3729 = vmatpush1.msra.mxu0 0.0
    %3730 = vmatprep.subr.mxu0 0.0
    %3731 = vmatpush1.msra.mxu0 0.0
    %3732 = vmatprep.subr.mxu0 0.0
    %3733 = vmatpush1.msra.mxu0 0.0
    %3734 = vmatprep.subr.mxu0 0.0
    %v3735 = vand.u32 %v37, 4294901760
    %3736 = vmatpush1.msra.mxu0 %v3735
    %3737 = vmatprep.subr.mxu0 0.0
    %v3738 = vand.u32 %v36, 4294901760
    %3739 = vmatpush1.msra.mxu0 %v3738
    %3740 = vmatprep.subr.mxu0 0.0
    %v3741 = vand.u32 %v35, 4294901760
    %3742 = vmatpush1.msra.mxu0 %v3741
    %3743 = vmatprep.subr.mxu0 0.0
    %v3744 = vand.u32 %v34, 4294901760
    %3745 = vmatpush1.msra.mxu0 %v3744
    %3746 = vmatprep.subr.mxu0 0.0
    %v3747 = vand.u32 %v33, 4294901760
    %3748 = vmatpush1.msra.mxu0 %v3747
    %3749 = vmatprep.subr.mxu0 0.0
    %v3750 = vand.u32 %v32, 4294901760
    %3751 = vmatpush1.msra.mxu0 %v3750
    %3752 = vmatprep.subr.mxu0 0.0
    %v3753 = vand.u32 %v31, 4294901760
    %3754 = vmatpush1.msra.mxu0 %v3753
    %3755 = vmatprep.subr.mxu0 0.0
    %v3756 = vand.u32 %v30, 4294901760
    %3757 = vmatpush1.msra.mxu0 %v3756
    %3758 = vmatprep.subr.mxu0 0.0
    %3759 = vmatpush2.msra.mxu0 0.0
    %3760 = vmatprep.subr.mxu0 0.0
    %3761 = vmatpush2.msra.mxu0 0.0
    %3762 = vmatprep.subr.mxu0 0.0
    %3763 = vmatpush2.msra.mxu0 0.0
    %3764 = vmatprep.subr.mxu0 0.0
    %3765 = vmatpush2.msra.mxu0 0.0
    %3766 = vmatprep.subr.mxu0 0.0
    %3767 = vmatpush2.msra.mxu0 0.0
    %3768 = vmatprep.subr.mxu0 0.0
    %3769 = vmatpush2.msra.mxu0 0.0
    %3770 = vmatprep.subr.mxu0 0.0
    %3771 = vmatpush2.msra.mxu0 0.0
    %3772 = vmatprep.subr.mxu0 0.0
    %3773 = vmatpush2.msra.mxu0 0.0
    %3774 = vmatprep.subr.mxu0 0.0
    %3775 = vmatpush2.msra.mxu0 0.0
    %3776 = vmatprep.subr.mxu0 0.0
    %3777 = vmatpush2.msra.mxu0 0.0
    %3778 = vmatprep.subr.mxu0 0.0
    %3779 = vmatpush2.msra.mxu0 0.0
    %3780 = vmatprep.subr.mxu0 0.0
    %3781 = vmatpush2.msra.mxu0 0.0
    %3782 = vmatprep.subr.mxu0 0.0
    %3783 = vmatpush2.msra.mxu0 0.0
    %3784 = vmatprep.subr.mxu0 0.0
    %3785 = vmatpush2.msra.mxu0 0.0
    %3786 = vmatprep.subr.mxu0 0.0
    %3787 = vmatpush2.msra.mxu0 0.0
    %3788 = vmatprep.subr.mxu0 0.0
    %3789 = vmatpush2.msra.mxu0 0.0
    %3790 = vmatprep.mubr.f32.mxu0 0.0
    %v3791 = vand.u32 %v3434, 4294901760
    %v3792 = vsub.f32 %v3434, %v3791
    %v3793 = vand.u32 %v3792, 4294901760
    %3794 = vmatmul.mubr.f32.gmra.mxu0 %v3793
    %v3795 = vpop.f32.mrf.mxu0
    %v3796 = vadd.f32 %v3715, %v3795
    %v3797 = vpop.f32.mrf.mxu0
    %3798 = vdwg.mxu0
    %3799 = vmatprep.subr.mxu0 0.0
    %3800 = vmatpush1.msra.mxu0 0.0
    %3801 = vmatprep.subr.mxu0 0.0
    %3802 = vmatpush1.msra.mxu0 0.0
    %3803 = vmatprep.subr.mxu0 0.0
    %3804 = vmatpush1.msra.mxu0 0.0
    %3805 = vmatprep.subr.mxu0 0.0
    %3806 = vmatpush1.msra.mxu0 0.0
    %3807 = vmatprep.subr.mxu0 0.0
    %3808 = vmatpush1.msra.mxu0 0.0
    %3809 = vmatprep.subr.mxu0 0.0
    %3810 = vmatpush1.msra.mxu0 0.0
    %3811 = vmatprep.subr.mxu0 0.0
    %3812 = vmatpush1.msra.mxu0 0.0
    %3813 = vmatprep.subr.mxu0 0.0
    %3814 = vmatpush1.msra.mxu0 0.0
    %3815 = vmatprep.subr.mxu0 0.0
    %v3816 = vand.u32 %v37, 4294901760
    %v3817 = vsub.f32 %v37, %v3816
    %v3818 = vand.u32 %v3817, 4294901760
    %3819 = vmatpush1.msra.mxu0 %v3818
    %3820 = vmatprep.subr.mxu0 0.0
    %v3821 = vand.u32 %v36, 4294901760
    %v3822 = vsub.f32 %v36, %v3821
    %v3823 = vand.u32 %v3822, 4294901760
    %3824 = vmatpush1.msra.mxu0 %v3823
    %3825 = vmatprep.subr.mxu0 0.0
    %v3826 = vand.u32 %v35, 4294901760
    %v3827 = vsub.f32 %v35, %v3826
    %v3828 = vand.u32 %v3827, 4294901760
    %3829 = vmatpush1.msra.mxu0 %v3828
    %3830 = vmatprep.subr.mxu0 0.0
    %v3831 = vand.u32 %v34, 4294901760
    %v3832 = vsub.f32 %v34, %v3831
    %v3833 = vand.u32 %v3832, 4294901760
    %3834 = vmatpush1.msra.mxu0 %v3833
    %3835 = vmatprep.subr.mxu0 0.0
    %v3836 = vand.u32 %v33, 4294901760
    %v3837 = vsub.f32 %v33, %v3836
    %v3838 = vand.u32 %v3837, 4294901760
    %3839 = vmatpush1.msra.mxu0 %v3838
    %3840 = vmatprep.subr.mxu0 0.0
    %v3841 = vand.u32 %v32, 4294901760
    %v3842 = vsub.f32 %v32, %v3841
    %v3843 = vand.u32 %v3842, 4294901760
    %3844 = vmatpush1.msra.mxu0 %v3843
    %3845 = vmatprep.subr.mxu0 0.0
    %v3846 = vand.u32 %v31, 4294901760
    %v3847 = vsub.f32 %v31, %v3846
    %v3848 = vand.u32 %v3847, 4294901760
    %3849 = vmatpush1.msra.mxu0 %v3848
    %3850 = vmatprep.subr.mxu0 0.0
    %v3851 = vand.u32 %v30, 4294901760
    %v3852 = vsub.f32 %v30, %v3851
    %v3853 = vand.u32 %v3852, 4294901760
    %3854 = vmatpush1.msra.mxu0 %v3853
    %3855 = vmatprep.subr.mxu0 0.0
    %3856 = vmatpush2.msra.mxu0 0.0
    %3857 = vmatprep.subr.mxu0 0.0
    %3858 = vmatpush2.msra.mxu0 0.0
    %3859 = vmatprep.subr.mxu0 0.0
    %3860 = vmatpush2.msra.mxu0 0.0
    %3861 = vmatprep.subr.mxu0 0.0
    %3862 = vmatpush2.msra.mxu0 0.0
    %3863 = vmatprep.subr.mxu0 0.0
    %3864 = vmatpush2.msra.mxu0 0.0
    %3865 = vmatprep.subr.mxu0 0.0
    %3866 = vmatpush2.msra.mxu0 0.0
    %3867 = vmatprep.subr.mxu0 0.0
    %3868 = vmatpush2.msra.mxu0 0.0
    %3869 = vmatprep.subr.mxu0 0.0
    %3870 = vmatpush2.msra.mxu0 0.0
    %3871 = vmatprep.subr.mxu0 0.0
    %3872 = vmatpush2.msra.mxu0 0.0
    %3873 = vmatprep.subr.mxu0 0.0
    %3874 = vmatpush2.msra.mxu0 0.0
    %3875 = vmatprep.subr.mxu0 0.0
    %3876 = vmatpush2.msra.mxu0 0.0
    %3877 = vmatprep.subr.mxu0 0.0
    %3878 = vmatpush2.msra.mxu0 0.0
    %3879 = vmatprep.subr.mxu0 0.0
    %3880 = vmatpush2.msra.mxu0 0.0
    %3881 = vmatprep.subr.mxu0 0.0
    %3882 = vmatpush2.msra.mxu0 0.0
    %3883 = vmatprep.subr.mxu0 0.0
    %3884 = vmatpush2.msra.mxu0 0.0
    %3885 = vmatprep.subr.mxu0 0.0
    %3886 = vmatpush2.msra.mxu0 0.0
    %3887 = vmatprep.mubr.f32.mxu0 0.0
    %v3888 = vand.u32 %v3434, 4294901760
    %3889 = vmatmul.mubr.f32.gmra.mxu0 %v3888
    %v3890 = vpop.f32.mrf.mxu0
    %v3891 = vadd.f32 %v3796, %v3890
    %v3892 = vpop.f32.mrf.mxu0
    %3893 = vdwg.mxu0
    %3894 = vmatprep.subr.mxu0 0.0
    %3895 = vmatpush1.msra.mxu0 0.0
    %3896 = vmatprep.subr.mxu0 0.0
    %3897 = vmatpush1.msra.mxu0 0.0
    %3898 = vmatprep.subr.mxu0 0.0
    %3899 = vmatpush1.msra.mxu0 0.0
    %3900 = vmatprep.subr.mxu0 0.0
    %3901 = vmatpush1.msra.mxu0 0.0
    %3902 = vmatprep.subr.mxu0 0.0
    %3903 = vmatpush1.msra.mxu0 0.0
    %3904 = vmatprep.subr.mxu0 0.0
    %3905 = vmatpush1.msra.mxu0 0.0
    %3906 = vmatprep.subr.mxu0 0.0
    %3907 = vmatpush1.msra.mxu0 0.0
    %3908 = vmatprep.subr.mxu0 0.0
    %3909 = vmatpush1.msra.mxu0 0.0
    %3910 = vmatprep.subr.mxu0 0.0
    %v3911 = vand.u32 %v37, 4294901760
    %3912 = vmatpush1.msra.mxu0 %v3911
    %3913 = vmatprep.subr.mxu0 0.0
    %v3914 = vand.u32 %v36, 4294901760
    %3915 = vmatpush1.msra.mxu0 %v3914
    %3916 = vmatprep.subr.mxu0 0.0
    %v3917 = vand.u32 %v35, 4294901760
    %3918 = vmatpush1.msra.mxu0 %v3917
    %3919 = vmatprep.subr.mxu0 0.0
    %v3920 = vand.u32 %v34, 4294901760
    %3921 = vmatpush1.msra.mxu0 %v3920
    %3922 = vmatprep.subr.mxu0 0.0
    %v3923 = vand.u32 %v33, 4294901760
    %3924 = vmatpush1.msra.mxu0 %v3923
    %3925 = vmatprep.subr.mxu0 0.0
    %v3926 = vand.u32 %v32, 4294901760
    %3927 = vmatpush1.msra.mxu0 %v3926
    %3928 = vmatprep.subr.mxu0 0.0
    %v3929 = vand.u32 %v31, 4294901760
    %3930 = vmatpush1.msra.mxu0 %v3929
    %3931 = vmatprep.subr.mxu0 0.0
    %v3932 = vand.u32 %v30, 4294901760
    %3933 = vmatpush1.msra.mxu0 %v3932
    %3934 = vmatprep.subr.mxu0 0.0
    %3935 = vmatpush2.msra.mxu0 0.0
    %3936 = vmatprep.subr.mxu0 0.0
    %3937 = vmatpush2.msra.mxu0 0.0
    %3938 = vmatprep.subr.mxu0 0.0
    %3939 = vmatpush2.msra.mxu0 0.0
    %3940 = vmatprep.subr.mxu0 0.0
    %3941 = vmatpush2.msra.mxu0 0.0
    %3942 = vmatprep.subr.mxu0 0.0
    %3943 = vmatpush2.msra.mxu0 0.0
    %3944 = vmatprep.subr.mxu0 0.0
    %3945 = vmatpush2.msra.mxu0 0.0
    %3946 = vmatprep.subr.mxu0 0.0
    %3947 = vmatpush2.msra.mxu0 0.0
    %3948 = vmatprep.subr.mxu0 0.0
    %3949 = vmatpush2.msra.mxu0 0.0
    %3950 = vmatprep.subr.mxu0 0.0
    %3951 = vmatpush2.msra.mxu0 0.0
    %3952 = vmatprep.subr.mxu0 0.0
    %3953 = vmatpush2.msra.mxu0 0.0
    %3954 = vmatprep.subr.mxu0 0.0
    %3955 = vmatpush2.msra.mxu0 0.0
    %3956 = vmatprep.subr.mxu0 0.0
    %3957 = vmatpush2.msra.mxu0 0.0
    %3958 = vmatprep.subr.mxu0 0.0
    %3959 = vmatpush2.msra.mxu0 0.0
    %3960 = vmatprep.subr.mxu0 0.0
    %3961 = vmatpush2.msra.mxu0 0.0
    %3962 = vmatprep.subr.mxu0 0.0
    %3963 = vmatpush2.msra.mxu0 0.0
    %3964 = vmatprep.subr.mxu0 0.0
    %3965 = vmatpush2.msra.mxu0 0.0
    %3966 = vmatprep.mubr.f32.mxu0 0.0
    %v3967 = vand.u32 %v3434, 4294901760
    %3968 = vmatmul.mubr.f32.gmra.mxu0 %v3967
    %v3969 = vpop.f32.mrf.mxu0
    %v3970 = vadd.f32 %v3891, %v3969
    %v3971 = vpop.f32.mrf.mxu0
    %3972 = vdwg.mxu0
    %v3973 = vld [vmem:[%s1] sm:$0x3]
    %3975 = vset.pattern.permute.xlu0 6
    %3976 = vperm.xlu0 %3975, %v3973
    %v3977 = vpop.permute.xlu0 %3976
    %v3979 = vmul.f32 %v3970, %v3977
    %v3982 = vunpack.c.l.s4 1983009808
    %v3983 = vunpack.c.0.s8 %v3982
    %v3984 = vlaneseq
    %v3985 = vshrl.u32 %v3984, 7
    %v3986 = vsub.s32 %v3983, %v3985
    %v3987 = vrot.slane %v3979, %v3986
    %3988 = vrot.lane.b32.xlu0 %v3987, 64
    %v3989 = vpop.permute.xlu0 %3988
    %3991 = vst.msk [vmem:[#allocation4 + $0x2] sm:$0x3] %vm1736, %v3989
    %v3992 = vld [vmem:[%s0] sm:$0x3]
    %3993 = vset.pattern.permute.xlu0 7
    %3994 = vperm.xlu0 %3993, %v3992
    %v3995 = vpop.permute.xlu0 %3994
    %vm3996 = vcmp.eq.s32.totalorder %v40, %v3995
    %v3997 = vsel %vm3996, 1, 0
    %v3998 = vcvt.s32.f32 %v3997
    %v4000 = vsel %vm54, %v3998, 0
    %4002 = vmatprep.subr.mxu0 0.0
    %4003 = vmatpush1.msra.mxu0 0.0
    %4004 = vmatprep.subr.mxu0 0.0
    %4005 = vmatpush1.msra.mxu0 0.0
    %4006 = vmatprep.subr.mxu0 0.0
    %4007 = vmatpush1.msra.mxu0 0.0
    %4008 = vmatprep.subr.mxu0 0.0
    %4009 = vmatpush1.msra.mxu0 0.0
    %4010 = vmatprep.subr.mxu0 0.0
    %4011 = vmatpush1.msra.mxu0 0.0
    %4012 = vmatprep.subr.mxu0 0.0
    %4013 = vmatpush1.msra.mxu0 0.0
    %4014 = vmatprep.subr.mxu0 0.0
    %4015 = vmatpush1.msra.mxu0 0.0
    %4016 = vmatprep.subr.mxu0 0.0
    %4017 = vmatpush1.msra.mxu0 0.0
    %4018 = vmatprep.subr.mxu0 0.0
    %v4019 = vand.u32 %v37, 4294901760
    %4020 = vmatpush1.msra.mxu0 %v4019
    %4021 = vmatprep.subr.mxu0 0.0
    %v4022 = vand.u32 %v36, 4294901760
    %4023 = vmatpush1.msra.mxu0 %v4022
    %4024 = vmatprep.subr.mxu0 0.0
    %v4025 = vand.u32 %v35, 4294901760
    %4026 = vmatpush1.msra.mxu0 %v4025
    %4027 = vmatprep.subr.mxu0 0.0
    %v4028 = vand.u32 %v34, 4294901760
    %4029 = vmatpush1.msra.mxu0 %v4028
    %4030 = vmatprep.subr.mxu0 0.0
    %v4031 = vand.u32 %v33, 4294901760
    %4032 = vmatpush1.msra.mxu0 %v4031
    %4033 = vmatprep.subr.mxu0 0.0
    %v4034 = vand.u32 %v32, 4294901760
    %4035 = vmatpush1.msra.mxu0 %v4034
    %4036 = vmatprep.subr.mxu0 0.0
    %v4037 = vand.u32 %v31, 4294901760
    %4038 = vmatpush1.msra.mxu0 %v4037
    %4039 = vmatprep.subr.mxu0 0.0
    %v4040 = vand.u32 %v30, 4294901760
    %4041 = vmatpush1.msra.mxu0 %v4040
    %4042 = vmatprep.subr.mxu0 0.0
    %4043 = vmatpush2.msra.mxu0 0.0
    %4044 = vmatprep.subr.mxu0 0.0
    %4045 = vmatpush2.msra.mxu0 0.0
    %4046 = vmatprep.subr.mxu0 0.0
    %4047 = vmatpush2.msra.mxu0 0.0
    %4048 = vmatprep.subr.mxu0 0.0
    %4049 = vmatpush2.msra.mxu0 0.0
    %4050 = vmatprep.subr.mxu0 0.0
    %4051 = vmatpush2.msra.mxu0 0.0
    %4052 = vmatprep.subr.mxu0 0.0
    %4053 = vmatpush2.msra.mxu0 0.0
    %4054 = vmatprep.subr.mxu0 0.0
    %4055 = vmatpush2.msra.mxu0 0.0
    %4056 = vmatprep.subr.mxu0 0.0
    %4057 = vmatpush2.msra.mxu0 0.0
    %4058 = vmatprep.subr.mxu0 0.0
    %4059 = vmatpush2.msra.mxu0 0.0
    %4060 = vmatprep.subr.mxu0 0.0
    %4061 = vmatpush2.msra.mxu0 0.0
    %4062 = vmatprep.subr.mxu0 0.0
    %4063 = vmatpush2.msra.mxu0 0.0
    %4064 = vmatprep.subr.mxu0 0.0
    %4065 = vmatpush2.msra.mxu0 0.0
    %4066 = vmatprep.subr.mxu0 0.0
    %4067 = vmatpush2.msra.mxu0 0.0
    %4068 = vmatprep.subr.mxu0 0.0
    %4069 = vmatpush2.msra.mxu0 0.0
    %4070 = vmatprep.subr.mxu0 0.0
    %4071 = vmatpush2.msra.mxu0 0.0
    %4072 = vmatprep.subr.mxu0 0.0
    %4073 = vmatpush2.msra.mxu0 0.0
    %4074 = vmatprep.mubr.f32.mxu0 0.0
    %v4075 = vand.u32 %v4000, 4294901760
    %v4076 = vsub.f32 %v4000, %v4075
    %v4077 = vand.u32 %v4076, 4294901760
    %v4078 = vsub.f32 %v4076, %v4077
    %v4079 = vand.u32 %v4078, 4294901760
    %4080 = vmatmul.mubr.f32.gmra.mxu0 %v4079
    %v4081 = vpop.f32.mrf.mxu0
    %v4082 = vadd.f32 %v52, %v4081
    %v4083 = vpop.f32.mrf.mxu0
    %4084 = vdwg.mxu0
    %4085 = vmatprep.subr.mxu0 0.0
    %4086 = vmatpush1.msra.mxu0 0.0
    %4087 = vmatprep.subr.mxu0 0.0
    %4088 = vmatpush1.msra.mxu0 0.0
    %4089 = vmatprep.subr.mxu0 0.0
    %4090 = vmatpush1.msra.mxu0 0.0
    %4091 = vmatprep.subr.mxu0 0.0
    %4092 = vmatpush1.msra.mxu0 0.0
    %4093 = vmatprep.subr.mxu0 0.0
    %4094 = vmatpush1.msra.mxu0 0.0
    %4095 = vmatprep.subr.mxu0 0.0
    %4096 = vmatpush1.msra.mxu0 0.0
    %4097 = vmatprep.subr.mxu0 0.0
    %4098 = vmatpush1.msra.mxu0 0.0
    %4099 = vmatprep.subr.mxu0 0.0
    %4100 = vmatpush1.msra.mxu0 0.0
    %4101 = vmatprep.subr.mxu0 0.0
    %v4102 = vand.u32 %v37, 4294901760
    %v4103 = vsub.f32 %v37, %v4102
    %v4104 = vand.u32 %v4103, 4294901760
    %v4105 = vsub.f32 %v4103, %v4104
    %v4106 = vand.u32 %v4105, 4294901760
    %4107 = vmatpush1.msra.mxu0 %v4106
    %4108 = vmatprep.subr.mxu0 0.0
    %v4109 = vand.u32 %v36, 4294901760
    %v4110 = vsub.f32 %v36, %v4109
    %v4111 = vand.u32 %v4110, 4294901760
    %v4112 = vsub.f32 %v4110, %v4111
    %v4113 = vand.u32 %v4112, 4294901760
    %4114 = vmatpush1.msra.mxu0 %v4113
    %4115 = vmatprep.subr.mxu0 0.0
    %v4116 = vand.u32 %v35, 4294901760
    %v4117 = vsub.f32 %v35, %v4116
    %v4118 = vand.u32 %v4117, 4294901760
    %v4119 = vsub.f32 %v4117, %v4118
    %v4120 = vand.u32 %v4119, 4294901760
    %4121 = vmatpush1.msra.mxu0 %v4120
    %4122 = vmatprep.subr.mxu0 0.0
    %v4123 = vand.u32 %v34, 4294901760
    %v4124 = vsub.f32 %v34, %v4123
    %v4125 = vand.u32 %v4124, 4294901760
    %v4126 = vsub.f32 %v4124, %v4125
    %v4127 = vand.u32 %v4126, 4294901760
    %4128 = vmatpush1.msra.mxu0 %v4127
    %4129 = vmatprep.subr.mxu0 0.0
    %v4130 = vand.u32 %v33, 4294901760
    %v4131 = vsub.f32 %v33, %v4130
    %v4132 = vand.u32 %v4131, 4294901760
    %v4133 = vsub.f32 %v4131, %v4132
    %v4134 = vand.u32 %v4133, 4294901760
    %4135 = vmatpush1.msra.mxu0 %v4134
    %4136 = vmatprep.subr.mxu0 0.0
    %v4137 = vand.u32 %v32, 4294901760
    %v4138 = vsub.f32 %v32, %v4137
    %v4139 = vand.u32 %v4138, 4294901760
    %v4140 = vsub.f32 %v4138, %v4139
    %v4141 = vand.u32 %v4140, 4294901760
    %4142 = vmatpush1.msra.mxu0 %v4141
    %4143 = vmatprep.subr.mxu0 0.0
    %v4144 = vand.u32 %v31, 4294901760
    %v4145 = vsub.f32 %v31, %v4144
    %v4146 = vand.u32 %v4145, 4294901760
    %v4147 = vsub.f32 %v4145, %v4146
    %v4148 = vand.u32 %v4147, 4294901760
    %4149 = vmatpush1.msra.mxu0 %v4148
    %4150 = vmatprep.subr.mxu0 0.0
    %v4151 = vand.u32 %v30, 4294901760
    %v4152 = vsub.f32 %v30, %v4151
    %v4153 = vand.u32 %v4152, 4294901760
    %v4154 = vsub.f32 %v4152, %v4153
    %v4155 = vand.u32 %v4154, 4294901760
    %4156 = vmatpush1.msra.mxu0 %v4155
    %4157 = vmatprep.subr.mxu0 0.0
    %4158 = vmatpush2.msra.mxu0 0.0
    %4159 = vmatprep.subr.mxu0 0.0
    %4160 = vmatpush2.msra.mxu0 0.0
    %4161 = vmatprep.subr.mxu0 0.0
    %4162 = vmatpush2.msra.mxu0 0.0
    %4163 = vmatprep.subr.mxu0 0.0
    %4164 = vmatpush2.msra.mxu0 0.0
    %4165 = vmatprep.subr.mxu0 0.0
    %4166 = vmatpush2.msra.mxu0 0.0
    %4167 = vmatprep.subr.mxu0 0.0
    %4168 = vmatpush2.msra.mxu0 0.0
    %4169 = vmatprep.subr.mxu0 0.0
    %4170 = vmatpush2.msra.mxu0 0.0
    %4171 = vmatprep.subr.mxu0 0.0
    %4172 = vmatpush2.msra.mxu0 0.0
    %4173 = vmatprep.subr.mxu0 0.0
    %4174 = vmatpush2.msra.mxu0 0.0
    %4175 = vmatprep.subr.mxu0 0.0
    %4176 = vmatpush2.msra.mxu0 0.0
    %4177 = vmatprep.subr.mxu0 0.0
    %4178 = vmatpush2.msra.mxu0 0.0
    %4179 = vmatprep.subr.mxu0 0.0
    %4180 = vmatpush2.msra.mxu0 0.0
    %4181 = vmatprep.subr.mxu0 0.0
    %4182 = vmatpush2.msra.mxu0 0.0
    %4183 = vmatprep.subr.mxu0 0.0
    %4184 = vmatpush2.msra.mxu0 0.0
    %4185 = vmatprep.subr.mxu0 0.0
    %4186 = vmatpush2.msra.mxu0 0.0
    %4187 = vmatprep.subr.mxu0 0.0
    %4188 = vmatpush2.msra.mxu0 0.0
    %4189 = vmatprep.mubr.f32.mxu0 0.0
    %v4190 = vand.u32 %v4000, 4294901760
    %4191 = vmatmul.mubr.f32.gmra.mxu0 %v4190
    %v4192 = vpop.f32.mrf.mxu0
    %v4193 = vadd.f32 %v4082, %v4192
    %v4194 = vpop.f32.mrf.mxu0
    %4195 = vdwg.mxu0
    %4196 = vmatprep.subr.mxu0 0.0
    %4197 = vmatpush1.msra.mxu0 0.0
    %4198 = vmatprep.subr.mxu0 0.0
    %4199 = vmatpush1.msra.mxu0 0.0
    %4200 = vmatprep.subr.mxu0 0.0
    %4201 = vmatpush1.msra.mxu0 0.0
    %4202 = vmatprep.subr.mxu0 0.0
    %4203 = vmatpush1.msra.mxu0 0.0
    %4204 = vmatprep.subr.mxu0 0.0
    %4205 = vmatpush1.msra.mxu0 0.0
    %4206 = vmatprep.subr.mxu0 0.0
    %4207 = vmatpush1.msra.mxu0 0.0
    %4208 = vmatprep.subr.mxu0 0.0
    %4209 = vmatpush1.msra.mxu0 0.0
    %4210 = vmatprep.subr.mxu0 0.0
    %4211 = vmatpush1.msra.mxu0 0.0
    %4212 = vmatprep.subr.mxu0 0.0
    %v4213 = vand.u32 %v37, 4294901760
    %v4214 = vsub.f32 %v37, %v4213
    %4215 = vmatpush1.msra.mxu0 %v4214
    %4216 = vmatprep.subr.mxu0 0.0
    %v4217 = vand.u32 %v36, 4294901760
    %v4218 = vsub.f32 %v36, %v4217
    %4219 = vmatpush1.msra.mxu0 %v4218
    %4220 = vmatprep.subr.mxu0 0.0
    %v4221 = vand.u32 %v35, 4294901760
    %v4222 = vsub.f32 %v35, %v4221
    %4223 = vmatpush1.msra.mxu0 %v4222
    %4224 = vmatprep.subr.mxu0 0.0
    %v4225 = vand.u32 %v34, 4294901760
    %v4226 = vsub.f32 %v34, %v4225
    %4227 = vmatpush1.msra.mxu0 %v4226
    %4228 = vmatprep.subr.mxu0 0.0
    %v4229 = vand.u32 %v33, 4294901760
    %v4230 = vsub.f32 %v33, %v4229
    %4231 = vmatpush1.msra.mxu0 %v4230
    %4232 = vmatprep.subr.mxu0 0.0
    %v4233 = vand.u32 %v32, 4294901760
    %v4234 = vsub.f32 %v32, %v4233
    %4235 = vmatpush1.msra.mxu0 %v4234
    %4236 = vmatprep.subr.mxu0 0.0
    %v4237 = vand.u32 %v31, 4294901760
    %v4238 = vsub.f32 %v31, %v4237
    %4239 = vmatpush1.msra.mxu0 %v4238
    %4240 = vmatprep.subr.mxu0 0.0
    %v4241 = vand.u32 %v30, 4294901760
    %v4242 = vsub.f32 %v30, %v4241
    %4243 = vmatpush1.msra.mxu0 %v4242
    %4244 = vmatprep.subr.mxu0 0.0
    %4245 = vmatpush2.msra.mxu0 0.0
    %4246 = vmatprep.subr.mxu0 0.0
    %4247 = vmatpush2.msra.mxu0 0.0
    %4248 = vmatprep.subr.mxu0 0.0
    %4249 = vmatpush2.msra.mxu0 0.0
    %4250 = vmatprep.subr.mxu0 0.0
    %4251 = vmatpush2.msra.mxu0 0.0
    %4252 = vmatprep.subr.mxu0 0.0
    %4253 = vmatpush2.msra.mxu0 0.0
    %4254 = vmatprep.subr.mxu0 0.0
    %4255 = vmatpush2.msra.mxu0 0.0
    %4256 = vmatprep.subr.mxu0 0.0
    %4257 = vmatpush2.msra.mxu0 0.0
    %4258 = vmatprep.subr.mxu0 0.0
    %4259 = vmatpush2.msra.mxu0 0.0
    %4260 = vmatprep.subr.mxu0 0.0
    %4261 = vmatpush2.msra.mxu0 0.0
    %4262 = vmatprep.subr.mxu0 0.0
    %4263 = vmatpush2.msra.mxu0 0.0
    %4264 = vmatprep.subr.mxu0 0.0
    %4265 = vmatpush2.msra.mxu0 0.0
    %4266 = vmatprep.subr.mxu0 0.0
    %4267 = vmatpush2.msra.mxu0 0.0
    %4268 = vmatprep.subr.mxu0 0.0
    %4269 = vmatpush2.msra.mxu0 0.0
    %4270 = vmatprep.subr.mxu0 0.0
    %4271 = vmatpush2.msra.mxu0 0.0
    %4272 = vmatprep.subr.mxu0 0.0
    %4273 = vmatpush2.msra.mxu0 0.0
    %4274 = vmatprep.subr.mxu0 0.0
    %4275 = vmatpush2.msra.mxu0 0.0
    %4276 = vmatprep.mubr.f32.mxu0 0.0
    %v4277 = vand.u32 %v4000, 4294901760
    %v4278 = vsub.f32 %v4000, %v4277
    %4279 = vmatmul.mubr.f32.gmra.mxu0 %v4278
    %v4280 = vpop.f32.mrf.mxu0
    %v4281 = vadd.f32 %v4193, %v4280
    %v4282 = vpop.f32.mrf.mxu0
    %4283 = vdwg.mxu0
    %4284 = vmatprep.subr.mxu0 0.0
    %4285 = vmatpush1.msra.mxu0 0.0
    %4286 = vmatprep.subr.mxu0 0.0
    %4287 = vmatpush1.msra.mxu0 0.0
    %4288 = vmatprep.subr.mxu0 0.0
    %4289 = vmatpush1.msra.mxu0 0.0
    %4290 = vmatprep.subr.mxu0 0.0
    %4291 = vmatpush1.msra.mxu0 0.0
    %4292 = vmatprep.subr.mxu0 0.0
    %4293 = vmatpush1.msra.mxu0 0.0
    %4294 = vmatprep.subr.mxu0 0.0
    %4295 = vmatpush1.msra.mxu0 0.0
    %4296 = vmatprep.subr.mxu0 0.0
    %4297 = vmatpush1.msra.mxu0 0.0
    %4298 = vmatprep.subr.mxu0 0.0
    %4299 = vmatpush1.msra.mxu0 0.0
    %4300 = vmatprep.subr.mxu0 0.0
    %v4301 = vand.u32 %v37, 4294901760
    %4302 = vmatpush1.msra.mxu0 %v4301
    %4303 = vmatprep.subr.mxu0 0.0
    %v4304 = vand.u32 %v36, 4294901760
    %4305 = vmatpush1.msra.mxu0 %v4304
    %4306 = vmatprep.subr.mxu0 0.0
    %v4307 = vand.u32 %v35, 4294901760
    %4308 = vmatpush1.msra.mxu0 %v4307
    %4309 = vmatprep.subr.mxu0 0.0
    %v4310 = vand.u32 %v34, 4294901760
    %4311 = vmatpush1.msra.mxu0 %v4310
    %4312 = vmatprep.subr.mxu0 0.0
    %v4313 = vand.u32 %v33, 4294901760
    %4314 = vmatpush1.msra.mxu0 %v4313
    %4315 = vmatprep.subr.mxu0 0.0
    %v4316 = vand.u32 %v32, 4294901760
    %4317 = vmatpush1.msra.mxu0 %v4316
    %4318 = vmatprep.subr.mxu0 0.0
    %v4319 = vand.u32 %v31, 4294901760
    %4320 = vmatpush1.msra.mxu0 %v4319
    %4321 = vmatprep.subr.mxu0 0.0
    %v4322 = vand.u32 %v30, 4294901760
    %4323 = vmatpush1.msra.mxu0 %v4322
    %4324 = vmatprep.subr.mxu0 0.0
    %4325 = vmatpush2.msra.mxu0 0.0
    %4326 = vmatprep.subr.mxu0 0.0
    %4327 = vmatpush2.msra.mxu0 0.0
    %4328 = vmatprep.subr.mxu0 0.0
    %4329 = vmatpush2.msra.mxu0 0.0
    %4330 = vmatprep.subr.mxu0 0.0
    %4331 = vmatpush2.msra.mxu0 0.0
    %4332 = vmatprep.subr.mxu0 0.0
    %4333 = vmatpush2.msra.mxu0 0.0
    %4334 = vmatprep.subr.mxu0 0.0
    %4335 = vmatpush2.msra.mxu0 0.0
    %4336 = vmatprep.subr.mxu0 0.0
    %4337 = vmatpush2.msra.mxu0 0.0
    %4338 = vmatprep.subr.mxu0 0.0
    %4339 = vmatpush2.msra.mxu0 0.0
    %4340 = vmatprep.subr.mxu0 0.0
    %4341 = vmatpush2.msra.mxu0 0.0
    %4342 = vmatprep.subr.mxu0 0.0
    %4343 = vmatpush2.msra.mxu0 0.0
    %4344 = vmatprep.subr.mxu0 0.0
    %4345 = vmatpush2.msra.mxu0 0.0
    %4346 = vmatprep.subr.mxu0 0.0
    %4347 = vmatpush2.msra.mxu0 0.0
    %4348 = vmatprep.subr.mxu0 0.0
    %4349 = vmatpush2.msra.mxu0 0.0
    %4350 = vmatprep.subr.mxu0 0.0
    %4351 = vmatpush2.msra.mxu0 0.0
    %4352 = vmatprep.subr.mxu0 0.0
    %4353 = vmatpush2.msra.mxu0 0.0
    %4354 = vmatprep.subr.mxu0 0.0
    %4355 = vmatpush2.msra.mxu0 0.0
    %4356 = vmatprep.mubr.f32.mxu0 0.0
    %v4357 = vand.u32 %v4000, 4294901760
    %v4358 = vsub.f32 %v4000, %v4357
    %v4359 = vand.u32 %v4358, 4294901760
    %4360 = vmatmul.mubr.f32.gmra.mxu0 %v4359
    %v4361 = vpop.f32.mrf.mxu0
    %v4362 = vadd.f32 %v4281, %v4361
    %v4363 = vpop.f32.mrf.mxu0
    %4364 = vdwg.mxu0
    %4365 = vmatprep.subr.mxu0 0.0
    %4366 = vmatpush1.msra.mxu0 0.0
    %4367 = vmatprep.subr.mxu0 0.0
    %4368 = vmatpush1.msra.mxu0 0.0
    %4369 = vmatprep.subr.mxu0 0.0
    %4370 = vmatpush1.msra.mxu0 0.0
    %4371 = vmatprep.subr.mxu0 0.0
    %4372 = vmatpush1.msra.mxu0 0.0
    %4373 = vmatprep.subr.mxu0 0.0
    %4374 = vmatpush1.msra.mxu0 0.0
    %4375 = vmatprep.subr.mxu0 0.0
    %4376 = vmatpush1.msra.mxu0 0.0
    %4377 = vmatprep.subr.mxu0 0.0
    %4378 = vmatpush1.msra.mxu0 0.0
    %4379 = vmatprep.subr.mxu0 0.0
    %4380 = vmatpush1.msra.mxu0 0.0
    %4381 = vmatprep.subr.mxu0 0.0
    %v4382 = vand.u32 %v37, 4294901760
    %v4383 = vsub.f32 %v37, %v4382
    %v4384 = vand.u32 %v4383, 4294901760
    %4385 = vmatpush1.msra.mxu0 %v4384
    %4386 = vmatprep.subr.mxu0 0.0
    %v4387 = vand.u32 %v36, 4294901760
    %v4388 = vsub.f32 %v36, %v4387
    %v4389 = vand.u32 %v4388, 4294901760
    %4390 = vmatpush1.msra.mxu0 %v4389
    %4391 = vmatprep.subr.mxu0 0.0
    %v4392 = vand.u32 %v35, 4294901760
    %v4393 = vsub.f32 %v35, %v4392
    %v4394 = vand.u32 %v4393, 4294901760
    %4395 = vmatpush1.msra.mxu0 %v4394
    %4396 = vmatprep.subr.mxu0 0.0
    %v4397 = vand.u32 %v34, 4294901760
    %v4398 = vsub.f32 %v34, %v4397
    %v4399 = vand.u32 %v4398, 4294901760
    %4400 = vmatpush1.msra.mxu0 %v4399
    %4401 = vmatprep.subr.mxu0 0.0
    %v4402 = vand.u32 %v33, 4294901760
    %v4403 = vsub.f32 %v33, %v4402
    %v4404 = vand.u32 %v4403, 4294901760
    %4405 = vmatpush1.msra.mxu0 %v4404
    %4406 = vmatprep.subr.mxu0 0.0
    %v4407 = vand.u32 %v32, 4294901760
    %v4408 = vsub.f32 %v32, %v4407
    %v4409 = vand.u32 %v4408, 4294901760
    %4410 = vmatpush1.msra.mxu0 %v4409
    %4411 = vmatprep.subr.mxu0 0.0
    %v4412 = vand.u32 %v31, 4294901760
    %v4413 = vsub.f32 %v31, %v4412
    %v4414 = vand.u32 %v4413, 4294901760
    %4415 = vmatpush1.msra.mxu0 %v4414
    %4416 = vmatprep.subr.mxu0 0.0
    %v4417 = vand.u32 %v30, 4294901760
    %v4418 = vsub.f32 %v30, %v4417
    %v4419 = vand.u32 %v4418, 4294901760
    %4420 = vmatpush1.msra.mxu0 %v4419
    %4421 = vmatprep.subr.mxu0 0.0
    %4422 = vmatpush2.msra.mxu0 0.0
    %4423 = vmatprep.subr.mxu0 0.0
    %4424 = vmatpush2.msra.mxu0 0.0
    %4425 = vmatprep.subr.mxu0 0.0
    %4426 = vmatpush2.msra.mxu0 0.0
    %4427 = vmatprep.subr.mxu0 0.0
    %4428 = vmatpush2.msra.mxu0 0.0
    %4429 = vmatprep.subr.mxu0 0.0
    %4430 = vmatpush2.msra.mxu0 0.0
    %4431 = vmatprep.subr.mxu0 0.0
    %4432 = vmatpush2.msra.mxu0 0.0
    %4433 = vmatprep.subr.mxu0 0.0
    %4434 = vmatpush2.msra.mxu0 0.0
    %4435 = vmatprep.subr.mxu0 0.0
    %4436 = vmatpush2.msra.mxu0 0.0
    %4437 = vmatprep.subr.mxu0 0.0
    %4438 = vmatpush2.msra.mxu0 0.0
    %4439 = vmatprep.subr.mxu0 0.0
    %4440 = vmatpush2.msra.mxu0 0.0
    %4441 = vmatprep.subr.mxu0 0.0
    %4442 = vmatpush2.msra.mxu0 0.0
    %4443 = vmatprep.subr.mxu0 0.0
    %4444 = vmatpush2.msra.mxu0 0.0
    %4445 = vmatprep.subr.mxu0 0.0
    %4446 = vmatpush2.msra.mxu0 0.0
    %4447 = vmatprep.subr.mxu0 0.0
    %4448 = vmatpush2.msra.mxu0 0.0
    %4449 = vmatprep.subr.mxu0 0.0
    %4450 = vmatpush2.msra.mxu0 0.0
    %4451 = vmatprep.subr.mxu0 0.0
    %4452 = vmatpush2.msra.mxu0 0.0
    %4453 = vmatprep.mubr.f32.mxu0 0.0
    %v4454 = vand.u32 %v4000, 4294901760
    %4455 = vmatmul.mubr.f32.gmra.mxu0 %v4454
    %v4456 = vpop.f32.mrf.mxu0
    %v4457 = vadd.f32 %v4362, %v4456
    %v4458 = vpop.f32.mrf.mxu0
    %4459 = vdwg.mxu0
    %4460 = vmatprep.subr.mxu0 0.0
    %4461 = vmatpush1.msra.mxu0 0.0
    %4462 = vmatprep.subr.mxu0 0.0
    %4463 = vmatpush1.msra.mxu0 0.0
    %4464 = vmatprep.subr.mxu0 0.0
    %4465 = vmatpush1.msra.mxu0 0.0
    %4466 = vmatprep.subr.mxu0 0.0
    %4467 = vmatpush1.msra.mxu0 0.0
    %4468 = vmatprep.subr.mxu0 0.0
    %4469 = vmatpush1.msra.mxu0 0.0
    %4470 = vmatprep.subr.mxu0 0.0
    %4471 = vmatpush1.msra.mxu0 0.0
    %4472 = vmatprep.subr.mxu0 0.0
    %4473 = vmatpush1.msra.mxu0 0.0
    %4474 = vmatprep.subr.mxu0 0.0
    %4475 = vmatpush1.msra.mxu0 0.0
    %4476 = vmatprep.subr.mxu0 0.0
    %v4477 = vand.u32 %v37, 4294901760
    %4478 = vmatpush1.msra.mxu0 %v4477
    %4479 = vmatprep.subr.mxu0 0.0
    %v4480 = vand.u32 %v36, 4294901760
    %4481 = vmatpush1.msra.mxu0 %v4480
    %4482 = vmatprep.subr.mxu0 0.0
    %v4483 = vand.u32 %v35, 4294901760
    %4484 = vmatpush1.msra.mxu0 %v4483
    %4485 = vmatprep.subr.mxu0 0.0
    %v4486 = vand.u32 %v34, 4294901760
    %4487 = vmatpush1.msra.mxu0 %v4486
    %4488 = vmatprep.subr.mxu0 0.0
    %v4489 = vand.u32 %v33, 4294901760
    %4490 = vmatpush1.msra.mxu0 %v4489
    %4491 = vmatprep.subr.mxu0 0.0
    %v4492 = vand.u32 %v32, 4294901760
    %4493 = vmatpush1.msra.mxu0 %v4492
    %4494 = vmatprep.subr.mxu0 0.0
    %v4495 = vand.u32 %v31, 4294901760
    %4496 = vmatpush1.msra.mxu0 %v4495
    %4497 = vmatprep.subr.mxu0 0.0
    %v4498 = vand.u32 %v30, 4294901760
    %4499 = vmatpush1.msra.mxu0 %v4498
    %4500 = vmatprep.subr.mxu0 0.0
    %4501 = vmatpush2.msra.mxu0 0.0
    %4502 = vmatprep.subr.mxu0 0.0
    %4503 = vmatpush2.msra.mxu0 0.0
    %4504 = vmatprep.subr.mxu0 0.0
    %4505 = vmatpush2.msra.mxu0 0.0
    %4506 = vmatprep.subr.mxu0 0.0
    %4507 = vmatpush2.msra.mxu0 0.0
    %4508 = vmatprep.subr.mxu0 0.0
    %4509 = vmatpush2.msra.mxu0 0.0
    %4510 = vmatprep.subr.mxu0 0.0
    %4511 = vmatpush2.msra.mxu0 0.0
    %4512 = vmatprep.subr.mxu0 0.0
    %4513 = vmatpush2.msra.mxu0 0.0
    %4514 = vmatprep.subr.mxu0 0.0
    %4515 = vmatpush2.msra.mxu0 0.0
    %4516 = vmatprep.subr.mxu0 0.0
    %4517 = vmatpush2.msra.mxu0 0.0
    %4518 = vmatprep.subr.mxu0 0.0
    %4519 = vmatpush2.msra.mxu0 0.0
    %4520 = vmatprep.subr.mxu0 0.0
    %4521 = vmatpush2.msra.mxu0 0.0
    %4522 = vmatprep.subr.mxu0 0.0
    %4523 = vmatpush2.msra.mxu0 0.0
    %4524 = vmatprep.subr.mxu0 0.0
    %4525 = vmatpush2.msra.mxu0 0.0
    %4526 = vmatprep.subr.mxu0 0.0
    %4527 = vmatpush2.msra.mxu0 0.0
    %4528 = vmatprep.subr.mxu0 0.0
    %4529 = vmatpush2.msra.mxu0 0.0
    %4530 = vmatprep.subr.mxu0 0.0
    %4531 = vmatpush2.msra.mxu0 0.0
    %4532 = vmatprep.mubr.f32.mxu0 0.0
    %v4533 = vand.u32 %v4000, 4294901760
    %4534 = vmatmul.mubr.f32.gmra.mxu0 %v4533
    %v4535 = vpop.f32.mrf.mxu0
    %v4536 = vadd.f32 %v4457, %v4535
    %v4537 = vpop.f32.mrf.mxu0
    %4538 = vdwg.mxu0
    %v4539 = vld [vmem:[%s1] sm:$0x3]
    %4541 = vset.pattern.permute.xlu0 7
    %4542 = vperm.xlu0 %4541, %v4539
    %v4543 = vpop.permute.xlu0 %4542
    %v4545 = vmul.f32 %v4536, %v4543
    %v4548 = vunpack.c.l.s4 1983009808
    %v4549 = vunpack.c.0.s8 %v4548
    %v4550 = vlaneseq
    %v4551 = vshrl.u32 %v4550, 7
    %v4552 = vsub.s32 %v4549, %v4551
    %v4553 = vrot.slane %v4545, %v4552
    %4554 = vrot.lane.b32.xlu0 %v4553, 96
    %v4555 = vpop.permute.xlu0 %4554
    %4557 = vst.msk [vmem:[#allocation4 + $0x2] sm:$0x3] %vm2303, %v4555
    %v4558 = vld [vmem:[#allocation4] sm:$0xf]
    %v4559 = vld [vmem:[%s5] sm:$0xff]
    %v4560 = vld [vmem:[%s5 + $0x8] sm:$0xff]
    %v4561 = vld [vmem:[%s5 + $0x10] sm:$0xff]
    %v4562 = vld [vmem:[%s5 + $0x18] sm:$0xff]
    %v4563 = vld [vmem:[%s5 + $0x20] sm:$0xff]
    %v4564 = vld [vmem:[%s5 + $0x28] sm:$0xff]
    %v4565 = vld [vmem:[%s5 + $0x30] sm:$0xff]
    %v4566 = vld [vmem:[%s5 + $0x38] sm:$0xff]
    %v4567 = vld [vmem:[%s5 + $0x40] sm:$0xff]
    %v4568 = vld [vmem:[%s5 + $0x48] sm:$0xff]
    %v4569 = vld [vmem:[%s5 + $0x50] sm:$0xff]
    %v4570 = vld [vmem:[%s5 + $0x58] sm:$0xff]
    %v4571 = vld [vmem:[%s5 + $0x60] sm:$0xff]
    %v4572 = vld [vmem:[%s5 + $0x68] sm:$0xff]
    %v4573 = vld [vmem:[%s5 + $0x70] sm:$0xff]
    %v4574 = vld [vmem:[%s5 + $0x78] sm:$0xff]
    %v4575 = vld [vmem:[%s5 + $0x80] sm:$0xff]
    %v4576 = vld [vmem:[%s5 + $0x88] sm:$0xff]
    %v4577 = vld [vmem:[%s5 + $0x90] sm:$0xff]
    %v4578 = vld [vmem:[%s5 + $0x98] sm:$0xff]
    %v4579 = vld [vmem:[%s5 + $0xa0] sm:$0xff]
    %v4580 = vld [vmem:[%s5 + $0xa8] sm:$0xff]
    %v4581 = vld [vmem:[%s5 + $0xb0] sm:$0xff]
    %v4582 = vld [vmem:[%s5 + $0xb8] sm:$0xff]
    %v4583 = vld [vmem:[%s5 + $0xc0] sm:$0xff]
    %v4584 = vld [vmem:[%s5 + $0xc8] sm:$0xff]
    %v4585 = vld [vmem:[%s5 + $0xd0] sm:$0xff]
    %v4586 = vld [vmem:[%s5 + $0xd8] sm:$0xff]
    %v4587 = vld [vmem:[%s5 + $0xe0] sm:$0xff]
    %v4588 = vld [vmem:[%s5 + $0xe8] sm:$0xff]
    %v4589 = vld [vmem:[%s5 + $0xf0] sm:$0xff]
    %v4590 = vld [vmem:[%s5 + $0xf8] sm:$0xff]
    %v4591 = vld [vmem:[%s2] sm:$0x3]
    %v4592 = vld [vmem:[%s6] sm:$0xff]
    %v4593 = vld [vmem:[%s6 + $0x8] sm:$0xff]
    %v4594 = vld [vmem:[%s6 + $0x10] sm:$0xff]
    %v4595 = vld [vmem:[%s6 + $0x18] sm:$0xff]
    %v4596 = vld [vmem:[%s6 + $0x20] sm:$0x1]
    %vm4597 = vcmask 269312
    %v4599 = vsel %vm4597, %v4591, 0
    %vm4601 = vcmask 1040384
    %v4603 = vsel %vm4601, %v4596, 0
    %4605 = vmatprep.subr.mxu0 0.0
    %4606 = vmatpush1.msra.mxu0 0.0
    %4607 = vmatprep.subr.mxu0 0.0
    %4608 = vmatpush1.msra.mxu0 0.0
    %4609 = vmatprep.subr.mxu0 0.0
    %4610 = vmatpush1.msra.mxu0 0.0
    %4611 = vmatprep.subr.mxu0 0.0
    %4612 = vmatpush1.msra.mxu0 0.0
    %4613 = vmatprep.subr.mxu0 0.0
    %4614 = vmatpush1.msra.mxu0 0.0
    %4615 = vmatprep.subr.mxu0 0.0
    %4616 = vmatpush1.msra.mxu0 0.0
    %4617 = vmatprep.subr.mxu0 0.0
    %4618 = vmatpush1.msra.mxu0 0.0
    %4619 = vmatprep.subr.mxu0 0.0
    %4620 = vmatpush1.msra.mxu0 0.0
    %4621 = vmatprep.subr.mxu0 0.0
    %4622 = vmatpush1.msra.mxu0 0.0
    %4623 = vmatprep.subr.mxu0 0.0
    %4624 = vmatpush1.msra.mxu0 0.0
    %4625 = vmatprep.subr.mxu0 0.0
    %4626 = vmatpush1.msra.mxu0 0.0
    %4627 = vmatprep.subr.mxu0 0.0
    %v4628 = vand.u32 %v4603, 4294901760
    %4629 = vmatpush1.msra.mxu0 %v4628
    %4630 = vmatprep.subr.mxu0 0.0
    %v4631 = vand.u32 %v4595, 4294901760
    %4632 = vmatpush1.msra.mxu0 %v4631
    %4633 = vmatprep.subr.mxu0 0.0
    %v4634 = vand.u32 %v4594, 4294901760
    %4635 = vmatpush1.msra.mxu0 %v4634
    %4636 = vmatprep.subr.mxu0 0.0
    %v4637 = vand.u32 %v4593, 4294901760
    %4638 = vmatpush1.msra.mxu0 %v4637
    %4639 = vmatprep.subr.mxu0 0.0
    %v4640 = vand.u32 %v4592, 4294901760
    %4641 = vmatpush1.msra.mxu0 %v4640
    %4642 = vmatprep.subr.mxu0 0.0
    %4643 = vmatpush2.msra.mxu0 0.0
    %4644 = vmatprep.subr.mxu0 0.0
    %4645 = vmatpush2.msra.mxu0 0.0
    %4646 = vmatprep.subr.mxu0 0.0
    %4647 = vmatpush2.msra.mxu0 0.0
    %4648 = vmatprep.subr.mxu0 0.0
    %4649 = vmatpush2.msra.mxu0 0.0
    %4650 = vmatprep.subr.mxu0 0.0
    %4651 = vmatpush2.msra.mxu0 0.0
    %4652 = vmatprep.subr.mxu0 0.0
    %4653 = vmatpush2.msra.mxu0 0.0
    %4654 = vmatprep.subr.mxu0 0.0
    %4655 = vmatpush2.msra.mxu0 0.0
    %4656 = vmatprep.subr.mxu0 0.0
    %4657 = vmatpush2.msra.mxu0 0.0
    %4658 = vmatprep.subr.mxu0 0.0
    %4659 = vmatpush2.msra.mxu0 0.0
    %4660 = vmatprep.subr.mxu0 0.0
    %4661 = vmatpush2.msra.mxu0 0.0
    %4662 = vmatprep.subr.mxu0 0.0
    %4663 = vmatpush2.msra.mxu0 0.0
    %4664 = vmatprep.subr.mxu0 0.0
    %4665 = vmatpush2.msra.mxu0 0.0
    %4666 = vmatprep.subr.mxu0 0.0
    %4667 = vmatpush2.msra.mxu0 0.0
    %4668 = vmatprep.subr.mxu0 0.0
    %4669 = vmatpush2.msra.mxu0 0.0
    %4670 = vmatprep.subr.mxu0 0.0
    %4671 = vmatpush2.msra.mxu0 0.0
    %4672 = vmatprep.subr.mxu0 0.0
    %4673 = vmatpush2.msra.mxu0 0.0
    %4674 = vmatprep.mubr.f32.mxu0 0.0
    %v4675 = vand.u32 %v4599, 4294901760
    %v4676 = vsub.f32 %v4599, %v4675
    %v4677 = vand.u32 %v4676, 4294901760
    %v4678 = vsub.f32 %v4676, %v4677
    %v4679 = vand.u32 %v4678, 4294901760
    %4680 = vmatmul.mubr.f32.gmra.mxu0 %v4679
    %v4681 = vpop.f32.mrf.mxu0
    %v4682 = vadd.f32 0.0, %v4681
    %v4683 = vpop.f32.mrf.mxu0
    %4684 = vdwg.mxu0
    %4685 = vmatprep.subr.mxu0 0.0
    %4686 = vmatpush1.msra.mxu0 0.0
    %4687 = vmatprep.subr.mxu0 0.0
    %4688 = vmatpush1.msra.mxu0 0.0
    %4689 = vmatprep.subr.mxu0 0.0
    %4690 = vmatpush1.msra.mxu0 0.0
    %4691 = vmatprep.subr.mxu0 0.0
    %4692 = vmatpush1.msra.mxu0 0.0
    %4693 = vmatprep.subr.mxu0 0.0
    %4694 = vmatpush1.msra.mxu0 0.0
    %4695 = vmatprep.subr.mxu0 0.0
    %4696 = vmatpush1.msra.mxu0 0.0
    %4697 = vmatprep.subr.mxu0 0.0
    %4698 = vmatpush1.msra.mxu0 0.0
    %4699 = vmatprep.subr.mxu0 0.0
    %4700 = vmatpush1.msra.mxu0 0.0
    %4701 = vmatprep.subr.mxu0 0.0
    %4702 = vmatpush1.msra.mxu0 0.0
    %4703 = vmatprep.subr.mxu0 0.0
    %4704 = vmatpush1.msra.mxu0 0.0
    %4705 = vmatprep.subr.mxu0 0.0
    %4706 = vmatpush1.msra.mxu0 0.0
    %4707 = vmatprep.subr.mxu0 0.0
    %v4708 = vand.u32 %v4603, 4294901760
    %v4709 = vsub.f32 %v4603, %v4708
    %v4710 = vand.u32 %v4709, 4294901760
    %v4711 = vsub.f32 %v4709, %v4710
    %v4712 = vand.u32 %v4711, 4294901760
    %4713 = vmatpush1.msra.mxu0 %v4712
    %4714 = vmatprep.subr.mxu0 0.0
    %v4715 = vand.u32 %v4595, 4294901760
    %v4716 = vsub.f32 %v4595, %v4715
    %v4717 = vand.u32 %v4716, 4294901760
    %v4718 = vsub.f32 %v4716, %v4717
    %v4719 = vand.u32 %v4718, 4294901760
    %4720 = vmatpush1.msra.mxu0 %v4719
    %4721 = vmatprep.subr.mxu0 0.0
    %v4722 = vand.u32 %v4594, 4294901760
    %v4723 = vsub.f32 %v4594, %v4722
    %v4724 = vand.u32 %v4723, 4294901760
    %v4725 = vsub.f32 %v4723, %v4724
    %v4726 = vand.u32 %v4725, 4294901760
    %4727 = vmatpush1.msra.mxu0 %v4726
    %4728 = vmatprep.subr.mxu0 0.0
    %v4729 = vand.u32 %v4593, 4294901760
    %v4730 = vsub.f32 %v4593, %v4729
    %v4731 = vand.u32 %v4730, 4294901760
    %v4732 = vsub.f32 %v4730, %v4731
    %v4733 = vand.u32 %v4732, 4294901760
    %4734 = vmatpush1.msra.mxu0 %v4733
    %4735 = vmatprep.subr.mxu0 0.0
    %v4736 = vand.u32 %v4592, 4294901760
    %v4737 = vsub.f32 %v4592, %v4736
    %v4738 = vand.u32 %v4737, 4294901760
    %v4739 = vsub.f32 %v4737, %v4738
    %v4740 = vand.u32 %v4739, 4294901760
    %4741 = vmatpush1.msra.mxu0 %v4740
    %4742 = vmatprep.subr.mxu0 0.0
    %4743 = vmatpush2.msra.mxu0 0.0
    %4744 = vmatprep.subr.mxu0 0.0
    %4745 = vmatpush2.msra.mxu0 0.0
    %4746 = vmatprep.subr.mxu0 0.0
    %4747 = vmatpush2.msra.mxu0 0.0
    %4748 = vmatprep.subr.mxu0 0.0
    %4749 = vmatpush2.msra.mxu0 0.0
    %4750 = vmatprep.subr.mxu0 0.0
    %4751 = vmatpush2.msra.mxu0 0.0
    %4752 = vmatprep.subr.mxu0 0.0
    %4753 = vmatpush2.msra.mxu0 0.0
    %4754 = vmatprep.subr.mxu0 0.0
    %4755 = vmatpush2.msra.mxu0 0.0
    %4756 = vmatprep.subr.mxu0 0.0
    %4757 = vmatpush2.msra.mxu0 0.0
    %4758 = vmatprep.subr.mxu0 0.0
    %4759 = vmatpush2.msra.mxu0 0.0
    %4760 = vmatprep.subr.mxu0 0.0
    %4761 = vmatpush2.msra.mxu0 0.0
    %4762 = vmatprep.subr.mxu0 0.0
    %4763 = vmatpush2.msra.mxu0 0.0
    %4764 = vmatprep.subr.mxu0 0.0
    %4765 = vmatpush2.msra.mxu0 0.0
    %4766 = vmatprep.subr.mxu0 0.0
    %4767 = vmatpush2.msra.mxu0 0.0
    %4768 = vmatprep.subr.mxu0 0.0
    %4769 = vmatpush2.msra.mxu0 0.0
    %4770 = vmatprep.subr.mxu0 0.0
    %4771 = vmatpush2.msra.mxu0 0.0
    %4772 = vmatprep.subr.mxu0 0.0
    %4773 = vmatpush2.msra.mxu0 0.0
    %4774 = vmatprep.mubr.f32.mxu0 0.0
    %v4775 = vand.u32 %v4599, 4294901760
    %4776 = vmatmul.mubr.f32.gmra.mxu0 %v4775
    %v4777 = vpop.f32.mrf.mxu0
    %v4778 = vadd.f32 %v4682, %v4777
    %v4779 = vpop.f32.mrf.mxu0
    %4780 = vdwg.mxu0
    %4781 = vmatprep.subr.mxu0 0.0
    %4782 = vmatpush1.msra.mxu0 0.0
    %4783 = vmatprep.subr.mxu0 0.0
    %4784 = vmatpush1.msra.mxu0 0.0
    %4785 = vmatprep.subr.mxu0 0.0
    %4786 = vmatpush1.msra.mxu0 0.0
    %4787 = vmatprep.subr.mxu0 0.0
    %4788 = vmatpush1.msra.mxu0 0.0
    %4789 = vmatprep.subr.mxu0 0.0
    %4790 = vmatpush1.msra.mxu0 0.0
    %4791 = vmatprep.subr.mxu0 0.0
    %4792 = vmatpush1.msra.mxu0 0.0
    %4793 = vmatprep.subr.mxu0 0.0
    %4794 = vmatpush1.msra.mxu0 0.0
    %4795 = vmatprep.subr.mxu0 0.0
    %4796 = vmatpush1.msra.mxu0 0.0
    %4797 = vmatprep.subr.mxu0 0.0
    %4798 = vmatpush1.msra.mxu0 0.0
    %4799 = vmatprep.subr.mxu0 0.0
    %4800 = vmatpush1.msra.mxu0 0.0
    %4801 = vmatprep.subr.mxu0 0.0
    %4802 = vmatpush1.msra.mxu0 0.0
    %4803 = vmatprep.subr.mxu0 0.0
    %v4804 = vand.u32 %v4603, 4294901760
    %v4805 = vsub.f32 %v4603, %v4804
    %4806 = vmatpush1.msra.mxu0 %v4805
    %4807 = vmatprep.subr.mxu0 0.0
    %v4808 = vand.u32 %v4595, 4294901760
    %v4809 = vsub.f32 %v4595, %v4808
    %4810 = vmatpush1.msra.mxu0 %v4809
    %4811 = vmatprep.subr.mxu0 0.0
    %v4812 = vand.u32 %v4594, 4294901760
    %v4813 = vsub.f32 %v4594, %v4812
    %4814 = vmatpush1.msra.mxu0 %v4813
    %4815 = vmatprep.subr.mxu0 0.0
    %v4816 = vand.u32 %v4593, 4294901760
    %v4817 = vsub.f32 %v4593, %v4816
    %4818 = vmatpush1.msra.mxu0 %v4817
    %4819 = vmatprep.subr.mxu0 0.0
    %v4820 = vand.u32 %v4592, 4294901760
    %v4821 = vsub.f32 %v4592, %v4820
    %4822 = vmatpush1.msra.mxu0 %v4821
    %4823 = vmatprep.subr.mxu0 0.0
    %4824 = vmatpush2.msra.mxu0 0.0
    %4825 = vmatprep.subr.mxu0 0.0
    %4826 = vmatpush2.msra.mxu0 0.0
    %4827 = vmatprep.subr.mxu0 0.0
    %4828 = vmatpush2.msra.mxu0 0.0
    %4829 = vmatprep.subr.mxu0 0.0
    %4830 = vmatpush2.msra.mxu0 0.0
    %4831 = vmatprep.subr.mxu0 0.0
    %4832 = vmatpush2.msra.mxu0 0.0
    %4833 = vmatprep.subr.mxu0 0.0
    %4834 = vmatpush2.msra.mxu0 0.0
    %4835 = vmatprep.subr.mxu0 0.0
    %4836 = vmatpush2.msra.mxu0 0.0
    %4837 = vmatprep.subr.mxu0 0.0
    %4838 = vmatpush2.msra.mxu0 0.0
    %4839 = vmatprep.subr.mxu0 0.0
    %4840 = vmatpush2.msra.mxu0 0.0
    %4841 = vmatprep.subr.mxu0 0.0
    %4842 = vmatpush2.msra.mxu0 0.0
    %4843 = vmatprep.subr.mxu0 0.0
    %4844 = vmatpush2.msra.mxu0 0.0
    %4845 = vmatprep.subr.mxu0 0.0
    %4846 = vmatpush2.msra.mxu0 0.0
    %4847 = vmatprep.subr.mxu0 0.0
    %4848 = vmatpush2.msra.mxu0 0.0
    %4849 = vmatprep.subr.mxu0 0.0
    %4850 = vmatpush2.msra.mxu0 0.0
    %4851 = vmatprep.subr.mxu0 0.0
    %4852 = vmatpush2.msra.mxu0 0.0
    %4853 = vmatprep.subr.mxu0 0.0
    %4854 = vmatpush2.msra.mxu0 0.0
    %4855 = vmatprep.mubr.f32.mxu0 0.0
    %v4856 = vand.u32 %v4599, 4294901760
    %v4857 = vsub.f32 %v4599, %v4856
    %4858 = vmatmul.mubr.f32.gmra.mxu0 %v4857
    %v4859 = vpop.f32.mrf.mxu0
    %v4860 = vadd.f32 %v4778, %v4859
    %v4861 = vpop.f32.mrf.mxu0
    %4862 = vdwg.mxu0
    %4863 = vmatprep.subr.mxu0 0.0
    %4864 = vmatpush1.msra.mxu0 0.0
    %4865 = vmatprep.subr.mxu0 0.0
    %4866 = vmatpush1.msra.mxu0 0.0
    %4867 = vmatprep.subr.mxu0 0.0
    %4868 = vmatpush1.msra.mxu0 0.0
    %4869 = vmatprep.subr.mxu0 0.0
    %4870 = vmatpush1.msra.mxu0 0.0
    %4871 = vmatprep.subr.mxu0 0.0
    %4872 = vmatpush1.msra.mxu0 0.0
    %4873 = vmatprep.subr.mxu0 0.0
    %4874 = vmatpush1.msra.mxu0 0.0
    %4875 = vmatprep.subr.mxu0 0.0
    %4876 = vmatpush1.msra.mxu0 0.0
    %4877 = vmatprep.subr.mxu0 0.0
    %4878 = vmatpush1.msra.mxu0 0.0
    %4879 = vmatprep.subr.mxu0 0.0
    %4880 = vmatpush1.msra.mxu0 0.0
    %4881 = vmatprep.subr.mxu0 0.0
    %4882 = vmatpush1.msra.mxu0 0.0
    %4883 = vmatprep.subr.mxu0 0.0
    %4884 = vmatpush1.msra.mxu0 0.0
    %4885 = vmatprep.subr.mxu0 0.0
    %v4886 = vand.u32 %v4603, 4294901760
    %4887 = vmatpush1.msra.mxu0 %v4886
    %4888 = vmatprep.subr.mxu0 0.0
    %v4889 = vand.u32 %v4595, 4294901760
    %4890 = vmatpush1.msra.mxu0 %v4889
    %4891 = vmatprep.subr.mxu0 0.0
    %v4892 = vand.u32 %v4594, 4294901760
    %4893 = vmatpush1.msra.mxu0 %v4892
    %4894 = vmatprep.subr.mxu0 0.0
    %v4895 = vand.u32 %v4593, 4294901760
    %4896 = vmatpush1.msra.mxu0 %v4895
    %4897 = vmatprep.subr.mxu0 0.0
    %v4898 = vand.u32 %v4592, 4294901760
    %4899 = vmatpush1.msra.mxu0 %v4898
    %4900 = vmatprep.subr.mxu0 0.0
    %4901 = vmatpush2.msra.mxu0 0.0
    %4902 = vmatprep.subr.mxu0 0.0
    %4903 = vmatpush2.msra.mxu0 0.0
    %4904 = vmatprep.subr.mxu0 0.0
    %4905 = vmatpush2.msra.mxu0 0.0
    %4906 = vmatprep.subr.mxu0 0.0
    %4907 = vmatpush2.msra.mxu0 0.0
    %4908 = vmatprep.subr.mxu0 0.0
    %4909 = vmatpush2.msra.mxu0 0.0
    %4910 = vmatprep.subr.mxu0 0.0
    %4911 = vmatpush2.msra.mxu0 0.0
    %4912 = vmatprep.subr.mxu0 0.0
    %4913 = vmatpush2.msra.mxu0 0.0
    %4914 = vmatprep.subr.mxu0 0.0
    %4915 = vmatpush2.msra.mxu0 0.0
    %4916 = vmatprep.subr.mxu0 0.0
    %4917 = vmatpush2.msra.mxu0 0.0
    %4918 = vmatprep.subr.mxu0 0.0
    %4919 = vmatpush2.msra.mxu0 0.0
    %4920 = vmatprep.subr.mxu0 0.0
    %4921 = vmatpush2.msra.mxu0 0.0
    %4922 = vmatprep.subr.mxu0 0.0
    %4923 = vmatpush2.msra.mxu0 0.0
    %4924 = vmatprep.subr.mxu0 0.0
    %4925 = vmatpush2.msra.mxu0 0.0
    %4926 = vmatprep.subr.mxu0 0.0
    %4927 = vmatpush2.msra.mxu0 0.0
    %4928 = vmatprep.subr.mxu0 0.0
    %4929 = vmatpush2.msra.mxu0 0.0
    %4930 = vmatprep.subr.mxu0 0.0
    %4931 = vmatpush2.msra.mxu0 0.0
    %4932 = vmatprep.mubr.f32.mxu0 0.0
    %v4933 = vand.u32 %v4599, 4294901760
    %v4934 = vsub.f32 %v4599, %v4933
    %v4935 = vand.u32 %v4934, 4294901760
    %4936 = vmatmul.mubr.f32.gmra.mxu0 %v4935
    %v4937 = vpop.f32.mrf.mxu0
    %v4938 = vadd.f32 %v4860, %v4937
    %v4939 = vpop.f32.mrf.mxu0
    %4940 = vdwg.mxu0
    %4941 = vmatprep.subr.mxu0 0.0
    %4942 = vmatpush1.msra.mxu0 0.0
    %4943 = vmatprep.subr.mxu0 0.0
    %4944 = vmatpush1.msra.mxu0 0.0
    %4945 = vmatprep.subr.mxu0 0.0
    %4946 = vmatpush1.msra.mxu0 0.0
    %4947 = vmatprep.subr.mxu0 0.0
    %4948 = vmatpush1.msra.mxu0 0.0
    %4949 = vmatprep.subr.mxu0 0.0
    %4950 = vmatpush1.msra.mxu0 0.0
    %4951 = vmatprep.subr.mxu0 0.0
    %4952 = vmatpush1.msra.mxu0 0.0
    %4953 = vmatprep.subr.mxu0 0.0
    %4954 = vmatpush1.msra.mxu0 0.0
    %4955 = vmatprep.subr.mxu0 0.0
    %4956 = vmatpush1.msra.mxu0 0.0
    %4957 = vmatprep.subr.mxu0 0.0
    %4958 = vmatpush1.msra.mxu0 0.0
    %4959 = vmatprep.subr.mxu0 0.0
    %4960 = vmatpush1.msra.mxu0 0.0
    %4961 = vmatprep.subr.mxu0 0.0
    %4962 = vmatpush1.msra.mxu0 0.0
    %4963 = vmatprep.subr.mxu0 0.0
    %v4964 = vand.u32 %v4603, 4294901760
    %v4965 = vsub.f32 %v4603, %v4964
    %v4966 = vand.u32 %v4965, 4294901760
    %4967 = vmatpush1.msra.mxu0 %v4966
    %4968 = vmatprep.subr.mxu0 0.0
    %v4969 = vand.u32 %v4595, 4294901760
    %v4970 = vsub.f32 %v4595, %v4969
    %v4971 = vand.u32 %v4970, 4294901760
    %4972 = vmatpush1.msra.mxu0 %v4971
    %4973 = vmatprep.subr.mxu0 0.0
    %v4974 = vand.u32 %v4594, 4294901760
    %v4975 = vsub.f32 %v4594, %v4974
    %v4976 = vand.u32 %v4975, 4294901760
    %4977 = vmatpush1.msra.mxu0 %v4976
    %4978 = vmatprep.subr.mxu0 0.0
    %v4979 = vand.u32 %v4593, 4294901760
    %v4980 = vsub.f32 %v4593, %v4979
    %v4981 = vand.u32 %v4980, 4294901760
    %4982 = vmatpush1.msra.mxu0 %v4981
    %4983 = vmatprep.subr.mxu0 0.0
    %v4984 = vand.u32 %v4592, 4294901760
    %v4985 = vsub.f32 %v4592, %v4984
    %v4986 = vand.u32 %v4985, 4294901760
    %4987 = vmatpush1.msra.mxu0 %v4986
    %4988 = vmatprep.subr.mxu0 0.0
    %4989 = vmatpush2.msra.mxu0 0.0
    %4990 = vmatprep.subr.mxu0 0.0
    %4991 = vmatpush2.msra.mxu0 0.0
    %4992 = vmatprep.subr.mxu0 0.0
    %4993 = vmatpush2.msra.mxu0 0.0
    %4994 = vmatprep.subr.mxu0 0.0
    %4995 = vmatpush2.msra.mxu0 0.0
    %4996 = vmatprep.subr.mxu0 0.0
    %4997 = vmatpush2.msra.mxu0 0.0
    %4998 = vmatprep.subr.mxu0 0.0
    %4999 = vmatpush2.msra.mxu0 0.0
    %5000 = vmatprep.subr.mxu0 0.0
    %5001 = vmatpush2.msra.mxu0 0.0
    %5002 = vmatprep.subr.mxu0 0.0
    %5003 = vmatpush2.msra.mxu0 0.0
    %5004 = vmatprep.subr.mxu0 0.0
    %5005 = vmatpush2.msra.mxu0 0.0
    %5006 = vmatprep.subr.mxu0 0.0
    %5007 = vmatpush2.msra.mxu0 0.0
    %5008 = vmatprep.subr.mxu0 0.0
    %5009 = vmatpush2.msra.mxu0 0.0
    %5010 = vmatprep.subr.mxu0 0.0
    %5011 = vmatpush2.msra.mxu0 0.0
    %5012 = vmatprep.subr.mxu0 0.0
    %5013 = vmatpush2.msra.mxu0 0.0
    %5014 = vmatprep.subr.mxu0 0.0
    %5015 = vmatpush2.msra.mxu0 0.0
    %5016 = vmatprep.subr.mxu0 0.0
    %5017 = vmatpush2.msra.mxu0 0.0
    %5018 = vmatprep.subr.mxu0 0.0
    %5019 = vmatpush2.msra.mxu0 0.0
    %5020 = vmatprep.mubr.f32.mxu0 0.0
    %v5021 = vand.u32 %v4599, 4294901760
    %5022 = vmatmul.mubr.f32.gmra.mxu0 %v5021
    %v5023 = vpop.f32.mrf.mxu0
    %v5024 = vadd.f32 %v4938, %v5023
    %v5025 = vpop.f32.mrf.mxu0
    %5026 = vdwg.mxu0
    %5027 = vmatprep.subr.mxu0 0.0
    %5028 = vmatpush1.msra.mxu0 0.0
    %5029 = vmatprep.subr.mxu0 0.0
    %5030 = vmatpush1.msra.mxu0 0.0
    %5031 = vmatprep.subr.mxu0 0.0
    %5032 = vmatpush1.msra.mxu0 0.0
    %5033 = vmatprep.subr.mxu0 0.0
    %5034 = vmatpush1.msra.mxu0 0.0
    %5035 = vmatprep.subr.mxu0 0.0
    %5036 = vmatpush1.msra.mxu0 0.0
    %5037 = vmatprep.subr.mxu0 0.0
    %5038 = vmatpush1.msra.mxu0 0.0
    %5039 = vmatprep.subr.mxu0 0.0
    %5040 = vmatpush1.msra.mxu0 0.0
    %5041 = vmatprep.subr.mxu0 0.0
    %5042 = vmatpush1.msra.mxu0 0.0
    %5043 = vmatprep.subr.mxu0 0.0
    %5044 = vmatpush1.msra.mxu0 0.0
    %5045 = vmatprep.subr.mxu0 0.0
    %5046 = vmatpush1.msra.mxu0 0.0
    %5047 = vmatprep.subr.mxu0 0.0
    %5048 = vmatpush1.msra.mxu0 0.0
    %5049 = vmatprep.subr.mxu0 0.0
    %v5050 = vand.u32 %v4603, 4294901760
    %5051 = vmatpush1.msra.mxu0 %v5050
    %5052 = vmatprep.subr.mxu0 0.0
    %v5053 = vand.u32 %v4595, 4294901760
    %5054 = vmatpush1.msra.mxu0 %v5053
    %5055 = vmatprep.subr.mxu0 0.0
    %v5056 = vand.u32 %v4594, 4294901760
    %5057 = vmatpush1.msra.mxu0 %v5056
    %5058 = vmatprep.subr.mxu0 0.0
    %v5059 = vand.u32 %v4593, 4294901760
    %5060 = vmatpush1.msra.mxu0 %v5059
    %5061 = vmatprep.subr.mxu0 0.0
    %v5062 = vand.u32 %v4592, 4294901760
    %5063 = vmatpush1.msra.mxu0 %v5062
    %5064 = vmatprep.subr.mxu0 0.0
    %5065 = vmatpush2.msra.mxu0 0.0
    %5066 = vmatprep.subr.mxu0 0.0
    %5067 = vmatpush2.msra.mxu0 0.0
    %5068 = vmatprep.subr.mxu0 0.0
    %5069 = vmatpush2.msra.mxu0 0.0
    %5070 = vmatprep.subr.mxu0 0.0
    %5071 = vmatpush2.msra.mxu0 0.0
    %5072 = vmatprep.subr.mxu0 0.0
    %5073 = vmatpush2.msra.mxu0 0.0
    %5074 = vmatprep.subr.mxu0 0.0
    %5075 = vmatpush2.msra.mxu0 0.0
    %5076 = vmatprep.subr.mxu0 0.0
    %5077 = vmatpush2.msra.mxu0 0.0
    %5078 = vmatprep.subr.mxu0 0.0
    %5079 = vmatpush2.msra.mxu0 0.0
    %5080 = vmatprep.subr.mxu0 0.0
    %5081 = vmatpush2.msra.mxu0 0.0
    %5082 = vmatprep.subr.mxu0 0.0
    %5083 = vmatpush2.msra.mxu0 0.0
    %5084 = vmatprep.subr.mxu0 0.0
    %5085 = vmatpush2.msra.mxu0 0.0
    %5086 = vmatprep.subr.mxu0 0.0
    %5087 = vmatpush2.msra.mxu0 0.0
    %5088 = vmatprep.subr.mxu0 0.0
    %5089 = vmatpush2.msra.mxu0 0.0
    %5090 = vmatprep.subr.mxu0 0.0
    %5091 = vmatpush2.msra.mxu0 0.0
    %5092 = vmatprep.subr.mxu0 0.0
    %5093 = vmatpush2.msra.mxu0 0.0
    %5094 = vmatprep.subr.mxu0 0.0
    %5095 = vmatpush2.msra.mxu0 0.0
    %5096 = vmatprep.mubr.f32.mxu0 0.0
    %v5097 = vand.u32 %v4599, 4294901760
    %5098 = vmatmul.mubr.f32.gmra.mxu0 %v5097
    %v5099 = vpop.f32.mrf.mxu0
    %v5100 = vadd.f32 %v5024, %v5099
    %v5101 = vpop.f32.mrf.mxu0
    %5102 = vdwg.mxu0
    %v5105 = vunpack.c.l.s4 1983009808
    %v5106 = vunpack.c.0.s8 %v5105
    %v5107 = vlaneseq
    %v5108 = vshrl.u32 %v5107, 7
    %v5109 = vsub.s32 %v5106, %v5108
    %v5110 = vrot.slane %v4558, %v5109
    %v5111 = vcombine.high %v5110, %v5110
    %5114 = vmatprep.subr.mxu0 0.0
    %v5115 = vand.u32 %v4574, 4294901760
    %5116 = vmatpush1.msra.mxu0 %v5115
    %5117 = vmatprep.subr.mxu0 0.0
    %v5118 = vand.u32 %v4573, 4294901760
    %5119 = vmatpush1.msra.mxu0 %v5118
    %5120 = vmatprep.subr.mxu0 0.0
    %v5121 = vand.u32 %v4572, 4294901760
    %5122 = vmatpush1.msra.mxu0 %v5121
    %5123 = vmatprep.subr.mxu0 0.0
    %v5124 = vand.u32 %v4571, 4294901760
    %5125 = vmatpush1.msra.mxu0 %v5124
    %5126 = vmatprep.subr.mxu0 0.0
    %v5127 = vand.u32 %v4570, 4294901760
    %5128 = vmatpush1.msra.mxu0 %v5127
    %5129 = vmatprep.subr.mxu0 0.0
    %v5130 = vand.u32 %v4569, 4294901760
    %5131 = vmatpush1.msra.mxu0 %v5130
    %5132 = vmatprep.subr.mxu0 0.0
    %v5133 = vand.u32 %v4568, 4294901760
    %5134 = vmatpush1.msra.mxu0 %v5133
    %5135 = vmatprep.subr.mxu0 0.0
    %v5136 = vand.u32 %v4567, 4294901760
    %5137 = vmatpush1.msra.mxu0 %v5136
    %5138 = vmatprep.subr.mxu0 0.0
    %v5139 = vand.u32 %v4566, 4294901760
    %5140 = vmatpush1.msra.mxu0 %v5139
    %5141 = vmatprep.subr.mxu0 0.0
    %v5142 = vand.u32 %v4565, 4294901760
    %5143 = vmatpush1.msra.mxu0 %v5142
    %5144 = vmatprep.subr.mxu0 0.0
    %v5145 = vand.u32 %v4564, 4294901760
    %5146 = vmatpush1.msra.mxu0 %v5145
    %5147 = vmatprep.subr.mxu0 0.0
    %v5148 = vand.u32 %v4563, 4294901760
    %5149 = vmatpush1.msra.mxu0 %v5148
    %5150 = vmatprep.subr.mxu0 0.0
    %v5151 = vand.u32 %v4562, 4294901760
    %5152 = vmatpush1.msra.mxu0 %v5151
    %5153 = vmatprep.subr.mxu0 0.0
    %v5154 = vand.u32 %v4561, 4294901760
    %5155 = vmatpush1.msra.mxu0 %v5154
    %5156 = vmatprep.subr.mxu0 0.0
    %v5157 = vand.u32 %v4560, 4294901760
    %5158 = vmatpush1.msra.mxu0 %v5157
    %5159 = vmatprep.subr.mxu0 0.0
    %v5160 = vand.u32 %v4559, 4294901760
    %5161 = vmatpush1.msra.mxu0 %v5160
    %5162 = vmatprep.subr.mxu0 0.0
    %v5163 = vand.u32 %v4590, 4294901760
    %5164 = vmatpush2.msra.mxu0 %v5163
    %5165 = vmatprep.subr.mxu0 0.0
    %v5166 = vand.u32 %v4589, 4294901760
    %5167 = vmatpush2.msra.mxu0 %v5166
    %5168 = vmatprep.subr.mxu0 0.0
    %v5169 = vand.u32 %v4588, 4294901760
    %5170 = vmatpush2.msra.mxu0 %v5169
    %5171 = vmatprep.subr.mxu0 0.0
    %v5172 = vand.u32 %v4587, 4294901760
    %5173 = vmatpush2.msra.mxu0 %v5172
    %5174 = vmatprep.subr.mxu0 0.0
    %v5175 = vand.u32 %v4586, 4294901760
    %5176 = vmatpush2.msra.mxu0 %v5175
    %5177 = vmatprep.subr.mxu0 0.0
    %v5178 = vand.u32 %v4585, 4294901760
    %5179 = vmatpush2.msra.mxu0 %v5178
    %5180 = vmatprep.subr.mxu0 0.0
    %v5181 = vand.u32 %v4584, 4294901760
    %5182 = vmatpush2.msra.mxu0 %v5181
    %5183 = vmatprep.subr.mxu0 0.0
    %v5184 = vand.u32 %v4583, 4294901760
    %5185 = vmatpush2.msra.mxu0 %v5184
    %5186 = vmatprep.subr.mxu0 0.0
    %v5187 = vand.u32 %v4582, 4294901760
    %5188 = vmatpush2.msra.mxu0 %v5187
    %5189 = vmatprep.subr.mxu0 0.0
    %v5190 = vand.u32 %v4581, 4294901760
    %5191 = vmatpush2.msra.mxu0 %v5190
    %5192 = vmatprep.subr.mxu0 0.0
    %v5193 = vand.u32 %v4580, 4294901760
    %5194 = vmatpush2.msra.mxu0 %v5193
    %5195 = vmatprep.subr.mxu0 0.0
    %v5196 = vand.u32 %v4579, 4294901760
    %5197 = vmatpush2.msra.mxu0 %v5196
    %5198 = vmatprep.subr.mxu0 0.0
    %v5199 = vand.u32 %v4578, 4294901760
    %5200 = vmatpush2.msra.mxu0 %v5199
    %5201 = vmatprep.subr.mxu0 0.0
    %v5202 = vand.u32 %v4577, 4294901760
    %5203 = vmatpush2.msra.mxu0 %v5202
    %5204 = vmatprep.subr.mxu0 0.0
    %v5205 = vand.u32 %v4576, 4294901760
    %5206 = vmatpush2.msra.mxu0 %v5205
    %5207 = vmatprep.subr.mxu0 0.0
    %v5208 = vand.u32 %v4575, 4294901760
    %5209 = vmatpush2.msra.mxu0 %v5208
    %v5210 = vand.u32 %v5111, 4294901760
    %v5211 = vsub.f32 %v5111, %v5210
    %v5212 = vand.u32 %v5211, 4294901760
    %v5213 = vsub.f32 %v5211, %v5212
    %v5214 = vand.u32 %v5213, 4294901760
    %5215 = vmatprep.mubr.f32.mxu0 %v5214
    %v5216 = vand.u32 %v5110, 4294901760
    %v5217 = vsub.f32 %v5110, %v5216
    %v5218 = vand.u32 %v5217, 4294901760
    %v5219 = vsub.f32 %v5217, %v5218
    %v5220 = vand.u32 %v5219, 4294901760
    %5221 = vmatmul.mubr.f32.gmra.mxu0 %v5220
    %v5222 = vpop.f32.mrf.mxu0
    %v5223 = vadd.f32 %v5100, %v5222
    %v5224 = vpop.f32.mrf.mxu0
    %5225 = vdwg.mxu0
    %5226 = vmatprep.subr.mxu0 0.0
    %v5227 = vand.u32 %v4574, 4294901760
    %v5228 = vsub.f32 %v4574, %v5227
    %v5229 = vand.u32 %v5228, 4294901760
    %v5230 = vsub.f32 %v5228, %v5229
    %v5231 = vand.u32 %v5230, 4294901760
    %5232 = vmatpush1.msra.mxu0 %v5231
    %5233 = vmatprep.subr.mxu0 0.0
    %v5234 = vand.u32 %v4573, 4294901760
    %v5235 = vsub.f32 %v4573, %v5234
    %v5236 = vand.u32 %v5235, 4294901760
    %v5237 = vsub.f32 %v5235, %v5236
    %v5238 = vand.u32 %v5237, 4294901760
    %5239 = vmatpush1.msra.mxu0 %v5238
    %5240 = vmatprep.subr.mxu0 0.0
    %v5241 = vand.u32 %v4572, 4294901760
    %v5242 = vsub.f32 %v4572, %v5241
    %v5243 = vand.u32 %v5242, 4294901760
    %v5244 = vsub.f32 %v5242, %v5243
    %v5245 = vand.u32 %v5244, 4294901760
    %5246 = vmatpush1.msra.mxu0 %v5245
    %5247 = vmatprep.subr.mxu0 0.0
    %v5248 = vand.u32 %v4571, 4294901760
    %v5249 = vsub.f32 %v4571, %v5248
    %v5250 = vand.u32 %v5249, 4294901760
    %v5251 = vsub.f32 %v5249, %v5250
    %v5252 = vand.u32 %v5251, 4294901760
    %5253 = vmatpush1.msra.mxu0 %v5252
    %5254 = vmatprep.subr.mxu0 0.0
    %v5255 = vand.u32 %v4570, 4294901760
    %v5256 = vsub.f32 %v4570, %v5255
    %v5257 = vand.u32 %v5256, 4294901760
    %v5258 = vsub.f32 %v5256, %v5257
    %v5259 = vand.u32 %v5258, 4294901760
    %5260 = vmatpush1.msra.mxu0 %v5259
    %5261 = vmatprep.subr.mxu0 0.0
    %v5262 = vand.u32 %v4569, 4294901760
    %v5263 = vsub.f32 %v4569, %v5262
    %v5264 = vand.u32 %v5263, 4294901760
    %v5265 = vsub.f32 %v5263, %v5264
    %v5266 = vand.u32 %v5265, 4294901760
    %5267 = vmatpush1.msra.mxu0 %v5266
    %5268 = vmatprep.subr.mxu0 0.0
    %v5269 = vand.u32 %v4568, 4294901760
    %v5270 = vsub.f32 %v4568, %v5269
    %v5271 = vand.u32 %v5270, 4294901760
    %v5272 = vsub.f32 %v5270, %v5271
    %v5273 = vand.u32 %v5272, 4294901760
    %5274 = vmatpush1.msra.mxu0 %v5273
    %5275 = vmatprep.subr.mxu0 0.0
    %v5276 = vand.u32 %v4567, 4294901760
    %v5277 = vsub.f32 %v4567, %v5276
    %v5278 = vand.u32 %v5277, 4294901760
    %v5279 = vsub.f32 %v5277, %v5278
    %v5280 = vand.u32 %v5279, 4294901760
    %5281 = vmatpush1.msra.mxu0 %v5280
    %5282 = vmatprep.subr.mxu0 0.0
    %v5283 = vand.u32 %v4566, 4294901760
    %v5284 = vsub.f32 %v4566, %v5283
    %v5285 = vand.u32 %v5284, 4294901760
    %v5286 = vsub.f32 %v5284, %v5285
    %v5287 = vand.u32 %v5286, 4294901760
    %5288 = vmatpush1.msra.mxu0 %v5287
    %5289 = vmatprep.subr.mxu0 0.0
    %v5290 = vand.u32 %v4565, 4294901760
    %v5291 = vsub.f32 %v4565, %v5290
    %v5292 = vand.u32 %v5291, 4294901760
    %v5293 = vsub.f32 %v5291, %v5292
    %v5294 = vand.u32 %v5293, 4294901760
    %5295 = vmatpush1.msra.mxu0 %v5294
    %5296 = vmatprep.subr.mxu0 0.0
    %v5297 = vand.u32 %v4564, 4294901760
    %v5298 = vsub.f32 %v4564, %v5297
    %v5299 = vand.u32 %v5298, 4294901760
    %v5300 = vsub.f32 %v5298, %v5299
    %v5301 = vand.u32 %v5300, 4294901760
    %5302 = vmatpush1.msra.mxu0 %v5301
    %5303 = vmatprep.subr.mxu0 0.0
    %v5304 = vand.u32 %v4563, 4294901760
    %v5305 = vsub.f32 %v4563, %v5304
    %v5306 = vand.u32 %v5305, 4294901760
    %v5307 = vsub.f32 %v5305, %v5306
    %v5308 = vand.u32 %v5307, 4294901760
    %5309 = vmatpush1.msra.mxu0 %v5308
    %5310 = vmatprep.subr.mxu0 0.0
    %v5311 = vand.u32 %v4562, 4294901760
    %v5312 = vsub.f32 %v4562, %v5311
    %v5313 = vand.u32 %v5312, 4294901760
    %v5314 = vsub.f32 %v5312, %v5313
    %v5315 = vand.u32 %v5314, 4294901760
    %5316 = vmatpush1.msra.mxu0 %v5315
    %5317 = vmatprep.subr.mxu0 0.0
    %v5318 = vand.u32 %v4561, 4294901760
    %v5319 = vsub.f32 %v4561, %v5318
    %v5320 = vand.u32 %v5319, 4294901760
    %v5321 = vsub.f32 %v5319, %v5320
    %v5322 = vand.u32 %v5321, 4294901760
    %5323 = vmatpush1.msra.mxu0 %v5322
    %5324 = vmatprep.subr.mxu0 0.0
    %v5325 = vand.u32 %v4560, 4294901760
    %v5326 = vsub.f32 %v4560, %v5325
    %v5327 = vand.u32 %v5326, 4294901760
    %v5328 = vsub.f32 %v5326, %v5327
    %v5329 = vand.u32 %v5328, 4294901760
    %5330 = vmatpush1.msra.mxu0 %v5329
    %5331 = vmatprep.subr.mxu0 0.0
    %v5332 = vand.u32 %v4559, 4294901760
    %v5333 = vsub.f32 %v4559, %v5332
    %v5334 = vand.u32 %v5333, 4294901760
    %v5335 = vsub.f32 %v5333, %v5334
    %v5336 = vand.u32 %v5335, 4294901760
    %5337 = vmatpush1.msra.mxu0 %v5336
    %5338 = vmatprep.subr.mxu0 0.0
    %v5339 = vand.u32 %v4590, 4294901760
    %v5340 = vsub.f32 %v4590, %v5339
    %v5341 = vand.u32 %v5340, 4294901760
    %v5342 = vsub.f32 %v5340, %v5341
    %v5343 = vand.u32 %v5342, 4294901760
    %5344 = vmatpush2.msra.mxu0 %v5343
    %5345 = vmatprep.subr.mxu0 0.0
    %v5346 = vand.u32 %v4589, 4294901760
    %v5347 = vsub.f32 %v4589, %v5346
    %v5348 = vand.u32 %v5347, 4294901760
    %v5349 = vsub.f32 %v5347, %v5348
    %v5350 = vand.u32 %v5349, 4294901760
    %5351 = vmatpush2.msra.mxu0 %v5350
    %5352 = vmatprep.subr.mxu0 0.0
    %v5353 = vand.u32 %v4588, 4294901760
    %v5354 = vsub.f32 %v4588, %v5353
    %v5355 = vand.u32 %v5354, 4294901760
    %v5356 = vsub.f32 %v5354, %v5355
    %v5357 = vand.u32 %v5356, 4294901760
    %5358 = vmatpush2.msra.mxu0 %v5357
    %5359 = vmatprep.subr.mxu0 0.0
    %v5360 = vand.u32 %v4587, 4294901760
    %v5361 = vsub.f32 %v4587, %v5360
    %v5362 = vand.u32 %v5361, 4294901760
    %v5363 = vsub.f32 %v5361, %v5362
    %v5364 = vand.u32 %v5363, 4294901760
    %5365 = vmatpush2.msra.mxu0 %v5364
    %5366 = vmatprep.subr.mxu0 0.0
    %v5367 = vand.u32 %v4586, 4294901760
    %v5368 = vsub.f32 %v4586, %v5367
    %v5369 = vand.u32 %v5368, 4294901760
    %v5370 = vsub.f32 %v5368, %v5369
    %v5371 = vand.u32 %v5370, 4294901760
    %5372 = vmatpush2.msra.mxu0 %v5371
    %5373 = vmatprep.subr.mxu0 0.0
    %v5374 = vand.u32 %v4585, 4294901760
    %v5375 = vsub.f32 %v4585, %v5374
    %v5376 = vand.u32 %v5375, 4294901760
    %v5377 = vsub.f32 %v5375, %v5376
    %v5378 = vand.u32 %v5377, 4294901760
    %5379 = vmatpush2.msra.mxu0 %v5378
    %5380 = vmatprep.subr.mxu0 0.0
    %v5381 = vand.u32 %v4584, 4294901760
    %v5382 = vsub.f32 %v4584, %v5381
    %v5383 = vand.u32 %v5382, 4294901760
    %v5384 = vsub.f32 %v5382, %v5383
    %v5385 = vand.u32 %v5384, 4294901760
    %5386 = vmatpush2.msra.mxu0 %v5385
    %5387 = vmatprep.subr.mxu0 0.0
    %v5388 = vand.u32 %v4583, 4294901760
    %v5389 = vsub.f32 %v4583, %v5388
    %v5390 = vand.u32 %v5389, 4294901760
    %v5391 = vsub.f32 %v5389, %v5390
    %v5392 = vand.u32 %v5391, 4294901760
    %5393 = vmatpush2.msra.mxu0 %v5392
    %5394 = vmatprep.subr.mxu0 0.0
    %v5395 = vand.u32 %v4582, 4294901760
    %v5396 = vsub.f32 %v4582, %v5395
    %v5397 = vand.u32 %v5396, 4294901760
    %v5398 = vsub.f32 %v5396, %v5397
    %v5399 = vand.u32 %v5398, 4294901760
    %5400 = vmatpush2.msra.mxu0 %v5399
    %5401 = vmatprep.subr.mxu0 0.0
    %v5402 = vand.u32 %v4581, 4294901760
    %v5403 = vsub.f32 %v4581, %v5402
    %v5404 = vand.u32 %v5403, 4294901760
    %v5405 = vsub.f32 %v5403, %v5404
    %v5406 = vand.u32 %v5405, 4294901760
    %5407 = vmatpush2.msra.mxu0 %v5406
    %5408 = vmatprep.subr.mxu0 0.0
    %v5409 = vand.u32 %v4580, 4294901760
    %v5410 = vsub.f32 %v4580, %v5409
    %v5411 = vand.u32 %v5410, 4294901760
    %v5412 = vsub.f32 %v5410, %v5411
    %v5413 = vand.u32 %v5412, 4294901760
    %5414 = vmatpush2.msra.mxu0 %v5413
    %5415 = vmatprep.subr.mxu0 0.0
    %v5416 = vand.u32 %v4579, 4294901760
    %v5417 = vsub.f32 %v4579, %v5416
    %v5418 = vand.u32 %v5417, 4294901760
    %v5419 = vsub.f32 %v5417, %v5418
    %v5420 = vand.u32 %v5419, 4294901760
    %5421 = vmatpush2.msra.mxu0 %v5420
    %5422 = vmatprep.subr.mxu0 0.0
    %v5423 = vand.u32 %v4578, 4294901760
    %v5424 = vsub.f32 %v4578, %v5423
    %v5425 = vand.u32 %v5424, 4294901760
    %v5426 = vsub.f32 %v5424, %v5425
    %v5427 = vand.u32 %v5426, 4294901760
    %5428 = vmatpush2.msra.mxu0 %v5427
    %5429 = vmatprep.subr.mxu0 0.0
    %v5430 = vand.u32 %v4577, 4294901760
    %v5431 = vsub.f32 %v4577, %v5430
    %v5432 = vand.u32 %v5431, 4294901760
    %v5433 = vsub.f32 %v5431, %v5432
    %v5434 = vand.u32 %v5433, 4294901760
    %5435 = vmatpush2.msra.mxu0 %v5434
    %5436 = vmatprep.subr.mxu0 0.0
    %v5437 = vand.u32 %v4576, 4294901760
    %v5438 = vsub.f32 %v4576, %v5437
    %v5439 = vand.u32 %v5438, 4294901760
    %v5440 = vsub.f32 %v5438, %v5439
    %v5441 = vand.u32 %v5440, 4294901760
    %5442 = vmatpush2.msra.mxu0 %v5441
    %5443 = vmatprep.subr.mxu0 0.0
    %v5444 = vand.u32 %v4575, 4294901760
    %v5445 = vsub.f32 %v4575, %v5444
    %v5446 = vand.u32 %v5445, 4294901760
    %v5447 = vsub.f32 %v5445, %v5446
    %v5448 = vand.u32 %v5447, 4294901760
    %5449 = vmatpush2.msra.mxu0 %v5448
    %v5450 = vand.u32 %v5111, 4294901760
    %5451 = vmatprep.mubr.f32.mxu0 %v5450
    %v5452 = vand.u32 %v5110, 4294901760
    %5453 = vmatmul.mubr.f32.gmra.mxu0 %v5452
    %v5454 = vpop.f32.mrf.mxu0
    %v5455 = vadd.f32 %v5223, %v5454
    %v5456 = vpop.f32.mrf.mxu0
    %5457 = vdwg.mxu0
    %5458 = vmatprep.subr.mxu0 0.0
    %v5459 = vand.u32 %v4574, 4294901760
    %v5460 = vsub.f32 %v4574, %v5459
    %5461 = vmatpush1.msra.mxu0 %v5460
    %5462 = vmatprep.subr.mxu0 0.0
    %v5463 = vand.u32 %v4573, 4294901760
    %v5464 = vsub.f32 %v4573, %v5463
    %5465 = vmatpush1.msra.mxu0 %v5464
    %5466 = vmatprep.subr.mxu0 0.0
    %v5467 = vand.u32 %v4572, 4294901760
    %v5468 = vsub.f32 %v4572, %v5467
    %5469 = vmatpush1.msra.mxu0 %v5468
    %5470 = vmatprep.subr.mxu0 0.0
    %v5471 = vand.u32 %v4571, 4294901760
    %v5472 = vsub.f32 %v4571, %v5471
    %5473 = vmatpush1.msra.mxu0 %v5472
    %5474 = vmatprep.subr.mxu0 0.0
    %v5475 = vand.u32 %v4570, 4294901760
    %v5476 = vsub.f32 %v4570, %v5475
    %5477 = vmatpush1.msra.mxu0 %v5476
    %5478 = vmatprep.subr.mxu0 0.0
    %v5479 = vand.u32 %v4569, 4294901760
    %v5480 = vsub.f32 %v4569, %v5479
    %5481 = vmatpush1.msra.mxu0 %v5480
    %5482 = vmatprep.subr.mxu0 0.0
    %v5483 = vand.u32 %v4568, 4294901760
    %v5484 = vsub.f32 %v4568, %v5483
    %5485 = vmatpush1.msra.mxu0 %v5484
    %5486 = vmatprep.subr.mxu0 0.0
    %v5487 = vand.u32 %v4567, 4294901760
    %v5488 = vsub.f32 %v4567, %v5487
    %5489 = vmatpush1.msra.mxu0 %v5488
    %5490 = vmatprep.subr.mxu0 0.0
    %v5491 = vand.u32 %v4566, 4294901760
    %v5492 = vsub.f32 %v4566, %v5491
    %5493 = vmatpush1.msra.mxu0 %v5492
    %5494 = vmatprep.subr.mxu0 0.0
    %v5495 = vand.u32 %v4565, 4294901760
    %v5496 = vsub.f32 %v4565, %v5495
    %5497 = vmatpush1.msra.mxu0 %v5496
    %5498 = vmatprep.subr.mxu0 0.0
    %v5499 = vand.u32 %v4564, 4294901760
    %v5500 = vsub.f32 %v4564, %v5499
    %5501 = vmatpush1.msra.mxu0 %v5500
    %5502 = vmatprep.subr.mxu0 0.0
    %v5503 = vand.u32 %v4563, 4294901760
    %v5504 = vsub.f32 %v4563, %v5503
    %5505 = vmatpush1.msra.mxu0 %v5504
    %5506 = vmatprep.subr.mxu0 0.0
    %v5507 = vand.u32 %v4562, 4294901760
    %v5508 = vsub.f32 %v4562, %v5507
    %5509 = vmatpush1.msra.mxu0 %v5508
    %5510 = vmatprep.subr.mxu0 0.0
    %v5511 = vand.u32 %v4561, 4294901760
    %v5512 = vsub.f32 %v4561, %v5511
    %5513 = vmatpush1.msra.mxu0 %v5512
    %5514 = vmatprep.subr.mxu0 0.0
    %v5515 = vand.u32 %v4560, 4294901760
    %v5516 = vsub.f32 %v4560, %v5515
    %5517 = vmatpush1.msra.mxu0 %v5516
    %5518 = vmatprep.subr.mxu0 0.0
    %v5519 = vand.u32 %v4559, 4294901760
    %v5520 = vsub.f32 %v4559, %v5519
    %5521 = vmatpush1.msra.mxu0 %v5520
    %5522 = vmatprep.subr.mxu0 0.0
    %v5523 = vand.u32 %v4590, 4294901760
    %v5524 = vsub.f32 %v4590, %v5523
    %5525 = vmatpush2.msra.mxu0 %v5524
    %5526 = vmatprep.subr.mxu0 0.0
    %v5527 = vand.u32 %v4589, 4294901760
    %v5528 = vsub.f32 %v4589, %v5527
    %5529 = vmatpush2.msra.mxu0 %v5528
    %5530 = vmatprep.subr.mxu0 0.0
    %v5531 = vand.u32 %v4588, 4294901760
    %v5532 = vsub.f32 %v4588, %v5531
    %5533 = vmatpush2.msra.mxu0 %v5532
    %5534 = vmatprep.subr.mxu0 0.0
    %v5535 = vand.u32 %v4587, 4294901760
    %v5536 = vsub.f32 %v4587, %v5535
    %5537 = vmatpush2.msra.mxu0 %v5536
    %5538 = vmatprep.subr.mxu0 0.0
    %v5539 = vand.u32 %v4586, 4294901760
    %v5540 = vsub.f32 %v4586, %v5539
    %5541 = vmatpush2.msra.mxu0 %v5540
    %5542 = vmatprep.subr.mxu0 0.0
    %v5543 = vand.u32 %v4585, 4294901760
    %v5544 = vsub.f32 %v4585, %v5543
    %5545 = vmatpush2.msra.mxu0 %v5544
    %5546 = vmatprep.subr.mxu0 0.0
    %v5547 = vand.u32 %v4584, 4294901760
    %v5548 = vsub.f32 %v4584, %v5547
    %5549 = vmatpush2.msra.mxu0 %v5548
    %5550 = vmatprep.subr.mxu0 0.0
    %v5551 = vand.u32 %v4583, 4294901760
    %v5552 = vsub.f32 %v4583, %v5551
    %5553 = vmatpush2.msra.mxu0 %v5552
    %5554 = vmatprep.subr.mxu0 0.0
    %v5555 = vand.u32 %v4582, 4294901760
    %v5556 = vsub.f32 %v4582, %v5555
    %5557 = vmatpush2.msra.mxu0 %v5556
    %5558 = vmatprep.subr.mxu0 0.0
    %v5559 = vand.u32 %v4581, 4294901760
    %v5560 = vsub.f32 %v4581, %v5559
    %5561 = vmatpush2.msra.mxu0 %v5560
    %5562 = vmatprep.subr.mxu0 0.0
    %v5563 = vand.u32 %v4580, 4294901760
    %v5564 = vsub.f32 %v4580, %v5563
    %5565 = vmatpush2.msra.mxu0 %v5564
    %5566 = vmatprep.subr.mxu0 0.0
    %v5567 = vand.u32 %v4579, 4294901760
    %v5568 = vsub.f32 %v4579, %v5567
    %5569 = vmatpush2.msra.mxu0 %v5568
    %5570 = vmatprep.subr.mxu0 0.0
    %v5571 = vand.u32 %v4578, 4294901760
    %v5572 = vsub.f32 %v4578, %v5571
    %5573 = vmatpush2.msra.mxu0 %v5572
    %5574 = vmatprep.subr.mxu0 0.0
    %v5575 = vand.u32 %v4577, 4294901760
    %v5576 = vsub.f32 %v4577, %v5575
    %5577 = vmatpush2.msra.mxu0 %v5576
    %5578 = vmatprep.subr.mxu0 0.0
    %v5579 = vand.u32 %v4576, 4294901760
    %v5580 = vsub.f32 %v4576, %v5579
    %5581 = vmatpush2.msra.mxu0 %v5580
    %5582 = vmatprep.subr.mxu0 0.0
    %v5583 = vand.u32 %v4575, 4294901760
    %v5584 = vsub.f32 %v4575, %v5583
    %5585 = vmatpush2.msra.mxu0 %v5584
    %v5586 = vand.u32 %v5111, 4294901760
    %v5587 = vsub.f32 %v5111, %v5586
    %5588 = vmatprep.mubr.f32.mxu0 %v5587
    %v5589 = vand.u32 %v5110, 4294901760
    %v5590 = vsub.f32 %v5110, %v5589
    %5591 = vmatmul.mubr.f32.gmra.mxu0 %v5590
    %v5592 = vpop.f32.mrf.mxu0
    %v5593 = vadd.f32 %v5455, %v5592
    %v5594 = vpop.f32.mrf.mxu0
    %5595 = vdwg.mxu0
    %5596 = vmatprep.subr.mxu0 0.0
    %v5597 = vand.u32 %v4574, 4294901760
    %5598 = vmatpush1.msra.mxu0 %v5597
    %5599 = vmatprep.subr.mxu0 0.0
    %v5600 = vand.u32 %v4573, 4294901760
    %5601 = vmatpush1.msra.mxu0 %v5600
    %5602 = vmatprep.subr.mxu0 0.0
    %v5603 = vand.u32 %v4572, 4294901760
    %5604 = vmatpush1.msra.mxu0 %v5603
    %5605 = vmatprep.subr.mxu0 0.0
    %v5606 = vand.u32 %v4571, 4294901760
    %5607 = vmatpush1.msra.mxu0 %v5606
    %5608 = vmatprep.subr.mxu0 0.0
    %v5609 = vand.u32 %v4570, 4294901760
    %5610 = vmatpush1.msra.mxu0 %v5609
    %5611 = vmatprep.subr.mxu0 0.0
    %v5612 = vand.u32 %v4569, 4294901760
    %5613 = vmatpush1.msra.mxu0 %v5612
    %5614 = vmatprep.subr.mxu0 0.0
    %v5615 = vand.u32 %v4568, 4294901760
    %5616 = vmatpush1.msra.mxu0 %v5615
    %5617 = vmatprep.subr.mxu0 0.0
    %v5618 = vand.u32 %v4567, 4294901760
    %5619 = vmatpush1.msra.mxu0 %v5618
    %5620 = vmatprep.subr.mxu0 0.0
    %v5621 = vand.u32 %v4566, 4294901760
    %5622 = vmatpush1.msra.mxu0 %v5621
    %5623 = vmatprep.subr.mxu0 0.0
    %v5624 = vand.u32 %v4565, 4294901760
    %5625 = vmatpush1.msra.mxu0 %v5624
    %5626 = vmatprep.subr.mxu0 0.0
    %v5627 = vand.u32 %v4564, 4294901760
    %5628 = vmatpush1.msra.mxu0 %v5627
    %5629 = vmatprep.subr.mxu0 0.0
    %v5630 = vand.u32 %v4563, 4294901760
    %5631 = vmatpush1.msra.mxu0 %v5630
    %5632 = vmatprep.subr.mxu0 0.0
    %v5633 = vand.u32 %v4562, 4294901760
    %5634 = vmatpush1.msra.mxu0 %v5633
    %5635 = vmatprep.subr.mxu0 0.0
    %v5636 = vand.u32 %v4561, 4294901760
    %5637 = vmatpush1.msra.mxu0 %v5636
    %5638 = vmatprep.subr.mxu0 0.0
    %v5639 = vand.u32 %v4560, 4294901760
    %5640 = vmatpush1.msra.mxu0 %v5639
    %5641 = vmatprep.subr.mxu0 0.0
    %v5642 = vand.u32 %v4559, 4294901760
    %5643 = vmatpush1.msra.mxu0 %v5642
    %5644 = vmatprep.subr.mxu0 0.0
    %v5645 = vand.u32 %v4590, 4294901760
    %5646 = vmatpush2.msra.mxu0 %v5645
    %5647 = vmatprep.subr.mxu0 0.0
    %v5648 = vand.u32 %v4589, 4294901760
    %5649 = vmatpush2.msra.mxu0 %v5648
    %5650 = vmatprep.subr.mxu0 0.0
    %v5651 = vand.u32 %v4588, 4294901760
    %5652 = vmatpush2.msra.mxu0 %v5651
    %5653 = vmatprep.subr.mxu0 0.0
    %v5654 = vand.u32 %v4587, 4294901760
    %5655 = vmatpush2.msra.mxu0 %v5654
    %5656 = vmatprep.subr.mxu0 0.0
    %v5657 = vand.u32 %v4586, 4294901760
    %5658 = vmatpush2.msra.mxu0 %v5657
    %5659 = vmatprep.subr.mxu0 0.0
    %v5660 = vand.u32 %v4585, 4294901760
    %5661 = vmatpush2.msra.mxu0 %v5660
    %5662 = vmatprep.subr.mxu0 0.0
    %v5663 = vand.u32 %v4584, 4294901760
    %5664 = vmatpush2.msra.mxu0 %v5663
    %5665 = vmatprep.subr.mxu0 0.0
    %v5666 = vand.u32 %v4583, 4294901760
    %5667 = vmatpush2.msra.mxu0 %v5666
    %5668 = vmatprep.subr.mxu0 0.0
    %v5669 = vand.u32 %v4582, 4294901760
    %5670 = vmatpush2.msra.mxu0 %v5669
    %5671 = vmatprep.subr.mxu0 0.0
    %v5672 = vand.u32 %v4581, 4294901760
    %5673 = vmatpush2.msra.mxu0 %v5672
    %5674 = vmatprep.subr.mxu0 0.0
    %v5675 = vand.u32 %v4580, 4294901760
    %5676 = vmatpush2.msra.mxu0 %v5675
    %5677 = vmatprep.subr.mxu0 0.0
    %v5678 = vand.u32 %v4579, 4294901760
    %5679 = vmatpush2.msra.mxu0 %v5678
    %5680 = vmatprep.subr.mxu0 0.0
    %v5681 = vand.u32 %v4578, 4294901760
    %5682 = vmatpush2.msra.mxu0 %v5681
    %5683 = vmatprep.subr.mxu0 0.0
    %v5684 = vand.u32 %v4577, 4294901760
    %5685 = vmatpush2.msra.mxu0 %v5684
    %5686 = vmatprep.subr.mxu0 0.0
    %v5687 = vand.u32 %v4576, 4294901760
    %5688 = vmatpush2.msra.mxu0 %v5687
    %5689 = vmatprep.subr.mxu0 0.0
    %v5690 = vand.u32 %v4575, 4294901760
    %5691 = vmatpush2.msra.mxu0 %v5690
    %v5692 = vand.u32 %v5111, 4294901760
    %v5693 = vsub.f32 %v5111, %v5692
    %v5694 = vand.u32 %v5693, 4294901760
    %5695 = vmatprep.mubr.f32.mxu0 %v5694
    %v5696 = vand.u32 %v5110, 4294901760
    %v5697 = vsub.f32 %v5110, %v5696
    %v5698 = vand.u32 %v5697, 4294901760
    %5699 = vmatmul.mubr.f32.gmra.mxu0 %v5698
    %v5700 = vpop.f32.mrf.mxu0
    %v5701 = vadd.f32 %v5593, %v5700
    %v5702 = vpop.f32.mrf.mxu0
    %5703 = vdwg.mxu0
    %5704 = vmatprep.subr.mxu0 0.0
    %v5705 = vand.u32 %v4574, 4294901760
    %v5706 = vsub.f32 %v4574, %v5705
    %v5707 = vand.u32 %v5706, 4294901760
    %5708 = vmatpush1.msra.mxu0 %v5707
    %5709 = vmatprep.subr.mxu0 0.0
    %v5710 = vand.u32 %v4573, 4294901760
    %v5711 = vsub.f32 %v4573, %v5710
    %v5712 = vand.u32 %v5711, 4294901760
    %5713 = vmatpush1.msra.mxu0 %v5712
    %5714 = vmatprep.subr.mxu0 0.0
    %v5715 = vand.u32 %v4572, 4294901760
    %v5716 = vsub.f32 %v4572, %v5715
    %v5717 = vand.u32 %v5716, 4294901760
    %5718 = vmatpush1.msra.mxu0 %v5717
    %5719 = vmatprep.subr.mxu0 0.0
    %v5720 = vand.u32 %v4571, 4294901760
    %v5721 = vsub.f32 %v4571, %v5720
    %v5722 = vand.u32 %v5721, 4294901760
    %5723 = vmatpush1.msra.mxu0 %v5722
    %5724 = vmatprep.subr.mxu0 0.0
    %v5725 = vand.u32 %v4570, 4294901760
    %v5726 = vsub.f32 %v4570, %v5725
    %v5727 = vand.u32 %v5726, 4294901760
    %5728 = vmatpush1.msra.mxu0 %v5727
    %5729 = vmatprep.subr.mxu0 0.0
    %v5730 = vand.u32 %v4569, 4294901760
    %v5731 = vsub.f32 %v4569, %v5730
    %v5732 = vand.u32 %v5731, 4294901760
    %5733 = vmatpush1.msra.mxu0 %v5732
    %5734 = vmatprep.subr.mxu0 0.0
    %v5735 = vand.u32 %v4568, 4294901760
    %v5736 = vsub.f32 %v4568, %v5735
    %v5737 = vand.u32 %v5736, 4294901760
    %5738 = vmatpush1.msra.mxu0 %v5737
    %5739 = vmatprep.subr.mxu0 0.0
    %v5740 = vand.u32 %v4567, 4294901760
    %v5741 = vsub.f32 %v4567, %v5740
    %v5742 = vand.u32 %v5741, 4294901760
    %5743 = vmatpush1.msra.mxu0 %v5742
    %5744 = vmatprep.subr.mxu0 0.0
    %v5745 = vand.u32 %v4566, 4294901760
    %v5746 = vsub.f32 %v4566, %v5745
    %v5747 = vand.u32 %v5746, 4294901760
    %5748 = vmatpush1.msra.mxu0 %v5747
    %5749 = vmatprep.subr.mxu0 0.0
    %v5750 = vand.u32 %v4565, 4294901760
    %v5751 = vsub.f32 %v4565, %v5750
    %v5752 = vand.u32 %v5751, 4294901760
    %5753 = vmatpush1.msra.mxu0 %v5752
    %5754 = vmatprep.subr.mxu0 0.0
    %v5755 = vand.u32 %v4564, 4294901760
    %v5756 = vsub.f32 %v4564, %v5755
    %v5757 = vand.u32 %v5756, 4294901760
    %5758 = vmatpush1.msra.mxu0 %v5757
    %5759 = vmatprep.subr.mxu0 0.0
    %v5760 = vand.u32 %v4563, 4294901760
    %v5761 = vsub.f32 %v4563, %v5760
    %v5762 = vand.u32 %v5761, 4294901760
    %5763 = vmatpush1.msra.mxu0 %v5762
    %5764 = vmatprep.subr.mxu0 0.0
    %v5765 = vand.u32 %v4562, 4294901760
    %v5766 = vsub.f32 %v4562, %v5765
    %v5767 = vand.u32 %v5766, 4294901760
    %5768 = vmatpush1.msra.mxu0 %v5767
    %5769 = vmatprep.subr.mxu0 0.0
    %v5770 = vand.u32 %v4561, 4294901760
    %v5771 = vsub.f32 %v4561, %v5770
    %v5772 = vand.u32 %v5771, 4294901760
    %5773 = vmatpush1.msra.mxu0 %v5772
    %5774 = vmatprep.subr.mxu0 0.0
    %v5775 = vand.u32 %v4560, 4294901760
    %v5776 = vsub.f32 %v4560, %v5775
    %v5777 = vand.u32 %v5776, 4294901760
    %5778 = vmatpush1.msra.mxu0 %v5777
    %5779 = vmatprep.subr.mxu0 0.0
    %v5780 = vand.u32 %v4559, 4294901760
    %v5781 = vsub.f32 %v4559, %v5780
    %v5782 = vand.u32 %v5781, 4294901760
    %5783 = vmatpush1.msra.mxu0 %v5782
    %5784 = vmatprep.subr.mxu0 0.0
    %v5785 = vand.u32 %v4590, 4294901760
    %v5786 = vsub.f32 %v4590, %v5785
    %v5787 = vand.u32 %v5786, 4294901760
    %5788 = vmatpush2.msra.mxu0 %v5787
    %5789 = vmatprep.subr.mxu0 0.0
    %v5790 = vand.u32 %v4589, 4294901760
    %v5791 = vsub.f32 %v4589, %v5790
    %v5792 = vand.u32 %v5791, 4294901760
    %5793 = vmatpush2.msra.mxu0 %v5792
    %5794 = vmatprep.subr.mxu0 0.0
    %v5795 = vand.u32 %v4588, 4294901760
    %v5796 = vsub.f32 %v4588, %v5795
    %v5797 = vand.u32 %v5796, 4294901760
    %5798 = vmatpush2.msra.mxu0 %v5797
    %5799 = vmatprep.subr.mxu0 0.0
    %v5800 = vand.u32 %v4587, 4294901760
    %v5801 = vsub.f32 %v4587, %v5800
    %v5802 = vand.u32 %v5801, 4294901760
    %5803 = vmatpush2.msra.mxu0 %v5802
    %5804 = vmatprep.subr.mxu0 0.0
    %v5805 = vand.u32 %v4586, 4294901760
    %v5806 = vsub.f32 %v4586, %v5805
    %v5807 = vand.u32 %v5806, 4294901760
    %5808 = vmatpush2.msra.mxu0 %v5807
    %5809 = vmatprep.subr.mxu0 0.0
    %v5810 = vand.u32 %v4585, 4294901760
    %v5811 = vsub.f32 %v4585, %v5810
    %v5812 = vand.u32 %v5811, 4294901760
    %5813 = vmatpush2.msra.mxu0 %v5812
    %5814 = vmatprep.subr.mxu0 0.0
    %v5815 = vand.u32 %v4584, 4294901760
    %v5816 = vsub.f32 %v4584, %v5815
    %v5817 = vand.u32 %v5816, 4294901760
    %5818 = vmatpush2.msra.mxu0 %v5817
    %5819 = vmatprep.subr.mxu0 0.0
    %v5820 = vand.u32 %v4583, 4294901760
    %v5821 = vsub.f32 %v4583, %v5820
    %v5822 = vand.u32 %v5821, 4294901760
    %5823 = vmatpush2.msra.mxu0 %v5822
    %5824 = vmatprep.subr.mxu0 0.0
    %v5825 = vand.u32 %v4582, 4294901760
    %v5826 = vsub.f32 %v4582, %v5825
    %v5827 = vand.u32 %v5826, 4294901760
    %5828 = vmatpush2.msra.mxu0 %v5827
    %5829 = vmatprep.subr.mxu0 0.0
    %v5830 = vand.u32 %v4581, 4294901760
    %v5831 = vsub.f32 %v4581, %v5830
    %v5832 = vand.u32 %v5831, 4294901760
    %5833 = vmatpush2.msra.mxu0 %v5832
    %5834 = vmatprep.subr.mxu0 0.0
    %v5835 = vand.u32 %v4580, 4294901760
    %v5836 = vsub.f32 %v4580, %v5835
    %v5837 = vand.u32 %v5836, 4294901760
    %5838 = vmatpush2.msra.mxu0 %v5837
    %5839 = vmatprep.subr.mxu0 0.0
    %v5840 = vand.u32 %v4579, 4294901760
    %v5841 = vsub.f32 %v4579, %v5840
    %v5842 = vand.u32 %v5841, 4294901760
    %5843 = vmatpush2.msra.mxu0 %v5842
    %5844 = vmatprep.subr.mxu0 0.0
    %v5845 = vand.u32 %v4578, 4294901760
    %v5846 = vsub.f32 %v4578, %v5845
    %v5847 = vand.u32 %v5846, 4294901760
    %5848 = vmatpush2.msra.mxu0 %v5847
    %5849 = vmatprep.subr.mxu0 0.0
    %v5850 = vand.u32 %v4577, 4294901760
    %v5851 = vsub.f32 %v4577, %v5850
    %v5852 = vand.u32 %v5851, 4294901760
    %5853 = vmatpush2.msra.mxu0 %v5852
    %5854 = vmatprep.subr.mxu0 0.0
    %v5855 = vand.u32 %v4576, 4294901760
    %v5856 = vsub.f32 %v4576, %v5855
    %v5857 = vand.u32 %v5856, 4294901760
    %5858 = vmatpush2.msra.mxu0 %v5857
    %5859 = vmatprep.subr.mxu0 0.0
    %v5860 = vand.u32 %v4575, 4294901760
    %v5861 = vsub.f32 %v4575, %v5860
    %v5862 = vand.u32 %v5861, 4294901760
    %5863 = vmatpush2.msra.mxu0 %v5862
    %v5864 = vand.u32 %v5111, 4294901760
    %5865 = vmatprep.mubr.f32.mxu0 %v5864
    %v5866 = vand.u32 %v5110, 4294901760
    %5867 = vmatmul.mubr.f32.gmra.mxu0 %v5866
    %v5868 = vpop.f32.mrf.mxu0
    %v5869 = vadd.f32 %v5701, %v5868
    %v5870 = vpop.f32.mrf.mxu0
    %5871 = vdwg.mxu0
    %5872 = vmatprep.subr.mxu0 0.0
    %v5873 = vand.u32 %v4574, 4294901760
    %5874 = vmatpush1.msra.mxu0 %v5873
    %5875 = vmatprep.subr.mxu0 0.0
    %v5876 = vand.u32 %v4573, 4294901760
    %5877 = vmatpush1.msra.mxu0 %v5876
    %5878 = vmatprep.subr.mxu0 0.0
    %v5879 = vand.u32 %v4572, 4294901760
    %5880 = vmatpush1.msra.mxu0 %v5879
    %5881 = vmatprep.subr.mxu0 0.0
    %v5882 = vand.u32 %v4571, 4294901760
    %5883 = vmatpush1.msra.mxu0 %v5882
    %5884 = vmatprep.subr.mxu0 0.0
    %v5885 = vand.u32 %v4570, 4294901760
    %5886 = vmatpush1.msra.mxu0 %v5885
    %5887 = vmatprep.subr.mxu0 0.0
    %v5888 = vand.u32 %v4569, 4294901760
    %5889 = vmatpush1.msra.mxu0 %v5888
    %5890 = vmatprep.subr.mxu0 0.0
    %v5891 = vand.u32 %v4568, 4294901760
    %5892 = vmatpush1.msra.mxu0 %v5891
    %5893 = vmatprep.subr.mxu0 0.0
    %v5894 = vand.u32 %v4567, 4294901760
    %5895 = vmatpush1.msra.mxu0 %v5894
    %5896 = vmatprep.subr.mxu0 0.0
    %v5897 = vand.u32 %v4566, 4294901760
    %5898 = vmatpush1.msra.mxu0 %v5897
    %5899 = vmatprep.subr.mxu0 0.0
    %v5900 = vand.u32 %v4565, 4294901760
    %5901 = vmatpush1.msra.mxu0 %v5900
    %5902 = vmatprep.subr.mxu0 0.0
    %v5903 = vand.u32 %v4564, 4294901760
    %5904 = vmatpush1.msra.mxu0 %v5903
    %5905 = vmatprep.subr.mxu0 0.0
    %v5906 = vand.u32 %v4563, 4294901760
    %5907 = vmatpush1.msra.mxu0 %v5906
    %5908 = vmatprep.subr.mxu0 0.0
    %v5909 = vand.u32 %v4562, 4294901760
    %5910 = vmatpush1.msra.mxu0 %v5909
    %5911 = vmatprep.subr.mxu0 0.0
    %v5912 = vand.u32 %v4561, 4294901760
    %5913 = vmatpush1.msra.mxu0 %v5912
    %5914 = vmatprep.subr.mxu0 0.0
    %v5915 = vand.u32 %v4560, 4294901760
    %5916 = vmatpush1.msra.mxu0 %v5915
    %5917 = vmatprep.subr.mxu0 0.0
    %v5918 = vand.u32 %v4559, 4294901760
    %5919 = vmatpush1.msra.mxu0 %v5918
    %5920 = vmatprep.subr.mxu0 0.0
    %v5921 = vand.u32 %v4590, 4294901760
    %5922 = vmatpush2.msra.mxu0 %v5921
    %5923 = vmatprep.subr.mxu0 0.0
    %v5924 = vand.u32 %v4589, 4294901760
    %5925 = vmatpush2.msra.mxu0 %v5924
    %5926 = vmatprep.subr.mxu0 0.0
    %v5927 = vand.u32 %v4588, 4294901760
    %5928 = vmatpush2.msra.mxu0 %v5927
    %5929 = vmatprep.subr.mxu0 0.0
    %v5930 = vand.u32 %v4587, 4294901760
    %5931 = vmatpush2.msra.mxu0 %v5930
    %5932 = vmatprep.subr.mxu0 0.0
    %v5933 = vand.u32 %v4586, 4294901760
    %5934 = vmatpush2.msra.mxu0 %v5933
    %5935 = vmatprep.subr.mxu0 0.0
    %v5936 = vand.u32 %v4585, 4294901760
    %5937 = vmatpush2.msra.mxu0 %v5936
    %5938 = vmatprep.subr.mxu0 0.0
    %v5939 = vand.u32 %v4584, 4294901760
    %5940 = vmatpush2.msra.mxu0 %v5939
    %5941 = vmatprep.subr.mxu0 0.0
    %v5942 = vand.u32 %v4583, 4294901760
    %5943 = vmatpush2.msra.mxu0 %v5942
    %5944 = vmatprep.subr.mxu0 0.0
    %v5945 = vand.u32 %v4582, 4294901760
    %5946 = vmatpush2.msra.mxu0 %v5945
    %5947 = vmatprep.subr.mxu0 0.0
    %v5948 = vand.u32 %v4581, 4294901760
    %5949 = vmatpush2.msra.mxu0 %v5948
    %5950 = vmatprep.subr.mxu0 0.0
    %v5951 = vand.u32 %v4580, 4294901760
    %5952 = vmatpush2.msra.mxu0 %v5951
    %5953 = vmatprep.subr.mxu0 0.0
    %v5954 = vand.u32 %v4579, 4294901760
    %5955 = vmatpush2.msra.mxu0 %v5954
    %5956 = vmatprep.subr.mxu0 0.0
    %v5957 = vand.u32 %v4578, 4294901760
    %5958 = vmatpush2.msra.mxu0 %v5957
    %5959 = vmatprep.subr.mxu0 0.0
    %v5960 = vand.u32 %v4577, 4294901760
    %5961 = vmatpush2.msra.mxu0 %v5960
    %5962 = vmatprep.subr.mxu0 0.0
    %v5963 = vand.u32 %v4576, 4294901760
    %5964 = vmatpush2.msra.mxu0 %v5963
    %5965 = vmatprep.subr.mxu0 0.0
    %v5966 = vand.u32 %v4575, 4294901760
    %5967 = vmatpush2.msra.mxu0 %v5966
    %v5968 = vand.u32 %v5111, 4294901760
    %5969 = vmatprep.mubr.f32.mxu0 %v5968
    %v5970 = vand.u32 %v5110, 4294901760
    %5971 = vmatmul.mubr.f32.gmra.mxu0 %v5970
    %v5972 = vpop.f32.mrf.mxu0
    %v5973 = vadd.f32 %v5869, %v5972
    %v5974 = vpop.f32.mrf.mxu0
    %5975 = vdwg.mxu0
    %vm5976 = vcmask 25600
    %5977 = vst.msk [vmem:[#allocation2] sm:$0x3] %vm5976, %v5973
    // Predicated region
    $region30: #{_forward_jit.1} parent=1 // pred_check
      _
    $region31: #{_forward_jit.1} parent=1 // pred_check_branch
      %5979 = sbr.rel (0) target = $region33
    $region32: #{_forward_jit.1} parent=1 // pred_region
      %s5981 = ssub.s32 32, 32
      %5982 = vsyncadd [#allocation3], %s5981
      %s5984 = sshll.u32 [#allocation2], 4
      %s5985 = int_to_ptr.vmem [resolvable:$true] %s5984
      %5987 = dma.vmem_to_hbm [thread:$0]  %s5985, 32, %s7, [#allocation3]
    $region33: #{_forward_jit.1} parent=1 // pred_fallthru
      _
    // Predicated region
    $region34: #{_forward_jit.1} parent=1 // pred_check
      _
    $region35: #{_forward_jit.1} parent=1 // pred_check_branch
      %5989 = sbr.rel (0) target = $region37
    $region36: #{_forward_jit.1} parent=1 // pred_region
      %s5991 = ssub.s32 64, 64
      %5992 = vsyncadd [#allocation5], %s5991
      %s5994 = sshll.u32 [#allocation4], 4
      %s5995 = int_to_ptr.vmem [resolvable:$true] %s5994
      %5997 = dma.vmem_to_hbm [thread:$0]  %s5995, 64, %s8, [#allocation5]
    $region37: #{_forward_jit.1} parent=1 // pred_fallthru
      _
    // Predicated region
    $region38: #{_forward_jit.1} parent=1 // pred_check
      _
    $region39: #{_forward_jit.1} parent=1 // pred_check_branch
      %5999 = sbr.rel (0) target = $region41
    $region40: #{_forward_jit.1} parent=1 // pred_region
      %6000 = dma.done [#allocation3], 32
    $region41: #{_forward_jit.1} parent=1 // pred_fallthru
      _
    // Predicated region
    $region42: #{_forward_jit.1} parent=1 // pred_check
      _
    $region43: #{_forward_jit.1} parent=1 // pred_check_branch
      %6002 = sbr.rel (0) target = $region45
    $region44: #{_forward_jit.1} parent=1 // pred_region
      %6003 = dma.done [#allocation5], 64
    $region45: #{_forward_jit.1} parent=1 // pred_fallthru
      _
    %6004 = vsyncpa [#allocation3], 1
    %6005 = vsyncpa [#allocation5], 1

</llo_original>
